<compile_context>
chip_gen: v7x
topology: tpu7x:2x2x1
jax: 0.10.0
libtpu: 0.0.40
codegen_flags: <defaults>
</compile_context>

<pallas_src>
import jax
import jax.numpy as jnp
from jax.experimental import pallas as pl
from jax.experimental.pallas import tpu as pltpu

B = 2
C_IN = 256        # forced by the module's hard-coded `proxy.reshape(b, 256, 6, 1)`
KEY = 64          # key_channels
C_OUT = 256       # out_channels
H = W = 16
HW = H * W
N_PROXY = 6       # hard-coded by the module
NP_PAD = 8        # proxy axis padded to a full sublane group
EPS = 1e-5        # BatchNorm2d default eps

# Offsets into the packed (BIAS_ROWS, 1) f32 bias/mask column (all sublane-aligned).
OFF_B1P = 0                      # f_pixel layer-1 bias            (KEY)
OFF_B2P = OFF_B1P + KEY          # f_pixel layer-2 bias, *KEY^-0.5 (KEY)
OFF_BP1 = OFF_B2P + KEY          # [f_object layer-1 | f_down]     (2*KEY)
OFF_B2O = OFF_BP1 + 2 * KEY      # f_object layer-2 bias           (KEY)
OFF_BU = OFF_B2O + KEY           # f_up bias                       (C_IN)
OFF_BF = OFF_BU + C_IN           # final conv bias                 (C_OUT)
OFF_MASK = OFF_BF + C_OUT        # {1,0} valid-proxy mask          (NP_PAD)
BIAS_ROWS = OFF_MASK + NP_PAD    # 840


def _ocr_kernel(x_ref, p_ref,
                w1p_ref, w2p_ref, wp1_ref, w2o_ref, wu_ref, wfc_ref, wff_ref,
                bias_ref, o_ref):
    f32, bf16 = jnp.float32, jnp.bfloat16

    def bias(off, size):                      # (size, 1) f32, static sublane slice
        return bias_ref[pl.ds(off, size), :]

    b1p = bias(OFF_B1P, KEY)
    b2p = bias(OFF_B2P, KEY)
    bp1 = bias(OFF_BP1, 2 * KEY)
    b2o = bias(OFF_B2O, KEY)
    bu = bias(OFF_BU, C_IN)
    bf = bias(OFF_BF, C_OUT)
    mask01 = bias(OFF_MASK, NP_PAD)           # 1.0 for the 6 real proxies, 0.0 pad

    # Static unroll over the batch block (1 element on v7x, whole batch on v2-v6e);
    # the LLO scheduler interleaves the independent per-batch chains.
    for b in range(x_ref.shape[0]):
        p = p_ref[b].astype(bf16)             # (C_IN, NP_PAD), no-op cast if bf16 in

        # f_pixel: two 1x1 Conv+BN+ReLU; KEY**-0.5 already folded into w2p/b2p.
        q1 = jnp.maximum(
            jnp.dot(w1p_ref[...], x_ref[b].astype(bf16),
                    preferred_element_type=f32) + b1p, 0.0).astype(bf16)   # (KEY,HW)
        q = jnp.maximum(
            jnp.dot(w2p_ref[...], q1, preferred_element_type=f32) + b2p,
            0.0).astype(bf16)                                              # (KEY,HW)

        # Proxy path stage 1 (merged): rows [0,KEY) -> f_object layer 1,
        # rows [KEY, 2*KEY) -> f_down value.
        ps = jnp.maximum(
            jnp.dot(wp1_ref[...], p, preferred_element_type=f32) + bp1, 0.0)
        k1 = ps[:KEY].astype(bf16)                                         # (KEY,NP)
        v = ps[KEY:].astype(bf16)                                          # (KEY,NP)
        k = jnp.maximum(
            jnp.dot(w2o_ref[...], k1, preferred_element_type=f32) + b2o,
            0.0).astype(bf16)                                              # (KEY,NP)

        # Reassociated f_up:  wu @ (v @ attn) == (wu @ v) @ attn.
        vu = jnp.dot(wu_ref[...], v, preferred_element_type=f32).astype(bf16)  # (C_IN,NP)

        # Object attention: sim (NP_PAD, HW), softmax over the proxy (sublane) axis.
        sim = jax.lax.dot_general(k, q, (((0,), (0,)), ((), ())),
                                  preferred_element_type=f32)
        e = jnp.exp(sim - jnp.max(sim, axis=0, keepdims=True)) * mask01   # pad rows -> 0
        # approx reciprocal: ~1e-3 rel error, covered by the test tolerance.
        attn = (e * pl.reciprocal(jnp.sum(e, axis=0, keepdims=True),
                                  approx=True)).astype(bf16)               # (NP,HW)

        ctx = jnp.maximum(
            jnp.dot(vu, attn, preferred_element_type=f32) + bu,
            0.0).astype(bf16)                                              # (C_IN,HW)

        # conv_bn_dropout on cat([context, feats], ch) == wfc@ctx + wff@x + bf.
        out = (jnp.dot(wfc_ref[...], ctx, preferred_element_type=f32)
               + jnp.dot(wff_ref[...], x_ref[b].astype(bf16),
                         preferred_element_type=f32) + bf)
        # TODO(synk): nn.Dropout2d(0.1) is identity in inference mode; not modeled.
        o_ref[b] = jnp.maximum(out, 0.0).astype(o_ref.dtype)


def _default_batch_block():
    # v7x has 2 TensorCores per chip: keep one batch element per grid step so the
    # "parallel" batch axis puts one element on each core.  Earlier generations
    # (v2-v6e) have a single TensorCore, where a multi-step grid is just a serial
    # loop paying per-step overhead on a ~1 us kernel -> fuse the batch.
    try:
        kind = jax.devices()[0].device_kind.lower()
    except Exception:
        return B
    if "v7" in kind or "7x" in kind:
        return 1
    return B


def spatial_ocr(feats, proxy_feats, packed, *, batch_block=None):
    """feats: (B, C_IN, H, W) NCHW (ideally bf16); proxy_feats: (B, C_IN, N_PROXY)."""
    x = feats.reshape(B, C_IN, HW)                                    # free reshape
    p = jnp.pad(proxy_feats.reshape(B, C_IN, N_PROXY),
                ((0, 0), (0, 0), (0, NP_PAD - N_PROXY)))              # 6 -> 8 regions

    bb = _default_batch_block() if batch_block is None else batch_block
    assert B % bb == 0

    (w1p, w2p, wp1, w2o, wu, wfc, wff, bias_col) = packed

    def rep2(shape):
        # 2-D parameter, replicated across the batch grid (stays VMEM-resident).
        return pl.BlockSpec(shape, lambda g: (0, 0))

    in_specs = [
        pl.BlockSpec((bb, C_IN, HW), lambda g: (g, 0, 0)),
        pl.BlockSpec((bb, C_IN, NP_PAD), lambda g: (g, 0, 0)),
        rep2(w1p.shape), rep2(w2p.shape), rep2(wp1.shape), rep2(w2o.shape),
        rep2(wu.shape), rep2(wfc.shape), rep2(wff.shape), rep2(bias_col.shape),
    ]

    macs_per_batch = (w1p.size * HW + w2p.size * HW
                      + wp1.size * NP_PAD + w2o.size * NP_PAD + wu.size * NP_PAD
                      + KEY * NP_PAD * HW           # sim
                      + C_IN * NP_PAD * HW          # vu @ attn
                      + wfc.size * HW + wff.size * HW)
    bytes_accessed = (x.size * x.dtype.itemsize + p.size * p.dtype.itemsize
                      + sum(w.size * w.dtype.itemsize for w in packed)
                      + B * C_OUT * HW * 2)

    out = pl.pallas_call(
        _ocr_kernel,
        out_shape=jax.ShapeDtypeStruct((B, C_OUT, HW), jnp.bfloat16),
        grid=(B // bb,),
        in_specs=in_specs,
        out_specs=pl.BlockSpec((bb, C_OUT, HW), lambda g: (g, 0, 0)),
        compiler_params=pltpu.CompilerParams(dimension_semantics=("parallel",)),
        cost_estimate=pl.CostEstimate(flops=2 * B * macs_per_batch,
                                      transcendentals=B * NP_PAD * HW,
                                      bytes_accessed=bytes_accessed),
    )(x, p, *packed)
    return out.reshape(B, C_OUT, H, W)                                # free reshape


def _fold_conv_bn(w, gamma, beta, mean, var):
    # Conv1x1 (no bias) followed by eval-mode BN -> single matmul + bias.
    scale = gamma / jnp.sqrt(var + EPS)          # (C_out,)
    w_folded = w * scale[:, None]                # (C_out, C_in)
    b_folded = (beta - mean * scale)[:, None]    # (C_out, 1)
    return w_folded, b_folded


def make_params(key):
    keys = iter(jax.random.split(key, 64))

    def bn_stats(cout):
        gamma = 1.0 + 0.1 * jax.random.normal(next(keys), (cout,), jnp.float32)
        beta = 0.1 * jax.random.normal(next(keys), (cout,), jnp.float32)
        mean = 0.1 * jax.random.normal(next(keys), (cout,), jnp.float32)
        var = jax.random.uniform(next(keys), (cout,), jnp.float32, 0.5, 1.5)
        return gamma, beta, mean, var

    def conv_bn(cin, cout):
        w = 0.05 * jax.random.normal(next(keys), (cout, cin), jnp.float32)
        return _fold_conv_bn(w, *bn_stats(cout))

    w1p, b1p = conv_bn(C_IN, KEY)     # f_pixel layer 1
    w2p, b2p = conv_bn(KEY, KEY)      # f_pixel layer 2
    w1o, b1o = conv_bn(C_IN, KEY)     # f_object layer 1
    w2o, b2o = conv_bn(KEY, KEY)      # f_object layer 2
    wd, bd = conv_bn(C_IN, KEY)       # f_down
    wu, bu = conv_bn(KEY, C_IN)       # f_up

    # final conv over concatenated [context, feats] channels (2*C_IN -> C_OUT)
    wf = 0.05 * jax.random.normal(next(keys), (C_OUT, 2 * C_IN), jnp.float32)
    gamma, beta, mean, var = bn_stats(C_OUT)
    scale = gamma / jnp.sqrt(var + EPS)
    wf_s = wf * scale[:, None]
    wfc = wf_s[:, :C_IN]                         # multiplies context
    wff = wf_s[:, C_IN:]                         # multiplies feats
    bf_bias = (beta - mean * scale)[:, None]
    return (w1p, b1p, w2p, b2p, w1o, b1o, w2o, b2o, wd, bd, wu, bu, wfc, wff, bf_bias)


def pack_params(params):
    # One-time host-side packing: merge weights that share an input operand, fold
    # the KEY**-0.5 attention scale into w2p/b2p, concatenate all (C,1) f32 biases
    # plus the {1,0} proxy-padding mask into a single column, cast matmul weights
    # to bf16 (biases stay f32; they add to f32 accumulators).
    (w1p, b1p, w2p, b2p, w1o, b1o, w2o, b2o,
     wd, bd, wu, bu, wfc, wff, bf_bias) = params
    bf16 = jnp.bfloat16
    s = jnp.float32(KEY ** -0.5)
    wp1 = jnp.concatenate([w1o, wd], axis=0)                  # (2*KEY, C_IN)
    mask01 = jnp.concatenate([jnp.ones((N_PROXY, 1), jnp.float32),
                              jnp.zeros((NP_PAD - N_PROXY, 1), jnp.float32)], axis=0)
    bias_col = jnp.concatenate(
        [b1p, b2p * s, b1o, bd, b2o, bu, bf_bias, mask01], axis=0)  # (BIAS_ROWS, 1)
    assert bias_col.shape == (BIAS_ROWS, 1)
    return (w1p.astype(bf16), (w2p * s).astype(bf16), wp1.astype(bf16),
            w2o.astype(bf16), wu.astype(bf16), wfc.astype(bf16),
            wff.astype(bf16), bias_col)


def reference(feats, proxy_feats, params):
    (w1p, b1p, w2p, b2p, w1o, b1o, w2o, b2o,
     wd, bd, wu, bu, wfc, wff, bf_bias) = params
    x = feats.reshape(B, C_IN, HW)
    p = proxy_feats.reshape(B, C_IN, N_PROXY)
    relu = lambda a: jnp.maximum(a, 0.0)
    q1 = relu(jnp.einsum('kc,bcp->bkp', w1p, x) + b1p)
    q = relu(jnp.einsum('kj,bjp->bkp', w2p, q1) + b2p)
    k1 = relu(jnp.einsum('kc,bcn->bkn', w1o, p) + b1o)
    k = relu(jnp.einsum('kj,bjn->bkn', w2o, k1) + b2o)
    v = relu(jnp.einsum('kc,bcn->bkn', wd, p) + bd)
    sim = jnp.einsum('bkn,bkp->bnp', k, q) * (KEY ** -0.5)
    attn = jax.nn.softmax(sim, axis=1)
    ctx = jnp.einsum('bkn,bnp->bkp', v, attn)
    ctx = relu(jnp.einsum('ck,bkp->bcp', wu, ctx) + bu)
    out = relu(jnp.einsum('oc,bcp->bop', wfc, ctx)
               + jnp.einsum('oc,bcp->bop', wff, x) + bf_bias)
    return out.reshape(B, C_OUT, H, W)


if __name__ == "__main__":
    key = jax.random.PRNGKey(0)
    k1, k2, k3 = jax.random.split(key, 3)
    feats = jax.random.normal(k1, (B, C_IN, H, W), jnp.float32)
    proxy_feats = jax.random.normal(k2, (B, C_IN, N_PROXY), jnp.float32)
    params = make_params(k3)
    packed = pack_params(params)

    # Surrounding graph hands the kernel bf16 activations (halves HBM traffic).
    out = jax.block_until_ready(
        spatial_ocr(feats.astype(jnp.bfloat16), proxy_feats.astype(jnp.bfloat16),
                    packed))
    ref = reference(feats, proxy_feats, params)
    assert out.shape == (B, C_OUT, H, W)
    out_f32 = out.astype(jnp.float32)
    # bf16 matmul operands / bf16 I/O with f32 accumulation -> loosened tolerance.
    assert jnp.allclose(out_f32, ref, atol=5e-2, rtol=5e-2), \
        float(jnp.max(jnp.abs(out_f32 - ref)))
    print("KERNEL_OK")
</pallas_src>

<mosaic_0001>
module attributes {stable_mosaic.version = 11 : i64} {
  func.func @_ocr_kernel(%arg0: i32, %arg1: memref<2x256x256xbf16, #tpu.memory_space<vmem>>, %arg2: memref<2x256x8xbf16, #tpu.memory_space<vmem>>, %arg3: memref<64x256xbf16, #tpu.memory_space<vmem>>, %arg4: memref<64x64xbf16, #tpu.memory_space<vmem>>, %arg5: memref<128x256xbf16, #tpu.memory_space<vmem>>, %arg6: memref<64x64xbf16, #tpu.memory_space<vmem>>, %arg7: memref<256x64xbf16, #tpu.memory_space<vmem>>, %arg8: memref<256x256xbf16, #tpu.memory_space<vmem>>, %arg9: memref<256x256xbf16, #tpu.memory_space<vmem>>, %arg10: memref<840x1xf32, #tpu.memory_space<vmem>>, %arg11: memref<2x256x256xbf16, #tpu.memory_space<vmem>>) attributes {dimension_semantics = [#tpu.dimension_semantics<parallel>], iteration_bounds = array<i64: 1>, scalar_prefetch = 0 : i64, scratch_operands = 0 : i64, tpu.core_type = #tpu.core_type<tc>, window_params = [{transform_indices = @transform_0, window_bounds = array<i64: 2, 256, 256>}, {transform_indices = @transform_1, window_bounds = array<i64: 2, 256, 8>}, {pipeline_mode = #tpu.pipeline_mode<synchronous>, transform_indices = @transform_2, window_bounds = array<i64: 64, 256>}, {pipeline_mode = #tpu.pipeline_mode<synchronous>, transform_indices = @transform_3, window_bounds = array<i64: 64, 64>}, {pipeline_mode = #tpu.pipeline_mode<synchronous>, transform_indices = @transform_4, window_bounds = array<i64: 128, 256>}, {pipeline_mode = #tpu.pipeline_mode<synchronous>, transform_indices = @transform_5, window_bounds = array<i64: 64, 64>}, {pipeline_mode = #tpu.pipeline_mode<synchronous>, transform_indices = @transform_6, window_bounds = array<i64: 256, 64>}, {pipeline_mode = #tpu.pipeline_mode<synchronous>, transform_indices = @transform_7, window_bounds = array<i64: 256, 256>}, {pipeline_mode = #tpu.pipeline_mode<synchronous>, transform_indices = @transform_8, window_bounds = array<i64: 256, 256>}, {pipeline_mode = #tpu.pipeline_mode<synchronous>, transform_indices = @transform_9, window_bounds = array<i64: 840, 1>}, {transform_indices = @transform_10, window_bounds = array<i64: 2, 256, 256>}]} {
    %c0 = arith.constant 0 : index
    %c0_0 = arith.constant 0 : index
    %0 = vector.load %arg10[%c0, %c0_0] : memref<840x1xf32, #tpu.memory_space<vmem>>, vector<64x1xf32>
    %c64 = arith.constant 64 : index
    %c0_1 = arith.constant 0 : index
    %1 = vector.load %arg10[%c64, %c0_1] : memref<840x1xf32, #tpu.memory_space<vmem>>, vector<64x1xf32>
    %c128 = arith.constant 128 : index
    %c0_2 = arith.constant 0 : index
    %2 = vector.load %arg10[%c128, %c0_2] : memref<840x1xf32, #tpu.memory_space<vmem>>, vector<128x1xf32>
    %c256 = arith.constant 256 : index
    %c0_3 = arith.constant 0 : index
    %3 = vector.load %arg10[%c256, %c0_3] : memref<840x1xf32, #tpu.memory_space<vmem>>, vector<64x1xf32>
    %c320 = arith.constant 320 : index
    %c0_4 = arith.constant 0 : index
    %4 = vector.load %arg10[%c320, %c0_4] : memref<840x1xf32, #tpu.memory_space<vmem>>, vector<256x1xf32>
    %c576 = arith.constant 576 : index
    %c0_5 = arith.constant 0 : index
    %5 = vector.load %arg10[%c576, %c0_5] : memref<840x1xf32, #tpu.memory_space<vmem>>, vector<256x1xf32>
    %c832 = arith.constant 832 : index
    %c0_6 = arith.constant 0 : index
    %6 = vector.load %arg10[%c832, %c0_6] : memref<840x1xf32, #tpu.memory_space<vmem>>, vector<8x1xf32>
    %c0_7 = arith.constant 0 : index
    %c0_8 = arith.constant 0 : index
    %c0_9 = arith.constant 0 : index
    %7 = vector.load %arg2[%c0_7, %c0_8, %c0_9] : memref<2x256x8xbf16, #tpu.memory_space<vmem>>, vector<1x256x8xbf16>
    %8 = vector.shape_cast %7 : vector<1x256x8xbf16> to vector<256x8xbf16>
    %c0_10 = arith.constant 0 : index
    %c0_11 = arith.constant 0 : index
    %9 = vector.load %arg3[%c0_10, %c0_11] : memref<64x256xbf16, #tpu.memory_space<vmem>>, vector<64x256xbf16>
    %c0_12 = arith.constant 0 : index
    %c0_13 = arith.constant 0 : index
    %c0_14 = arith.constant 0 : index
    %10 = vector.load %arg1[%c0_12, %c0_13, %c0_14] : memref<2x256x256xbf16, #tpu.memory_space<vmem>>, vector<1x256x256xbf16>
    %11 = vector.shape_cast %10 : vector<1x256x256xbf16> to vector<256x256xbf16>
    %cst = arith.constant dense<0.000000e+00> : vector<64x256xf32>
    %12 = tpu.matmul %9, %11, %cst {dimension_numbers = #tpu.dot_dimension_numbers<[1], [0], [0], [1], [0, 0, 1, 1], [], []>} : vector<64x256xbf16>, vector<256x256xbf16>, vector<64x256xf32> -> vector<64x256xf32>
    %13 = vector.broadcast %0 : vector<64x1xf32> to vector<64x256xf32>
    %14 = arith.addf %12, %13 : vector<64x256xf32>
    %cst_15 = arith.constant 0.000000e+00 : f32
    %15 = vector.broadcast %cst_15 : f32 to vector<64x256xf32>
    %16 = arith.maximumf %14, %15 : vector<64x256xf32>
    %17 = arith.truncf %16 : vector<64x256xf32> to vector<64x256xbf16>
    %c0_16 = arith.constant 0 : index
    %c0_17 = arith.constant 0 : index
    %18 = vector.load %arg4[%c0_16, %c0_17] : memref<64x64xbf16, #tpu.memory_space<vmem>>, vector<64x64xbf16>
    %cst_18 = arith.constant dense<0.000000e+00> : vector<64x256xf32>
    %19 = tpu.matmul %18, %17, %cst_18 {dimension_numbers = #tpu.dot_dimension_numbers<[1], [0], [0], [1], [0, 0, 1, 1], [], []>} : vector<64x64xbf16>, vector<64x256xbf16>, vector<64x256xf32> -> vector<64x256xf32>
    %20 = vector.broadcast %1 : vector<64x1xf32> to vector<64x256xf32>
    %21 = arith.addf %19, %20 : vector<64x256xf32>
    %cst_19 = arith.constant 0.000000e+00 : f32
    %22 = vector.broadcast %cst_19 : f32 to vector<64x256xf32>
    %23 = arith.maximumf %21, %22 : vector<64x256xf32>
    %24 = arith.truncf %23 : vector<64x256xf32> to vector<64x256xbf16>
    %c0_20 = arith.constant 0 : index
    %c0_21 = arith.constant 0 : index
    %25 = vector.load %arg5[%c0_20, %c0_21] : memref<128x256xbf16, #tpu.memory_space<vmem>>, vector<128x256xbf16>
    %cst_22 = arith.constant dense<0.000000e+00> : vector<128x8xf32>
    %26 = tpu.matmul %25, %8, %cst_22 {dimension_numbers = #tpu.dot_dimension_numbers<[1], [0], [0], [1], [0, 0, 1, 1], [], []>} : vector<128x256xbf16>, vector<256x8xbf16>, vector<128x8xf32> -> vector<128x8xf32>
    %27 = vector.broadcast %2 : vector<128x1xf32> to vector<128x8xf32>
    %28 = arith.addf %26, %27 : vector<128x8xf32>
    %cst_23 = arith.constant 0.000000e+00 : f32
    %29 = vector.broadcast %cst_23 : f32 to vector<128x8xf32>
    %30 = arith.maximumf %28, %29 : vector<128x8xf32>
    %31 = vector.extract_strided_slice %30 {offsets = [0, 0], sizes = [64, 8], strides = [1, 1]} : vector<128x8xf32> to vector<64x8xf32>
    %32 = arith.truncf %31 : vector<64x8xf32> to vector<64x8xbf16>
    %33 = vector.extract_strided_slice %30 {offsets = [64, 0], sizes = [64, 8], strides = [1, 1]} : vector<128x8xf32> to vector<64x8xf32>
    %34 = arith.truncf %33 : vector<64x8xf32> to vector<64x8xbf16>
    %c0_24 = arith.constant 0 : index
    %c0_25 = arith.constant 0 : index
    %35 = vector.load %arg6[%c0_24, %c0_25] : memref<64x64xbf16, #tpu.memory_space<vmem>>, vector<64x64xbf16>
    %cst_26 = arith.constant dense<0.000000e+00> : vector<64x8xf32>
    %36 = tpu.matmul %35, %32, %cst_26 {dimension_numbers = #tpu.dot_dimension_numbers<[1], [0], [0], [1], [0, 0, 1, 1], [], []>} : vector<64x64xbf16>, vector<64x8xbf16>, vector<64x8xf32> -> vector<64x8xf32>
    %37 = vector.broadcast %3 : vector<64x1xf32> to vector<64x8xf32>
    %38 = arith.addf %36, %37 : vector<64x8xf32>
    %cst_27 = arith.constant 0.000000e+00 : f32
    %39 = vector.broadcast %cst_27 : f32 to vector<64x8xf32>
    %40 = arith.maximumf %38, %39 : vector<64x8xf32>
    %41 = arith.truncf %40 : vector<64x8xf32> to vector<64x8xbf16>
    %c0_28 = arith.constant 0 : index
    %c0_29 = arith.constant 0 : index
    %42 = vector.load %arg7[%c0_28, %c0_29] : memref<256x64xbf16, #tpu.memory_space<vmem>>, vector<256x64xbf16>
    %cst_30 = arith.constant dense<0.000000e+00> : vector<256x8xf32>
    %43 = tpu.matmul %42, %34, %cst_30 {dimension_numbers = #tpu.dot_dimension_numbers<[1], [0], [0], [1], [0, 0, 1, 1], [], []>} : vector<256x64xbf16>, vector<64x8xbf16>, vector<256x8xf32> -> vector<256x8xf32>
    %44 = arith.truncf %43 : vector<256x8xf32> to vector<256x8xbf16>
    %cst_31 = arith.constant dense<0.000000e+00> : vector<8x256xf32>
    %45 = tpu.matmul %41, %24, %cst_31 {dimension_numbers = #tpu.dot_dimension_numbers<[0], [0], [1], [1], [0, 1, 1, 1], [], []>} : vector<64x8xbf16>, vector<64x256xbf16>, vector<8x256xf32> -> vector<8x256xf32>
    %cst_32 = arith.constant dense<0xFF800000> : vector<256xf32>
    %46 = vector.multi_reduction <maximumf>, %45, %cst_32 [0] : vector<8x256xf32> to vector<256xf32>
    %47 = vector.shape_cast %46 : vector<256xf32> to vector<1x256xf32>
    %48 = vector.broadcast %47 : vector<1x256xf32> to vector<8x256xf32>
    %49 = arith.subf %45, %48 : vector<8x256xf32>
    %50 = math.exp %49 : vector<8x256xf32>
    %51 = vector.broadcast %6 : vector<8x1xf32> to vector<8x256xf32>
    %52 = arith.mulf %50, %51 : vector<8x256xf32>
    %cst_33 = arith.constant dense<0.000000e+00> : vector<256xf32>
    %53 = vector.multi_reduction <add>, %52, %cst_33 [0] : vector<8x256xf32> to vector<256xf32>
    %54 = vector.shape_cast %53 : vector<256xf32> to vector<1x256xf32>
    %55 = tpu.reciprocal %54 {approx = true} : vector<1x256xf32> -> vector<1x256xf32>
    %56 = vector.broadcast %55 : vector<1x256xf32> to vector<8x256xf32>
    %57 = arith.mulf %52, %56 : vector<8x256xf32>
    %58 = arith.truncf %57 : vector<8x256xf32> to vector<8x256xbf16>
    %cst_34 = arith.constant dense<0.000000e+00> : vector<256x256xf32>
    %59 = tpu.matmul %44, %58, %cst_34 {dimension_numbers = #tpu.dot_dimension_numbers<[1], [0], [0], [1], [0, 0, 1, 1], [], []>} : vector<256x8xbf16>, vector<8x256xbf16>, vector<256x256xf32> -> vector<256x256xf32>
    %60 = vector.broadcast %4 : vector<256x1xf32> to vector<256x256xf32>
    %61 = arith.addf %59, %60 : vector<256x256xf32>
    %cst_35 = arith.constant 0.000000e+00 : f32
    %62 = vector.broadcast %cst_35 : f32 to vector<256x256xf32>
    %63 = arith.maximumf %61, %62 : vector<256x256xf32>
    %64 = arith.truncf %63 : vector<256x256xf32> to vector<256x256xbf16>
    %c0_36 = arith.constant 0 : index
    %c0_37 = arith.constant 0 : index
    %65 = vector.load %arg8[%c0_36, %c0_37] : memref<256x256xbf16, #tpu.memory_space<vmem>>, vector<256x256xbf16>
    %cst_38 = arith.constant dense<0.000000e+00> : vector<256x256xf32>
    %66 = tpu.matmul %65, %64, %cst_38 {dimension_numbers = #tpu.dot_dimension_numbers<[1], [0], [0], [1], [0, 0, 1, 1], [], []>} : vector<256x256xbf16>, vector<256x256xbf16>, vector<256x256xf32> -> vector<256x256xf32>
    %c0_39 = arith.constant 0 : index
    %c0_40 = arith.constant 0 : index
    %67 = vector.load %arg9[%c0_39, %c0_40] : memref<256x256xbf16, #tpu.memory_space<vmem>>, vector<256x256xbf16>
    %c0_41 = arith.constant 0 : index
    %c0_42 = arith.constant 0 : index
    %c0_43 = arith.constant 0 : index
    %68 = vector.load %arg1[%c0_41, %c0_42, %c0_43] : memref<2x256x256xbf16, #tpu.memory_space<vmem>>, vector<1x256x256xbf16>
    %69 = vector.shape_cast %68 : vector<1x256x256xbf16> to vector<256x256xbf16>
    %cst_44 = arith.constant dense<0.000000e+00> : vector<256x256xf32>
    %70 = tpu.matmul %67, %69, %cst_44 {dimension_numbers = #tpu.dot_dimension_numbers<[1], [0], [0], [1], [0, 0, 1, 1], [], []>} : vector<256x256xbf16>, vector<256x256xbf16>, vector<256x256xf32> -> vector<256x256xf32>
    %71 = arith.addf %66, %70 : vector<256x256xf32>
    %72 = vector.broadcast %5 : vector<256x1xf32> to vector<256x256xf32>
    %73 = arith.addf %71, %72 : vector<256x256xf32>
    %cst_45 = arith.constant 0.000000e+00 : f32
    %74 = vector.broadcast %cst_45 : f32 to vector<256x256xf32>
    %75 = arith.maximumf %73, %74 : vector<256x256xf32>
    %76 = arith.truncf %75 : vector<256x256xf32> to vector<256x256xbf16>
    %c0_46 = arith.constant 0 : index
    %c0_47 = arith.constant 0 : index
    %c0_48 = arith.constant 0 : index
    %77 = vector.load %arg11[%c0_46, %c0_47, %c0_48] : memref<2x256x256xbf16, #tpu.memory_space<vmem>>, vector<1x256x256xbf16>
    %78 = vector.shape_cast %77 : vector<1x256x256xbf16> to vector<256x256xbf16>
    %79 = vector.shape_cast %76 : vector<256x256xbf16> to vector<1x256x256xbf16>
    tpu.vector_store %arg11[%c0_46, %c0_47, %c0_48], %79 {strides = array<i32>} : memref<2x256x256xbf16, #tpu.memory_space<vmem>>, vector<1x256x256xbf16>,
    %c1 = arith.constant 1 : index
    %c0_49 = arith.constant 0 : index
    %c0_50 = arith.constant 0 : index
    %80 = vector.load %arg2[%c1, %c0_49, %c0_50] : memref<2x256x8xbf16, #tpu.memory_space<vmem>>, vector<1x256x8xbf16>
    %81 = vector.shape_cast %80 : vector<1x256x8xbf16> to vector<256x8xbf16>
    %c0_51 = arith.constant 0 : index
    %c0_52 = arith.constant 0 : index
    %82 = vector.load %arg3[%c0_51, %c0_52] : memref<64x256xbf16, #tpu.memory_space<vmem>>, vector<64x256xbf16>
    %c1_53 = arith.constant 1 : index
    %c0_54 = arith.constant 0 : index
    %c0_55 = arith.constant 0 : index
    %83 = vector.load %arg1[%c1_53, %c0_54, %c0_55] : memref<2x256x256xbf16, #tpu.memory_space<vmem>>, vector<1x256x256xbf16>
    %84 = vector.shape_cast %83 : vector<1x256x256xbf16> to vector<256x256xbf16>
    %cst_56 = arith.constant dense<0.000000e+00> : vector<64x256xf32>
    %85 = tpu.matmul %82, %84, %cst_56 {dimension_numbers = #tpu.dot_dimension_numbers<[1], [0], [0], [1], [0, 0, 1, 1], [], []>} : vector<64x256xbf16>, vector<256x256xbf16>, vector<64x256xf32> -> vector<64x256xf32>
    %86 = vector.broadcast %0 : vector<64x1xf32> to vector<64x256xf32>
    %87 = arith.addf %85, %86 : vector<64x256xf32>
    %cst_57 = arith.constant 0.000000e+00 : f32
    %88 = vector.broadcast %cst_57 : f32 to vector<64x256xf32>
    %89 = arith.maximumf %87, %88 : vector<64x256xf32>
    %90 = arith.truncf %89 : vector<64x256xf32> to vector<64x256xbf16>
    %c0_58 = arith.constant 0 : index
    %c0_59 = arith.constant 0 : index
    %91 = vector.load %arg4[%c0_58, %c0_59] : memref<64x64xbf16, #tpu.memory_space<vmem>>, vector<64x64xbf16>
    %cst_60 = arith.constant dense<0.000000e+00> : vector<64x256xf32>
    %92 = tpu.matmul %91, %90, %cst_60 {dimension_numbers = #tpu.dot_dimension_numbers<[1], [0], [0], [1], [0, 0, 1, 1], [], []>} : vector<64x64xbf16>, vector<64x256xbf16>, vector<64x256xf32> -> vector<64x256xf32>
    %93 = vector.broadcast %1 : vector<64x1xf32> to vector<64x256xf32>
    %94 = arith.addf %92, %93 : vector<64x256xf32>
    %cst_61 = arith.constant 0.000000e+00 : f32
    %95 = vector.broadcast %cst_61 : f32 to vector<64x256xf32>
    %96 = arith.maximumf %94, %95 : vector<64x256xf32>
    %97 = arith.truncf %96 : vector<64x256xf32> to vector<64x256xbf16>
    %c0_62 = arith.constant 0 : index
    %c0_63 = arith.constant 0 : index
    %98 = vector.load %arg5[%c0_62, %c0_63] : memref<128x256xbf16, #tpu.memory_space<vmem>>, vector<128x256xbf16>
    %cst_64 = arith.constant dense<0.000000e+00> : vector<128x8xf32>
    %99 = tpu.matmul %98, %81, %cst_64 {dimension_numbers = #tpu.dot_dimension_numbers<[1], [0], [0], [1], [0, 0, 1, 1], [], []>} : vector<128x256xbf16>, vector<256x8xbf16>, vector<128x8xf32> -> vector<128x8xf32>
    %100 = vector.broadcast %2 : vector<128x1xf32> to vector<128x8xf32>
    %101 = arith.addf %99, %100 : vector<128x8xf32>
    %cst_65 = arith.constant 0.000000e+00 : f32
    %102 = vector.broadcast %cst_65 : f32 to vector<128x8xf32>
    %103 = arith.maximumf %101, %102 : vector<128x8xf32>
    %104 = vector.extract_strided_slice %103 {offsets = [0, 0], sizes = [64, 8], strides = [1, 1]} : vector<128x8xf32> to vector<64x8xf32>
    %105 = arith.truncf %104 : vector<64x8xf32> to vector<64x8xbf16>
    %106 = vector.extract_strided_slice %103 {offsets = [64, 0], sizes = [64, 8], strides = [1, 1]} : vector<128x8xf32> to vector<64x8xf32>
    %107 = arith.truncf %106 : vector<64x8xf32> to vector<64x8xbf16>
    %c0_66 = arith.constant 0 : index
    %c0_67 = arith.constant 0 : index
    %108 = vector.load %arg6[%c0_66, %c0_67] : memref<64x64xbf16, #tpu.memory_space<vmem>>, vector<64x64xbf16>
    %cst_68 = arith.constant dense<0.000000e+00> : vector<64x8xf32>
    %109 = tpu.matmul %108, %105, %cst_68 {dimension_numbers = #tpu.dot_dimension_numbers<[1], [0], [0], [1], [0, 0, 1, 1], [], []>} : vector<64x64xbf16>, vector<64x8xbf16>, vector<64x8xf32> -> vector<64x8xf32>
    %110 = vector.broadcast %3 : vector<64x1xf32> to vector<64x8xf32>
    %111 = arith.addf %109, %110 : vector<64x8xf32>
    %cst_69 = arith.constant 0.000000e+00 : f32
    %112 = vector.broadcast %cst_69 : f32 to vector<64x8xf32>
    %113 = arith.maximumf %111, %112 : vector<64x8xf32>
    %114 = arith.truncf %113 : vector<64x8xf32> to vector<64x8xbf16>
    %c0_70 = arith.constant 0 : index
    %c0_71 = arith.constant 0 : index
    %115 = vector.load %arg7[%c0_70, %c0_71] : memref<256x64xbf16, #tpu.memory_space<vmem>>, vector<256x64xbf16>
    %cst_72 = arith.constant dense<0.000000e+00> : vector<256x8xf32>
    %116 = tpu.matmul %115, %107, %cst_72 {dimension_numbers = #tpu.dot_dimension_numbers<[1], [0], [0], [1], [0, 0, 1, 1], [], []>} : vector<256x64xbf16>, vector<64x8xbf16>, vector<256x8xf32> -> vector<256x8xf32>
    %117 = arith.truncf %116 : vector<256x8xf32> to vector<256x8xbf16>
    %cst_73 = arith.constant dense<0.000000e+00> : vector<8x256xf32>
    %118 = tpu.matmul %114, %97, %cst_73 {dimension_numbers = #tpu.dot_dimension_numbers<[0], [0], [1], [1], [0, 1, 1, 1], [], []>} : vector<64x8xbf16>, vector<64x256xbf16>, vector<8x256xf32> -> vector<8x256xf32>
    %cst_74 = arith.constant dense<0xFF800000> : vector<256xf32>
    %119 = vector.multi_reduction <maximumf>, %118, %cst_74 [0] : vector<8x256xf32> to vector<256xf32>
    %120 = vector.shape_cast %119 : vector<256xf32> to vector<1x256xf32>
    %121 = vector.broadcast %120 : vector<1x256xf32> to vector<8x256xf32>
    %122 = arith.subf %118, %121 : vector<8x256xf32>
    %123 = math.exp %122 : vector<8x256xf32>
    %124 = vector.broadcast %6 : vector<8x1xf32> to vector<8x256xf32>
    %125 = arith.mulf %123, %124 : vector<8x256xf32>
    %cst_75 = arith.constant dense<0.000000e+00> : vector<256xf32>
    %126 = vector.multi_reduction <add>, %125, %cst_75 [0] : vector<8x256xf32> to vector<256xf32>
    %127 = vector.shape_cast %126 : vector<256xf32> to vector<1x256xf32>
    %128 = tpu.reciprocal %127 {approx = true} : vector<1x256xf32> -> vector<1x256xf32>
    %129 = vector.broadcast %128 : vector<1x256xf32> to vector<8x256xf32>
    %130 = arith.mulf %125, %129 : vector<8x256xf32>
    %131 = arith.truncf %130 : vector<8x256xf32> to vector<8x256xbf16>
    %cst_76 = arith.constant dense<0.000000e+00> : vector<256x256xf32>
    %132 = tpu.matmul %117, %131, %cst_76 {dimension_numbers = #tpu.dot_dimension_numbers<[1], [0], [0], [1], [0, 0, 1, 1], [], []>} : vector<256x8xbf16>, vector<8x256xbf16>, vector<256x256xf32> -> vector<256x256xf32>
    %133 = vector.broadcast %4 : vector<256x1xf32> to vector<256x256xf32>
    %134 = arith.addf %132, %133 : vector<256x256xf32>
    %cst_77 = arith.constant 0.000000e+00 : f32
    %135 = vector.broadcast %cst_77 : f32 to vector<256x256xf32>
    %136 = arith.maximumf %134, %135 : vector<256x256xf32>
    %137 = arith.truncf %136 : vector<256x256xf32> to vector<256x256xbf16>
    %c0_78 = arith.constant 0 : index
    %c0_79 = arith.constant 0 : index
    %138 = vector.load %arg8[%c0_78, %c0_79] : memref<256x256xbf16, #tpu.memory_space<vmem>>, vector<256x256xbf16>
    %cst_80 = arith.constant dense<0.000000e+00> : vector<256x256xf32>
    %139 = tpu.matmul %138, %137, %cst_80 {dimension_numbers = #tpu.dot_dimension_numbers<[1], [0], [0], [1], [0, 0, 1, 1], [], []>} : vector<256x256xbf16>, vector<256x256xbf16>, vector<256x256xf32> -> vector<256x256xf32>
    %c0_81 = arith.constant 0 : index
    %c0_82 = arith.constant 0 : index
    %140 = vector.load %arg9[%c0_81, %c0_82] : memref<256x256xbf16, #tpu.memory_space<vmem>>, vector<256x256xbf16>
    %c1_83 = arith.constant 1 : index
    %c0_84 = arith.constant 0 : index
    %c0_85 = arith.constant 0 : index
    %141 = vector.load %arg1[%c1_83, %c0_84, %c0_85] : memref<2x256x256xbf16, #tpu.memory_space<vmem>>, vector<1x256x256xbf16>
    %142 = vector.shape_cast %141 : vector<1x256x256xbf16> to vector<256x256xbf16>
    %cst_86 = arith.constant dense<0.000000e+00> : vector<256x256xf32>
    %143 = tpu.matmul %140, %142, %cst_86 {dimension_numbers = #tpu.dot_dimension_numbers<[1], [0], [0], [1], [0, 0, 1, 1], [], []>} : vector<256x256xbf16>, vector<256x256xbf16>, vector<256x256xf32> -> vector<256x256xf32>
    %144 = arith.addf %139, %143 : vector<256x256xf32>
    %145 = vector.broadcast %5 : vector<256x1xf32> to vector<256x256xf32>
    %146 = arith.addf %144, %145 : vector<256x256xf32>
    %cst_87 = arith.constant 0.000000e+00 : f32
    %147 = vector.broadcast %cst_87 : f32 to vector<256x256xf32>
    %148 = arith.maximumf %146, %147 : vector<256x256xf32>
    %149 = arith.truncf %148 : vector<256x256xf32> to vector<256x256xbf16>
    %c1_88 = arith.constant 1 : index
    %c0_89 = arith.constant 0 : index
    %c0_90 = arith.constant 0 : index
    %150 = vector.load %arg11[%c1_88, %c0_89, %c0_90] : memref<2x256x256xbf16, #tpu.memory_space<vmem>>, vector<1x256x256xbf16>
    %151 = vector.shape_cast %150 : vector<1x256x256xbf16> to vector<256x256xbf16>
    %152 = vector.shape_cast %149 : vector<256x256xbf16> to vector<1x256x256xbf16>
    tpu.vector_store %arg11[%c1_88, %c0_89, %c0_90], %152 {strides = array<i32>} : memref<2x256x256xbf16, #tpu.memory_space<vmem>>, vector<1x256x256xbf16>,
    return
  }
  func.func @transform_0(%arg0: i32) -> (i32, i32, i32) {
    %c0_i32 = arith.constant 0 : i32
    %c0_i32_0 = arith.constant 0 : i32
    %c0_i32_1 = arith.constant 0 : i32
    return %arg0, %c0_i32, %c0_i32_0 : i32, i32, i32
  }
  func.func @transform_1(%arg0: i32) -> (i32, i32, i32) {
    %c0_i32 = arith.constant 0 : i32
    %c0_i32_0 = arith.constant 0 : i32
    %c0_i32_1 = arith.constant 0 : i32
    return %arg0, %c0_i32, %c0_i32_0 : i32, i32, i32
  }
  func.func @transform_2(%arg0: i32) -> (i32, i32) {
    %c0_i32 = arith.constant 0 : i32
    %c0_i32_0 = arith.constant 0 : i32
    %c0_i32_1 = arith.constant 0 : i32
    return %c0_i32, %c0_i32_0 : i32, i32
  }
  func.func @transform_3(%arg0: i32) -> (i32, i32) {
    %c0_i32 = arith.constant 0 : i32
    %c0_i32_0 = arith.constant 0 : i32
    %c0_i32_1 = arith.constant 0 : i32
    return %c0_i32, %c0_i32_0 : i32, i32
  }
  func.func @transform_4(%arg0: i32) -> (i32, i32) {
    %c0_i32 = arith.constant 0 : i32
    %c0_i32_0 = arith.constant 0 : i32
    %c0_i32_1 = arith.constant 0 : i32
    return %c0_i32, %c0_i32_0 : i32, i32
  }
  func.func @transform_5(%arg0: i32) -> (i32, i32) {
    %c0_i32 = arith.constant 0 : i32
    %c0_i32_0 = arith.constant 0 : i32
    %c0_i32_1 = arith.constant 0 : i32
    return %c0_i32, %c0_i32_0 : i32, i32
  }
  func.func @transform_6(%arg0: i32) -> (i32, i32) {
    %c0_i32 = arith.constant 0 : i32
    %c0_i32_0 = arith.constant 0 : i32
    %c0_i32_1 = arith.constant 0 : i32
    return %c0_i32, %c0_i32_0 : i32, i32
  }
  func.func @transform_7(%arg0: i32) -> (i32, i32) {
    %c0_i32 = arith.constant 0 : i32
    %c0_i32_0 = arith.constant 0 : i32
    %c0_i32_1 = arith.constant 0 : i32
    return %c0_i32, %c0_i32_0 : i32, i32
  }
  func.func @transform_8(%arg0: i32) -> (i32, i32) {
    %c0_i32 = arith.constant 0 : i32
    %c0_i32_0 = arith.constant 0 : i32
    %c0_i32_1 = arith.constant 0 : i32
    return %c0_i32, %c0_i32_0 : i32, i32
  }
  func.func @transform_9(%arg0: i32) -> (i32, i32) {
    %c0_i32 = arith.constant 0 : i32
    %c0_i32_0 = arith.constant 0 : i32
    %c0_i32_1 = arith.constant 0 : i32
    return %c0_i32, %c0_i32_0 : i32, i32
  }
  func.func @transform_10(%arg0: i32) -> (i32, i32, i32) {
    %c0_i32 = arith.constant 0 : i32
    %c0_i32_0 = arith.constant 0 : i32
    %c0_i32_1 = arith.constant 0 : i32
    return %arg0, %c0_i32, %c0_i32_0 : i32, i32, i32
  }
}

</mosaic_0001>

<llo_original>
// kernel: tpu_custom_call.1
$region0: #{tpu_custom_call.1}
  #allocation0 [shape = 'u32[]', space=smem, size = 0x4, offset = 0x4, fixed_abs, tag = 'smem constant byte address 0x4 - core index']
  #allocation1 [shape = 'u32[144,128]{1,0:T(1,128)}', space=vmem, size = 0x12000, scoped, tag = 'internal scratch']
  %s0 = inlined_call_operand.vmem [shape: bf16[2,256,256], index: 0, kind: input, shape index: {}]
  %s1 = inlined_call_operand.vmem [shape: bf16[2,256,8], index: 1, kind: input, shape index: {}]
  %s2 = inlined_call_operand.vmem [shape: bf16[64,256], index: 2, kind: input, shape index: {}]
  %s3 = inlined_call_operand.vmem [shape: bf16[64,64], index: 3, kind: input, shape index: {}]
  %s4 = inlined_call_operand.vmem [shape: bf16[128,256], index: 4, kind: input, shape index: {}]
  %s5 = inlined_call_operand.vmem [shape: bf16[64,64], index: 5, kind: input, shape index: {}]
  %s6 = inlined_call_operand.vmem [shape: bf16[256,64], index: 6, kind: input, shape index: {}]
  %s7 = inlined_call_operand.vmem [shape: bf16[256,256], index: 7, kind: input, shape index: {}]
  %s8 = inlined_call_operand.vmem [shape: bf16[256,256], index: 8, kind: input, shape index: {}]
  %s9 = inlined_call_operand.vmem [shape: f32[840,1], index: 9, kind: input, shape index: {}]
  %s10 = inlined_call_operand.hbm [shape: bf16[2,256,256], index: 10, kind: output, shape index: {}]
  %s11 = sld [smem:[#allocation0]]
  $region50: #{tpu_custom_call.1} parent=0
    _
  %s13 = ssub.s32 1, %s11
  %s14 = scalar_select 0, %s13, %s11
  $region1: #{tpu_custom_call.1} parent=0
    #allocation2 [shape = 'u8[262144]{0}', space=vmem, size = 0x40000, scoped, tag = 'output window, operand 0, single buffered']
    #allocation3 [shape = 's32[1]{0}', space=sflag, size = 0x4, scoped, tag = 'scoped memory for tpu_custom_call.1']
    %15 = vsyncpa [#allocation3], 0
    // Predicated region
    $region2: #{tpu_custom_call.1} parent=1 // pred_check
      _
    $region3: #{tpu_custom_call.1} parent=1 // pred_check_branch
      %17 = sbr.rel (0) target = $region5
    $region4: #{tpu_custom_call.1} parent=1 // pred_region
      _
    $region5: #{tpu_custom_call.1} parent=1 // pred_fallthru
      _
    // Predicated region
    $region6: #{tpu_custom_call.1} parent=1 // pred_check
      _
    $region7: #{tpu_custom_call.1} parent=1 // pred_check_branch
      %19 = sbr.rel (0) target = $region9
    $region8: #{tpu_custom_call.1} parent=1 // pred_region
      _
    $region9: #{tpu_custom_call.1} parent=1 // pred_fallthru
      _
    // Predicated region
    $region10: #{tpu_custom_call.1} parent=1 // pred_check
      _
    $region11: #{tpu_custom_call.1} parent=1 // pred_check_branch
      %21 = sbr.rel (0) target = $region13
    $region12: #{tpu_custom_call.1} parent=1 // pred_region
      _
    $region13: #{tpu_custom_call.1} parent=1 // pred_fallthru
      _
    // Predicated region
    $region14: #{tpu_custom_call.1} parent=1 // pred_check
      _
    $region15: #{tpu_custom_call.1} parent=1 // pred_check_branch
      %23 = sbr.rel (0) target = $region17
    $region16: #{tpu_custom_call.1} parent=1 // pred_region
      _
    $region17: #{tpu_custom_call.1} parent=1 // pred_fallthru
      _
    // Predicated region
    $region18: #{tpu_custom_call.1} parent=1 // pred_check
      _
    $region19: #{tpu_custom_call.1} parent=1 // pred_check_branch
      %25 = sbr.rel (0) target = $region21
    $region20: #{tpu_custom_call.1} parent=1 // pred_region
      _
    $region21: #{tpu_custom_call.1} parent=1 // pred_fallthru
      _
    // Predicated region
    $region22: #{tpu_custom_call.1} parent=1 // pred_check
      _
    $region23: #{tpu_custom_call.1} parent=1 // pred_check_branch
      %27 = sbr.rel (0) target = $region25
    $region24: #{tpu_custom_call.1} parent=1 // pred_region
      _
    $region25: #{tpu_custom_call.1} parent=1 // pred_fallthru
      _
    // Predicated region
    $region26: #{tpu_custom_call.1} parent=1 // pred_check
      _
    $region27: #{tpu_custom_call.1} parent=1 // pred_check_branch
      %29 = sbr.rel (0) target = $region29
    $region28: #{tpu_custom_call.1} parent=1 // pred_region
      _
    $region29: #{tpu_custom_call.1} parent=1 // pred_fallthru
      _
    // Predicated region
    $region30: #{tpu_custom_call.1} parent=1 // pred_check
      _
    $region31: #{tpu_custom_call.1} parent=1 // pred_check_branch
      %31 = sbr.rel (0) target = $region33
    $region32: #{tpu_custom_call.1} parent=1 // pred_region
      _
    $region33: #{tpu_custom_call.1} parent=1 // pred_fallthru
      _
    // Predicated region
    $region34: #{tpu_custom_call.1} parent=1 // pred_check
      _
    $region35: #{tpu_custom_call.1} parent=1 // pred_check_branch
      %33 = sbr.rel (0) target = $region37
    $region36: #{tpu_custom_call.1} parent=1 // pred_region
      _
    $region37: #{tpu_custom_call.1} parent=1 // pred_fallthru
      _
    // Predicated region
    $region38: #{tpu_custom_call.1} parent=1 // pred_check
      _
    $region39: #{tpu_custom_call.1} parent=1 // pred_check_branch
      %35 = sbr.rel (0) target = $region41
    $region40: #{tpu_custom_call.1} parent=1 // pred_region
      _
    $region41: #{tpu_custom_call.1} parent=1 // pred_fallthru
      _
    %v37 = vld [vmem:[%s9] sm:$0xff]
    %v38 = vld [vmem:[%s9 + $0x8] sm:$0xff]
    %v39 = vld [vmem:[%s9 + $0x10] sm:$0xff]
    %v40 = vld [vmem:[%s9 + $0x18] sm:$0xff]
    %v41 = vld [vmem:[%s9 + $0x20] sm:$0xff]
    %v42 = vld [vmem:[%s9 + $0x28] sm:$0xff]
    %v43 = vld [vmem:[%s9 + $0x30] sm:$0xff]
    %v44 = vld [vmem:[%s9 + $0x38] sm:$0xff]
    %v45 = vld [vmem:[%s9 + $0x40] sm:$0xff]
    %v46 = vld [vmem:[%s9 + $0x48] sm:$0xff]
    %v47 = vld [vmem:[%s9 + $0x50] sm:$0xff]
    %v48 = vld [vmem:[%s9 + $0x58] sm:$0xff]
    %v49 = vld [vmem:[%s9 + $0x60] sm:$0xff]
    %v50 = vld [vmem:[%s9 + $0x68] sm:$0xff]
    %v51 = vld [vmem:[%s9 + $0x70] sm:$0xff]
    %v52 = vld [vmem:[%s9 + $0x78] sm:$0xff]
    %v53 = vld [vmem:[%s9 + $0x80] sm:$0xff]
    %v54 = vld [vmem:[%s9 + $0x88] sm:$0xff]
    %v55 = vld [vmem:[%s9 + $0x90] sm:$0xff]
    %v56 = vld [vmem:[%s9 + $0x98] sm:$0xff]
    %v57 = vld [vmem:[%s9 + $0xa0] sm:$0xff]
    %v58 = vld [vmem:[%s9 + $0xa8] sm:$0xff]
    %v59 = vld [vmem:[%s9 + $0xb0] sm:$0xff]
    %v60 = vld [vmem:[%s9 + $0xb8] sm:$0xff]
    %v61 = vld [vmem:[%s9 + $0xc0] sm:$0xff]
    %v62 = vld [vmem:[%s9 + $0xc8] sm:$0xff]
    %v63 = vld [vmem:[%s9 + $0xd0] sm:$0xff]
    %v64 = vld [vmem:[%s9 + $0xd8] sm:$0xff]
    %v65 = vld [vmem:[%s9 + $0xe0] sm:$0xff]
    %v66 = vld [vmem:[%s9 + $0xe8] sm:$0xff]
    %v67 = vld [vmem:[%s9 + $0xf0] sm:$0xff]
    %v68 = vld [vmem:[%s9 + $0xf8] sm:$0xff]
    %v69 = vld [vmem:[%s9 + $0x100] sm:$0xff]
    %v70 = vld [vmem:[%s9 + $0x108] sm:$0xff]
    %v71 = vld [vmem:[%s9 + $0x110] sm:$0xff]
    %v72 = vld [vmem:[%s9 + $0x118] sm:$0xff]
    %v73 = vld [vmem:[%s9 + $0x120] sm:$0xff]
    %v74 = vld [vmem:[%s9 + $0x128] sm:$0xff]
    %v75 = vld [vmem:[%s9 + $0x130] sm:$0xff]
    %v76 = vld [vmem:[%s9 + $0x138] sm:$0xff]
    %v77 = vld [vmem:[%s9 + $0x140] sm:$0xff]
    %v78 = vld [vmem:[%s9 + $0x148] sm:$0xff]
    %v79 = vld [vmem:[%s9 + $0x150] sm:$0xff]
    %v80 = vld [vmem:[%s9 + $0x158] sm:$0xff]
    %v81 = vld [vmem:[%s9 + $0x160] sm:$0xff]
    %v82 = vld [vmem:[%s9 + $0x168] sm:$0xff]
    %v83 = vld [vmem:[%s9 + $0x170] sm:$0xff]
    %v84 = vld [vmem:[%s9 + $0x178] sm:$0xff]
    %v85 = vld [vmem:[%s9 + $0x180] sm:$0xff]
    %v86 = vld [vmem:[%s9 + $0x188] sm:$0xff]
    %v87 = vld [vmem:[%s9 + $0x190] sm:$0xff]
    %v88 = vld [vmem:[%s9 + $0x198] sm:$0xff]
    %v89 = vld [vmem:[%s9 + $0x1a0] sm:$0xff]
    %v90 = vld [vmem:[%s9 + $0x1a8] sm:$0xff]
    %v91 = vld [vmem:[%s9 + $0x1b0] sm:$0xff]
    %v92 = vld [vmem:[%s9 + $0x1b8] sm:$0xff]
    %v93 = vld [vmem:[%s9 + $0x1c0] sm:$0xff]
    %v94 = vld [vmem:[%s9 + $0x1c8] sm:$0xff]
    %v95 = vld [vmem:[%s9 + $0x1d0] sm:$0xff]
    %v96 = vld [vmem:[%s9 + $0x1d8] sm:$0xff]
    %v97 = vld [vmem:[%s9 + $0x1e0] sm:$0xff]
    %v98 = vld [vmem:[%s9 + $0x1e8] sm:$0xff]
    %v99 = vld [vmem:[%s9 + $0x1f0] sm:$0xff]
    %v100 = vld [vmem:[%s9 + $0x1f8] sm:$0xff]
    %v101 = vld [vmem:[%s9 + $0x200] sm:$0xff]
    %v102 = vld [vmem:[%s9 + $0x208] sm:$0xff]
    %v103 = vld [vmem:[%s9 + $0x210] sm:$0xff]
    %v104 = vld [vmem:[%s9 + $0x218] sm:$0xff]
    %v105 = vld [vmem:[%s9 + $0x220] sm:$0xff]
    %v106 = vld [vmem:[%s9 + $0x228] sm:$0xff]
    %v107 = vld [vmem:[%s9 + $0x230] sm:$0xff]
    %v108 = vld [vmem:[%s9 + $0x238] sm:$0xff]
    %v109 = vld [vmem:[%s9 + $0x240] sm:$0xff]
    %v110 = vld [vmem:[%s9 + $0x248] sm:$0xff]
    %v111 = vld [vmem:[%s9 + $0x250] sm:$0xff]
    %v112 = vld [vmem:[%s9 + $0x258] sm:$0xff]
    %v113 = vld [vmem:[%s9 + $0x260] sm:$0xff]
    %v114 = vld [vmem:[%s9 + $0x268] sm:$0xff]
    %v115 = vld [vmem:[%s9 + $0x270] sm:$0xff]
    %v116 = vld [vmem:[%s9 + $0x278] sm:$0xff]
    %v117 = vld [vmem:[%s9 + $0x280] sm:$0xff]
    %v118 = vld [vmem:[%s9 + $0x288] sm:$0xff]
    %v119 = vld [vmem:[%s9 + $0x290] sm:$0xff]
    %v120 = vld [vmem:[%s9 + $0x298] sm:$0xff]
    %v121 = vld [vmem:[%s9 + $0x2a0] sm:$0xff]
    %v122 = vld [vmem:[%s9 + $0x2a8] sm:$0xff]
    %v123 = vld [vmem:[%s9 + $0x2b0] sm:$0xff]
    %v124 = vld [vmem:[%s9 + $0x2b8] sm:$0xff]
    %v125 = vld [vmem:[%s9 + $0x2c0] sm:$0xff]
    %v126 = vld [vmem:[%s9 + $0x2c8] sm:$0xff]
    %v127 = vld [vmem:[%s9 + $0x2d0] sm:$0xff]
    %v128 = vld [vmem:[%s9 + $0x2d8] sm:$0xff]
    %v129 = vld [vmem:[%s9 + $0x2e0] sm:$0xff]
    %v130 = vld [vmem:[%s9 + $0x2e8] sm:$0xff]
    %v131 = vld [vmem:[%s9 + $0x2f0] sm:$0xff]
    %v132 = vld [vmem:[%s9 + $0x2f8] sm:$0xff]
    %v133 = vld [vmem:[%s9 + $0x300] sm:$0xff]
    %v134 = vld [vmem:[%s9 + $0x308] sm:$0xff]
    %v135 = vld [vmem:[%s9 + $0x310] sm:$0xff]
    %v136 = vld [vmem:[%s9 + $0x318] sm:$0xff]
    %v137 = vld [vmem:[%s9 + $0x320] sm:$0xff]
    %v138 = vld [vmem:[%s9 + $0x328] sm:$0xff]
    %v139 = vld [vmem:[%s9 + $0x330] sm:$0xff]
    %v140 = vld [vmem:[%s9 + $0x338] sm:$0xff]
    %v141 = vld [vmem:[%s9 + $0x340] sm:$0xff]
    %v142 = vld [vmem:[%s1] sm:$0xf]
    %v143 = vld [vmem:[%s1 + $0x4] sm:$0xf]
    %v144 = vld [vmem:[%s1 + $0x8] sm:$0xf]
    %v145 = vld [vmem:[%s1 + $0xc] sm:$0xf]
    %v146 = vld [vmem:[%s1 + $0x10] sm:$0xf]
    %v147 = vld [vmem:[%s1 + $0x14] sm:$0xf]
    %v148 = vld [vmem:[%s1 + $0x18] sm:$0xf]
    %v149 = vld [vmem:[%s1 + $0x1c] sm:$0xf]
    %v150 = vld [vmem:[%s1 + $0x20] sm:$0xf]
    %v151 = vld [vmem:[%s1 + $0x24] sm:$0xf]
    %v152 = vld [vmem:[%s1 + $0x28] sm:$0xf]
    %v153 = vld [vmem:[%s1 + $0x2c] sm:$0xf]
    %v154 = vld [vmem:[%s1 + $0x30] sm:$0xf]
    %v155 = vld [vmem:[%s1 + $0x34] sm:$0xf]
    %v156 = vld [vmem:[%s1 + $0x38] sm:$0xf]
    %v157 = vld [vmem:[%s1 + $0x3c] sm:$0xf]
    %v158 = vld [vmem:[%s1 + $0x40] sm:$0xf]
    %v159 = vld [vmem:[%s1 + $0x44] sm:$0xf]
    %v160 = vld [vmem:[%s1 + $0x48] sm:$0xf]
    %v161 = vld [vmem:[%s1 + $0x4c] sm:$0xf]
    %v162 = vld [vmem:[%s1 + $0x50] sm:$0xf]
    %v163 = vld [vmem:[%s1 + $0x54] sm:$0xf]
    %v164 = vld [vmem:[%s1 + $0x58] sm:$0xf]
    %v165 = vld [vmem:[%s1 + $0x5c] sm:$0xf]
    %v166 = vld [vmem:[%s1 + $0x60] sm:$0xf]
    %v167 = vld [vmem:[%s1 + $0x64] sm:$0xf]
    %v168 = vld [vmem:[%s1 + $0x68] sm:$0xf]
    %v169 = vld [vmem:[%s1 + $0x6c] sm:$0xf]
    %v170 = vld [vmem:[%s1 + $0x70] sm:$0xf]
    %v171 = vld [vmem:[%s1 + $0x74] sm:$0xf]
    %v172 = vld [vmem:[%s1 + $0x78] sm:$0xf]
    %v173 = vld [vmem:[%s1 + $0x7c] sm:$0xf]
    %v174 = vld [vmem:[%s2] sm:$0xff]
    %v175 = vld [vmem:[%s2 + $0x8] sm:$0xff]
    %v176 = vld [vmem:[%s2 + $0x10] sm:$0xff]
    %v177 = vld [vmem:[%s2 + $0x18] sm:$0xff]
    %v178 = vld [vmem:[%s2 + $0x20] sm:$0xff]
    %v179 = vld [vmem:[%s2 + $0x28] sm:$0xff]
    %v180 = vld [vmem:[%s2 + $0x30] sm:$0xff]
    %v181 = vld [vmem:[%s2 + $0x38] sm:$0xff]
    %v182 = vld [vmem:[%s0] sm:$0xff]
    %v183 = vld [vmem:[%s0 + $0x8] sm:$0xff]
    %v184 = vld [vmem:[%s0 + $0x10] sm:$0xff]
    %v185 = vld [vmem:[%s0 + $0x18] sm:$0xff]
    %v186 = vld [vmem:[%s0 + $0x20] sm:$0xff]
    %v187 = vld [vmem:[%s0 + $0x28] sm:$0xff]
    %v188 = vld [vmem:[%s0 + $0x30] sm:$0xff]
    %v189 = vld [vmem:[%s0 + $0x38] sm:$0xff]
    %v190 = vld [vmem:[%s0 + $0x40] sm:$0xff]
    %v191 = vld [vmem:[%s0 + $0x48] sm:$0xff]
    %v192 = vld [vmem:[%s0 + $0x50] sm:$0xff]
    %v193 = vld [vmem:[%s0 + $0x58] sm:$0xff]
    %v194 = vld [vmem:[%s0 + $0x60] sm:$0xff]
    %v195 = vld [vmem:[%s0 + $0x68] sm:$0xff]
    %v196 = vld [vmem:[%s0 + $0x70] sm:$0xff]
    %v197 = vld [vmem:[%s0 + $0x78] sm:$0xff]
    %v198 = vld [vmem:[%s0 + $0x80] sm:$0xff]
    %v199 = vld [vmem:[%s0 + $0x88] sm:$0xff]
    %v200 = vld [vmem:[%s0 + $0x90] sm:$0xff]
    %v201 = vld [vmem:[%s0 + $0x98] sm:$0xff]
    %v202 = vld [vmem:[%s0 + $0xa0] sm:$0xff]
    %v203 = vld [vmem:[%s0 + $0xa8] sm:$0xff]
    %v204 = vld [vmem:[%s0 + $0xb0] sm:$0xff]
    %v205 = vld [vmem:[%s0 + $0xb8] sm:$0xff]
    %v206 = vld [vmem:[%s0 + $0xc0] sm:$0xff]
    %v207 = vld [vmem:[%s0 + $0xc8] sm:$0xff]
    %v208 = vld [vmem:[%s0 + $0xd0] sm:$0xff]
    %v209 = vld [vmem:[%s0 + $0xd8] sm:$0xff]
    %v210 = vld [vmem:[%s0 + $0xe0] sm:$0xff]
    %v211 = vld [vmem:[%s0 + $0xe8] sm:$0xff]
    %v212 = vld [vmem:[%s0 + $0xf0] sm:$0xff]
    %v213 = vld [vmem:[%s0 + $0xf8] sm:$0xff]
    %215 = vset.pattern.permute.xlu0 0
    %216 = vperm.xlu0 %215, %v37
    %v217 = vpop.permute.xlu0 %216
    %220 = vset.pattern.permute.xlu0 0
    %221 = vperm.xlu0 %220, %v38
    %v222 = vpop.permute.xlu0 %221
    %225 = vset.pattern.permute.xlu0 0
    %226 = vperm.xlu0 %225, %v39
    %v227 = vpop.permute.xlu0 %226
    %230 = vset.pattern.permute.xlu0 0
    %231 = vperm.xlu0 %230, %v40
    %v232 = vpop.permute.xlu0 %231
    %235 = vset.pattern.permute.xlu0 0
    %236 = vperm.xlu0 %235, %v41
    %v237 = vpop.permute.xlu0 %236
    %240 = vset.pattern.permute.xlu0 0
    %241 = vperm.xlu0 %240, %v42
    %v242 = vpop.permute.xlu0 %241
    %245 = vset.pattern.permute.xlu0 0
    %246 = vperm.xlu0 %245, %v43
    %v247 = vpop.permute.xlu0 %246
    %250 = vset.pattern.permute.xlu0 0
    %251 = vperm.xlu0 %250, %v44
    %v252 = vpop.permute.xlu0 %251
    %v262 = vunpack.c.l.b16 %v174
    %v263 = vunpack.c.h.b16 %v174
    %v264 = vunpack.c.l.b16 %v175
    %v265 = vunpack.c.h.b16 %v175
    %v266 = vunpack.c.l.b16 %v176
    %v267 = vunpack.c.h.b16 %v176
    %v268 = vunpack.c.l.b16 %v177
    %v269 = vunpack.c.h.b16 %v177
    %v270 = vunpack.c.l.b16 %v178
    %v271 = vunpack.c.h.b16 %v178
    %v272 = vunpack.c.l.b16 %v179
    %v273 = vunpack.c.h.b16 %v179
    %v274 = vunpack.c.l.b16 %v180
    %v275 = vunpack.c.h.b16 %v180
    %v276 = vunpack.c.l.b16 %v181
    %v277 = vunpack.c.h.b16 %v181
    %v278 = vpack.c.b16 %v264, %v262
    %v279 = vpack.c.b16 %v265, %v263
    %v280 = vpack.c.b16 %v268, %v266
    %v281 = vpack.c.b16 %v269, %v267
    %v282 = vpack.c.b16 %v272, %v270
    %v283 = vpack.c.b16 %v273, %v271
    %v284 = vpack.c.b16 %v276, %v274
    %v285 = vpack.c.b16 %v277, %v275
    %v326 = vunpack.c.l.b16 %v182
    %v327 = vunpack.c.h.b16 %v182
    %v328 = vunpack.c.l.b16 %v183
    %v329 = vunpack.c.h.b16 %v183
    %v330 = vunpack.c.l.b16 %v184
    %v331 = vunpack.c.h.b16 %v184
    %v332 = vunpack.c.l.b16 %v185
    %v333 = vunpack.c.h.b16 %v185
    %v334 = vunpack.c.l.b16 %v186
    %v335 = vunpack.c.h.b16 %v186
    %v336 = vunpack.c.l.b16 %v187
    %v337 = vunpack.c.h.b16 %v187
    %v338 = vunpack.c.l.b16 %v188
    %v339 = vunpack.c.h.b16 %v188
    %v340 = vunpack.c.l.b16 %v189
    %v341 = vunpack.c.h.b16 %v189
    %v342 = vunpack.c.l.b16 %v190
    %v343 = vunpack.c.h.b16 %v190
    %v344 = vunpack.c.l.b16 %v191
    %v345 = vunpack.c.h.b16 %v191
    %v346 = vunpack.c.l.b16 %v192
    %v347 = vunpack.c.h.b16 %v192
    %v348 = vunpack.c.l.b16 %v193
    %v349 = vunpack.c.h.b16 %v193
    %v350 = vunpack.c.l.b16 %v194
    %v351 = vunpack.c.h.b16 %v194
    %v352 = vunpack.c.l.b16 %v195
    %v353 = vunpack.c.h.b16 %v195
    %v354 = vunpack.c.l.b16 %v196
    %v355 = vunpack.c.h.b16 %v196
    %v356 = vunpack.c.l.b16 %v197
    %v357 = vunpack.c.h.b16 %v197
    %v358 = vunpack.c.l.b16 %v198
    %v359 = vunpack.c.h.b16 %v198
    %v360 = vunpack.c.l.b16 %v199
    %v361 = vunpack.c.h.b16 %v199
    %v362 = vunpack.c.l.b16 %v200
    %v363 = vunpack.c.h.b16 %v200
    %v364 = vunpack.c.l.b16 %v201
    %v365 = vunpack.c.h.b16 %v201
    %v366 = vunpack.c.l.b16 %v202
    %v367 = vunpack.c.h.b16 %v202
    %v368 = vunpack.c.l.b16 %v203
    %v369 = vunpack.c.h.b16 %v203
    %v370 = vunpack.c.l.b16 %v204
    %v371 = vunpack.c.h.b16 %v204
    %v372 = vunpack.c.l.b16 %v205
    %v373 = vunpack.c.h.b16 %v205
    %v374 = vunpack.c.l.b16 %v206
    %v375 = vunpack.c.h.b16 %v206
    %v376 = vunpack.c.l.b16 %v207
    %v377 = vunpack.c.h.b16 %v207
    %v378 = vunpack.c.l.b16 %v208
    %v379 = vunpack.c.h.b16 %v208
    %v380 = vunpack.c.l.b16 %v209
    %v381 = vunpack.c.h.b16 %v209
    %v382 = vunpack.c.l.b16 %v210
    %v383 = vunpack.c.h.b16 %v210
    %v384 = vunpack.c.l.b16 %v211
    %v385 = vunpack.c.h.b16 %v211
    %v386 = vunpack.c.l.b16 %v212
    %v387 = vunpack.c.h.b16 %v212
    %v388 = vunpack.c.l.b16 %v213
    %v389 = vunpack.c.h.b16 %v213
    %v390 = vpack.c.b16 %v328, %v326
    %v391 = vpack.c.b16 %v329, %v327
    %v392 = vpack.c.b16 %v332, %v330
    %v393 = vpack.c.b16 %v333, %v331
    %v394 = vpack.c.b16 %v336, %v334
    %v395 = vpack.c.b16 %v337, %v335
    %v396 = vpack.c.b16 %v340, %v338
    %v397 = vpack.c.b16 %v341, %v339
    %v398 = vpack.c.b16 %v344, %v342
    %v399 = vpack.c.b16 %v345, %v343
    %v400 = vpack.c.b16 %v348, %v346
    %v401 = vpack.c.b16 %v349, %v347
    %v402 = vpack.c.b16 %v352, %v350
    %v403 = vpack.c.b16 %v353, %v351
    %v404 = vpack.c.b16 %v356, %v354
    %v405 = vpack.c.b16 %v357, %v355
    %v406 = vpack.c.b16 %v360, %v358
    %v407 = vpack.c.b16 %v361, %v359
    %v408 = vpack.c.b16 %v364, %v362
    %v409 = vpack.c.b16 %v365, %v363
    %v410 = vpack.c.b16 %v368, %v366
    %v411 = vpack.c.b16 %v369, %v367
    %v412 = vpack.c.b16 %v372, %v370
    %v413 = vpack.c.b16 %v373, %v371
    %v414 = vpack.c.b16 %v376, %v374
    %v415 = vpack.c.b16 %v377, %v375
    %v416 = vpack.c.b16 %v380, %v378
    %v417 = vpack.c.b16 %v381, %v379
    %v418 = vpack.c.b16 %v384, %v382
    %v419 = vpack.c.b16 %v385, %v383
    %v420 = vpack.c.b16 %v388, %v386
    %v421 = vpack.c.b16 %v389, %v387
    %454 = vmatprep.subr.bf16.mxu0 %v391
    %455 = vmatpush1.bf16.msra.mxu0 %v390
    %456 = vmatprep.subr.bf16.mxu0 %v393
    %457 = vmatpush1.bf16.msra.mxu0 %v392
    %458 = vmatprep.subr.bf16.mxu0 %v395
    %459 = vmatpush1.bf16.msra.mxu0 %v394
    %460 = vmatprep.subr.bf16.mxu0 %v397
    %461 = vmatpush1.bf16.msra.mxu0 %v396
    %462 = vmatprep.subr.bf16.mxu0 %v399
    %463 = vmatpush1.bf16.msra.mxu0 %v398
    %464 = vmatprep.subr.bf16.mxu0 %v401
    %465 = vmatpush1.bf16.msra.mxu0 %v400
    %466 = vmatprep.subr.bf16.mxu0 %v403
    %467 = vmatpush1.bf16.msra.mxu0 %v402
    %468 = vmatprep.subr.bf16.mxu0 %v405
    %469 = vmatpush1.bf16.msra.mxu0 %v404
    %470 = vmatprep.subr.bf16.mxu0 %v407
    %471 = vmatpush1.bf16.msra.mxu0 %v406
    %472 = vmatprep.subr.bf16.mxu0 %v409
    %473 = vmatpush1.bf16.msra.mxu0 %v408
    %474 = vmatprep.subr.bf16.mxu0 %v411
    %475 = vmatpush1.bf16.msra.mxu0 %v410
    %476 = vmatprep.subr.bf16.mxu0 %v413
    %477 = vmatpush1.bf16.msra.mxu0 %v412
    %478 = vmatprep.subr.bf16.mxu0 %v415
    %479 = vmatpush1.bf16.msra.mxu0 %v414
    %480 = vmatprep.subr.bf16.mxu0 %v417
    %481 = vmatpush1.bf16.msra.mxu0 %v416
    %482 = vmatprep.subr.bf16.mxu0 %v419
    %483 = vmatpush1.bf16.msra.mxu0 %v418
    %484 = vmatprep.subr.bf16.mxu0 %v421
    %485 = vmatpush1.bf16.msra.mxu0 %v420
    %486 = vmatprep.mubr.bf16.mxu0 %v279
    %487 = vmatmul.mubr.bf16.gmra.mrb[0].mxu0 %v278
    %v488 = vpop.f32.mrb[0].mxu0
    %v489 = vadd.f32 %v217, %v488
    %v490 = vpop.f32.mrb[0].mxu0
    %v491 = vadd.f32 %v217, %v490
    %v492 = vpop.f32.mrb[0].mxu0
    %v493 = vadd.f32 %v222, %v492
    %v494 = vpop.f32.mrb[0].mxu0
    %v495 = vadd.f32 %v222, %v494
    %496 = vmatprep.mubr.bf16.mxu0 %v281
    %497 = vmatmul.mubr.bf16.gmra.mrb[0].mxu0 %v280
    %v498 = vpop.f32.mrb[0].mxu0
    %v499 = vadd.f32 %v227, %v498
    %v500 = vpop.f32.mrb[0].mxu0
    %v501 = vadd.f32 %v227, %v500
    %v502 = vpop.f32.mrb[0].mxu0
    %v503 = vadd.f32 %v232, %v502
    %v504 = vpop.f32.mrb[0].mxu0
    %v505 = vadd.f32 %v232, %v504
    %506 = vmatprep.mubr.bf16.mxu0 %v283
    %507 = vmatmul.mubr.bf16.gmra.mrb[0].mxu0 %v282
    %v508 = vpop.f32.mrb[0].mxu0
    %v509 = vadd.f32 %v237, %v508
    %v510 = vpop.f32.mrb[0].mxu0
    %v511 = vadd.f32 %v237, %v510
    %v512 = vpop.f32.mrb[0].mxu0
    %v513 = vadd.f32 %v242, %v512
    %v514 = vpop.f32.mrb[0].mxu0
    %v515 = vadd.f32 %v242, %v514
    %516 = vmatprep.mubr.bf16.mxu0 %v285
    %517 = vmatmul.mubr.bf16.gmra.mrb[0].mxu0 %v284
    %v518 = vpop.f32.mrb[0].mxu0
    %v519 = vadd.f32 %v247, %v518
    %v520 = vpop.f32.mrb[0].mxu0
    %v521 = vadd.f32 %v247, %v520
    %v522 = vpop.f32.mrb[0].mxu0
    %v523 = vadd.f32 %v252, %v522
    %v524 = vpop.f32.mrb[0].mxu0
    %v525 = vadd.f32 %v252, %v524
    %526 = vdwg.mxu0
    %v527 = vmax.f32 %v489, 0.0
    %v528 = vmax.f32 %v491, 0.0
    %v529 = vmax.f32 %v493, 0.0
    %v530 = vmax.f32 %v495, 0.0
    %v531 = vmax.f32 %v499, 0.0
    %v532 = vmax.f32 %v501, 0.0
    %v533 = vmax.f32 %v503, 0.0
    %v534 = vmax.f32 %v505, 0.0
    %v535 = vmax.f32 %v509, 0.0
    %v536 = vmax.f32 %v511, 0.0
    %v537 = vmax.f32 %v513, 0.0
    %v538 = vmax.f32 %v515, 0.0
    %v539 = vmax.f32 %v519, 0.0
    %v540 = vmax.f32 %v521, 0.0
    %v541 = vmax.f32 %v523, 0.0
    %v542 = vmax.f32 %v525, 0.0
    %v543 = vpack.c.bf16 %v529, %v527
    %v544 = vpack.c.bf16 %v530, %v528
    %v545 = vpack.c.bf16 %v533, %v531
    %v546 = vpack.c.bf16 %v534, %v532
    %v547 = vpack.c.bf16 %v537, %v535
    %v548 = vpack.c.bf16 %v538, %v536
    %v549 = vpack.c.bf16 %v541, %v539
    %v550 = vpack.c.bf16 %v542, %v540
    %v551 = vld [vmem:[%s3] sm:$0xf]
    %v552 = vld [vmem:[%s3 + $0x4] sm:$0xf]
    %v553 = vld [vmem:[%s3 + $0x8] sm:$0xf]
    %v554 = vld [vmem:[%s3 + $0xc] sm:$0xf]
    %v555 = vld [vmem:[%s3 + $0x10] sm:$0xf]
    %v556 = vld [vmem:[%s3 + $0x14] sm:$0xf]
    %v557 = vld [vmem:[%s3 + $0x18] sm:$0xf]
    %v558 = vld [vmem:[%s3 + $0x1c] sm:$0xf]
    %560 = vset.pattern.permute.xlu0 0
    %561 = vperm.xlu0 %560, %v45
    %v562 = vpop.permute.xlu0 %561
    %565 = vset.pattern.permute.xlu0 0
    %566 = vperm.xlu0 %565, %v46
    %v567 = vpop.permute.xlu0 %566
    %570 = vset.pattern.permute.xlu0 0
    %571 = vperm.xlu0 %570, %v47
    %v572 = vpop.permute.xlu0 %571
    %575 = vset.pattern.permute.xlu0 0
    %576 = vperm.xlu0 %575, %v48
    %v577 = vpop.permute.xlu0 %576
    %580 = vset.pattern.permute.xlu0 0
    %581 = vperm.xlu0 %580, %v49
    %v582 = vpop.permute.xlu0 %581
    %585 = vset.pattern.permute.xlu0 0
    %586 = vperm.xlu0 %585, %v50
    %v587 = vpop.permute.xlu0 %586
    %590 = vset.pattern.permute.xlu0 0
    %591 = vperm.xlu0 %590, %v51
    %v592 = vpop.permute.xlu0 %591
    %595 = vset.pattern.permute.xlu0 0
    %596 = vperm.xlu0 %595, %v52
    %v597 = vpop.permute.xlu0 %596
    %v607 = vunpack.c.l.b16 %v551
    %v608 = vunpack.c.l.b16 %v552
    %v609 = vunpack.c.l.b16 %v553
    %v610 = vunpack.c.l.b16 %v554
    %v611 = vunpack.c.l.b16 %v555
    %v612 = vunpack.c.l.b16 %v556
    %v613 = vunpack.c.l.b16 %v557
    %v614 = vunpack.c.l.b16 %v558
    %v615 = vpack.c.b16 %v608, %v607
    %v616 = vpack.c.b16 %v610, %v609
    %v617 = vpack.c.b16 %v612, %v611
    %v618 = vpack.c.b16 %v614, %v613
    %vm619 = vcmask 523264
    %v621 = vsel %vm619, %v615, 0
    %v624 = vsel %vm619, %v616, 0
    %v627 = vsel %vm619, %v617, 0
    %v630 = vsel %vm619, %v618, 0
    %632 = vmatprep.subr.bf16.mxu0 %v544
    %633 = vmatpush1.bf16.msra.mxu0 %v543
    %634 = vmatprep.subr.bf16.mxu0 %v546
    %635 = vmatpush1.bf16.msra.mxu0 %v545
    %636 = vmatprep.subr.bf16.mxu0 %v548
    %637 = vmatpush1.bf16.msra.mxu0 %v547
    %638 = vmatprep.subr.bf16.mxu0 %v550
    %639 = vmatpush1.bf16.msra.mxu0 %v549
    %640 = vmatprep.subr.bf16.mxu0 0
    %641 = vmatpush1.bf16.msra.mxu0 0
    %642 = vmatprep.subr.bf16.mxu0 0
    %643 = vmatpush1.bf16.msra.mxu0 0
    %644 = vmatprep.subr.bf16.mxu0 0
    %645 = vmatpush1.bf16.msra.mxu0 0
    %646 = vmatprep.subr.bf16.mxu0 0
    %647 = vmatpush1.bf16.msra.mxu0 0
    %648 = vmatprep.subr.bf16.mxu0 0
    %649 = vmatpush1.bf16.msra.mxu0 0
    %650 = vmatprep.subr.bf16.mxu0 0
    %651 = vmatpush1.bf16.msra.mxu0 0
    %652 = vmatprep.subr.bf16.mxu0 0
    %653 = vmatpush1.bf16.msra.mxu0 0
    %654 = vmatprep.subr.bf16.mxu0 0
    %655 = vmatpush1.bf16.msra.mxu0 0
    %656 = vmatprep.subr.bf16.mxu0 0
    %657 = vmatpush1.bf16.msra.mxu0 0
    %658 = vmatprep.subr.bf16.mxu0 0
    %659 = vmatpush1.bf16.msra.mxu0 0
    %660 = vmatprep.subr.bf16.mxu0 0
    %661 = vmatpush1.bf16.msra.mxu0 0
    %662 = vmatprep.subr.bf16.mxu0 0
    %663 = vmatpush1.bf16.msra.mxu0 0
    %664 = vmatprep.mubr.bf16.mxu0 0
    %665 = vmatmul.mubr.bf16.gmra.mrb[0].mxu0 %v621
    %v666 = vpop.f32.mrb[0].mxu0
    %v667 = vadd.f32 %v562, %v666
    %v668 = vpop.f32.mrb[0].mxu0
    %v669 = vadd.f32 %v562, %v668
    %v670 = vpop.f32.mrb[0].mxu0
    %v671 = vadd.f32 %v567, %v670
    %v672 = vpop.f32.mrb[0].mxu0
    %v673 = vadd.f32 %v567, %v672
    %674 = vmatprep.mubr.bf16.mxu0 0
    %675 = vmatmul.mubr.bf16.gmra.mrb[0].mxu0 %v624
    %v676 = vpop.f32.mrb[0].mxu0
    %v677 = vadd.f32 %v572, %v676
    %v678 = vpop.f32.mrb[0].mxu0
    %v679 = vadd.f32 %v572, %v678
    %v680 = vpop.f32.mrb[0].mxu0
    %v681 = vadd.f32 %v577, %v680
    %v682 = vpop.f32.mrb[0].mxu0
    %v683 = vadd.f32 %v577, %v682
    %684 = vmatprep.mubr.bf16.mxu0 0
    %685 = vmatmul.mubr.bf16.gmra.mrb[0].mxu0 %v627
    %v686 = vpop.f32.mrb[0].mxu0
    %v687 = vadd.f32 %v582, %v686
    %v688 = vpop.f32.mrb[0].mxu0
    %v689 = vadd.f32 %v582, %v688
    %v690 = vpop.f32.mrb[0].mxu0
    %v691 = vadd.f32 %v587, %v690
    %v692 = vpop.f32.mrb[0].mxu0
    %v693 = vadd.f32 %v587, %v692
    %694 = vmatprep.mubr.bf16.mxu0 0
    %695 = vmatmul.mubr.bf16.gmra.mrb[0].mxu0 %v630
    %v696 = vpop.f32.mrb[0].mxu0
    %v697 = vadd.f32 %v592, %v696
    %v698 = vpop.f32.mrb[0].mxu0
    %v699 = vadd.f32 %v592, %v698
    %v700 = vpop.f32.mrb[0].mxu0
    %v701 = vadd.f32 %v597, %v700
    %v702 = vpop.f32.mrb[0].mxu0
    %v703 = vadd.f32 %v597, %v702
    %704 = vdwg.mxu0
    %v705 = vmax.f32 %v667, 0.0
    %v706 = vmax.f32 %v669, 0.0
    %v707 = vmax.f32 %v671, 0.0
    %v708 = vmax.f32 %v673, 0.0
    %v709 = vmax.f32 %v677, 0.0
    %v710 = vmax.f32 %v679, 0.0
    %v711 = vmax.f32 %v681, 0.0
    %v712 = vmax.f32 %v683, 0.0
    %v713 = vmax.f32 %v687, 0.0
    %v714 = vmax.f32 %v689, 0.0
    %v715 = vmax.f32 %v691, 0.0
    %v716 = vmax.f32 %v693, 0.0
    %v717 = vmax.f32 %v697, 0.0
    %v718 = vmax.f32 %v699, 0.0
    %v719 = vmax.f32 %v701, 0.0
    %v720 = vmax.f32 %v703, 0.0
    %v721 = vpack.c.bf16 %v707, %v705
    %v722 = vpack.c.bf16 %v708, %v706
    %v723 = vpack.c.bf16 %v711, %v709
    %v724 = vpack.c.bf16 %v712, %v710
    %v725 = vpack.c.bf16 %v715, %v713
    %v726 = vpack.c.bf16 %v716, %v714
    %v727 = vpack.c.bf16 %v719, %v717
    %v728 = vpack.c.bf16 %v720, %v718
    %v729 = vld [vmem:[%s4] sm:$0xff]
    %v730 = vld [vmem:[%s4 + $0x8] sm:$0xff]
    %v731 = vld [vmem:[%s4 + $0x10] sm:$0xff]
    %v732 = vld [vmem:[%s4 + $0x18] sm:$0xff]
    %v733 = vld [vmem:[%s4 + $0x20] sm:$0xff]
    %v734 = vld [vmem:[%s4 + $0x28] sm:$0xff]
    %v735 = vld [vmem:[%s4 + $0x30] sm:$0xff]
    %v736 = vld [vmem:[%s4 + $0x38] sm:$0xff]
    %v737 = vld [vmem:[%s4 + $0x40] sm:$0xff]
    %v738 = vld [vmem:[%s4 + $0x48] sm:$0xff]
    %v739 = vld [vmem:[%s4 + $0x50] sm:$0xff]
    %v740 = vld [vmem:[%s4 + $0x58] sm:$0xff]
    %v741 = vld [vmem:[%s4 + $0x60] sm:$0xff]
    %v742 = vld [vmem:[%s4 + $0x68] sm:$0xff]
    %v743 = vld [vmem:[%s4 + $0x70] sm:$0xff]
    %v744 = vld [vmem:[%s4 + $0x78] sm:$0xff]
    %746 = vset.pattern.permute.xlu0 0
    %747 = vperm.xlu0 %746, %v53
    %v748 = vpop.permute.xlu0 %747
    %751 = vset.pattern.permute.xlu0 0
    %752 = vperm.xlu0 %751, %v54
    %v753 = vpop.permute.xlu0 %752
    %756 = vset.pattern.permute.xlu0 0
    %757 = vperm.xlu0 %756, %v55
    %v758 = vpop.permute.xlu0 %757
    %761 = vset.pattern.permute.xlu0 0
    %762 = vperm.xlu0 %761, %v56
    %v763 = vpop.permute.xlu0 %762
    %766 = vset.pattern.permute.xlu0 0
    %767 = vperm.xlu0 %766, %v57
    %v768 = vpop.permute.xlu0 %767
    %771 = vset.pattern.permute.xlu0 0
    %772 = vperm.xlu0 %771, %v58
    %v773 = vpop.permute.xlu0 %772
    %776 = vset.pattern.permute.xlu0 0
    %777 = vperm.xlu0 %776, %v59
    %v778 = vpop.permute.xlu0 %777
    %781 = vset.pattern.permute.xlu0 0
    %782 = vperm.xlu0 %781, %v60
    %v783 = vpop.permute.xlu0 %782
    %786 = vset.pattern.permute.xlu0 0
    %787 = vperm.xlu0 %786, %v61
    %v788 = vpop.permute.xlu0 %787
    %791 = vset.pattern.permute.xlu0 0
    %792 = vperm.xlu0 %791, %v62
    %v793 = vpop.permute.xlu0 %792
    %796 = vset.pattern.permute.xlu0 0
    %797 = vperm.xlu0 %796, %v63
    %v798 = vpop.permute.xlu0 %797
    %801 = vset.pattern.permute.xlu0 0
    %802 = vperm.xlu0 %801, %v64
    %v803 = vpop.permute.xlu0 %802
    %806 = vset.pattern.permute.xlu0 0
    %807 = vperm.xlu0 %806, %v65
    %v808 = vpop.permute.xlu0 %807
    %811 = vset.pattern.permute.xlu0 0
    %812 = vperm.xlu0 %811, %v66
    %v813 = vpop.permute.xlu0 %812
    %816 = vset.pattern.permute.xlu0 0
    %817 = vperm.xlu0 %816, %v67
    %v818 = vpop.permute.xlu0 %817
    %821 = vset.pattern.permute.xlu0 0
    %822 = vperm.xlu0 %821, %v68
    %v823 = vpop.permute.xlu0 %822
    %v841 = vunpack.c.l.b16 %v729
    %v842 = vunpack.c.h.b16 %v729
    %v843 = vunpack.c.l.b16 %v730
    %v844 = vunpack.c.h.b16 %v730
    %v845 = vunpack.c.l.b16 %v731
    %v846 = vunpack.c.h.b16 %v731
    %v847 = vunpack.c.l.b16 %v732
    %v848 = vunpack.c.h.b16 %v732
    %v849 = vunpack.c.l.b16 %v733
    %v850 = vunpack.c.h.b16 %v733
    %v851 = vunpack.c.l.b16 %v734
    %v852 = vunpack.c.h.b16 %v734
    %v853 = vunpack.c.l.b16 %v735
    %v854 = vunpack.c.h.b16 %v735
    %v855 = vunpack.c.l.b16 %v736
    %v856 = vunpack.c.h.b16 %v736
    %v857 = vunpack.c.l.b16 %v737
    %v858 = vunpack.c.h.b16 %v737
    %v859 = vunpack.c.l.b16 %v738
    %v860 = vunpack.c.h.b16 %v738
    %v861 = vunpack.c.l.b16 %v739
    %v862 = vunpack.c.h.b16 %v739
    %v863 = vunpack.c.l.b16 %v740
    %v864 = vunpack.c.h.b16 %v740
    %v865 = vunpack.c.l.b16 %v741
    %v866 = vunpack.c.h.b16 %v741
    %v867 = vunpack.c.l.b16 %v742
    %v868 = vunpack.c.h.b16 %v742
    %v869 = vunpack.c.l.b16 %v743
    %v870 = vunpack.c.h.b16 %v743
    %v871 = vunpack.c.l.b16 %v744
    %v872 = vunpack.c.h.b16 %v744
    %v873 = vpack.c.b16 %v843, %v841
    %v874 = vpack.c.b16 %v844, %v842
    %v875 = vpack.c.b16 %v847, %v845
    %v876 = vpack.c.b16 %v848, %v846
    %v877 = vpack.c.b16 %v851, %v849
    %v878 = vpack.c.b16 %v852, %v850
    %v879 = vpack.c.b16 %v855, %v853
    %v880 = vpack.c.b16 %v856, %v854
    %v881 = vpack.c.b16 %v859, %v857
    %v882 = vpack.c.b16 %v860, %v858
    %v883 = vpack.c.b16 %v863, %v861
    %v884 = vpack.c.b16 %v864, %v862
    %v885 = vpack.c.b16 %v867, %v865
    %v886 = vpack.c.b16 %v868, %v866
    %v887 = vpack.c.b16 %v871, %v869
    %v888 = vpack.c.b16 %v872, %v870
    %v937 = vunpack.c.l.b16 %v142
    %v938 = vunpack.c.l.b16 %v143
    %v939 = vunpack.c.l.b16 %v144
    %v940 = vunpack.c.l.b16 %v145
    %v941 = vunpack.c.l.b16 %v146
    %v942 = vunpack.c.l.b16 %v147
    %v943 = vunpack.c.l.b16 %v148
    %v944 = vunpack.c.l.b16 %v149
    %v945 = vunpack.c.l.b16 %v150
    %v946 = vunpack.c.l.b16 %v151
    %v947 = vunpack.c.l.b16 %v152
    %v948 = vunpack.c.l.b16 %v153
    %v949 = vunpack.c.l.b16 %v154
    %v950 = vunpack.c.l.b16 %v155
    %v951 = vunpack.c.l.b16 %v156
    %v952 = vunpack.c.l.b16 %v157
    %v953 = vunpack.c.l.b16 %v158
    %v954 = vunpack.c.l.b16 %v159
    %v955 = vunpack.c.l.b16 %v160
    %v956 = vunpack.c.l.b16 %v161
    %v957 = vunpack.c.l.b16 %v162
    %v958 = vunpack.c.l.b16 %v163
    %v959 = vunpack.c.l.b16 %v164
    %v960 = vunpack.c.l.b16 %v165
    %v961 = vunpack.c.l.b16 %v166
    %v962 = vunpack.c.l.b16 %v167
    %v963 = vunpack.c.l.b16 %v168
    %v964 = vunpack.c.l.b16 %v169
    %v965 = vunpack.c.l.b16 %v170
    %v966 = vunpack.c.l.b16 %v171
    %v967 = vunpack.c.l.b16 %v172
    %v968 = vunpack.c.l.b16 %v173
    %v969 = vpack.c.b16 %v938, %v937
    %v970 = vpack.c.b16 %v940, %v939
    %v971 = vpack.c.b16 %v942, %v941
    %v972 = vpack.c.b16 %v944, %v943
    %v973 = vpack.c.b16 %v946, %v945
    %v974 = vpack.c.b16 %v948, %v947
    %v975 = vpack.c.b16 %v950, %v949
    %v976 = vpack.c.b16 %v952, %v951
    %v977 = vpack.c.b16 %v954, %v953
    %v978 = vpack.c.b16 %v956, %v955
    %v979 = vpack.c.b16 %v958, %v957
    %v980 = vpack.c.b16 %v960, %v959
    %v981 = vpack.c.b16 %v962, %v961
    %v982 = vpack.c.b16 %v964, %v963
    %v983 = vpack.c.b16 %v966, %v965
    %v984 = vpack.c.b16 %v968, %v967
    %1001 = vmatprep.subr.bf16.mxu0 0
    %1002 = vmatpush1.bf16.msra.mxu0 %v969
    %1003 = vmatprep.subr.bf16.mxu0 0
    %1004 = vmatpush1.bf16.msra.mxu0 %v970
    %1005 = vmatprep.subr.bf16.mxu0 0
    %1006 = vmatpush1.bf16.msra.mxu0 %v971
    %1007 = vmatprep.subr.bf16.mxu0 0
    %1008 = vmatpush1.bf16.msra.mxu0 %v972
    %1009 = vmatprep.subr.bf16.mxu0 0
    %1010 = vmatpush1.bf16.msra.mxu0 %v973
    %1011 = vmatprep.subr.bf16.mxu0 0
    %1012 = vmatpush1.bf16.msra.mxu0 %v974
    %1013 = vmatprep.subr.bf16.mxu0 0
    %1014 = vmatpush1.bf16.msra.mxu0 %v975
    %1015 = vmatprep.subr.bf16.mxu0 0
    %1016 = vmatpush1.bf16.msra.mxu0 %v976
    %1017 = vmatprep.subr.bf16.mxu0 0
    %1018 = vmatpush1.bf16.msra.mxu0 %v977
    %1019 = vmatprep.subr.bf16.mxu0 0
    %1020 = vmatpush1.bf16.msra.mxu0 %v978
    %1021 = vmatprep.subr.bf16.mxu0 0
    %1022 = vmatpush1.bf16.msra.mxu0 %v979
    %1023 = vmatprep.subr.bf16.mxu0 0
    %1024 = vmatpush1.bf16.msra.mxu0 %v980
    %1025 = vmatprep.subr.bf16.mxu0 0
    %1026 = vmatpush1.bf16.msra.mxu0 %v981
    %1027 = vmatprep.subr.bf16.mxu0 0
    %1028 = vmatpush1.bf16.msra.mxu0 %v982
    %1029 = vmatprep.subr.bf16.mxu0 0
    %1030 = vmatpush1.bf16.msra.mxu0 %v983
    %1031 = vmatprep.subr.bf16.mxu0 0
    %1032 = vmatpush1.bf16.msra.mxu0 %v984
    %1033 = vmatprep.mubr.bf16.mxu0 %v874
    %1034 = vmatmul.mubr.bf16.gmra.mrb[0].mxu0 %v873
    %v1035 = vpop.f32.mrb[0].mxu0
    %v1036 = vadd.f32 %v748, %v1035
    %v1037 = vpop.f32.mrb[0].mxu0
    %v1038 = vpop.f32.mrb[0].mxu0
    %v1039 = vadd.f32 %v753, %v1038
    %v1040 = vpop.f32.mrb[0].mxu0
    %1041 = vmatprep.mubr.bf16.mxu0 %v876
    %1042 = vmatmul.mubr.bf16.gmra.mrb[0].mxu0 %v875
    %v1043 = vpop.f32.mrb[0].mxu0
    %v1044 = vadd.f32 %v758, %v1043
    %v1045 = vpop.f32.mrb[0].mxu0
    %v1046 = vpop.f32.mrb[0].mxu0
    %v1047 = vadd.f32 %v763, %v1046
    %v1048 = vpop.f32.mrb[0].mxu0
    %1049 = vmatprep.mubr.bf16.mxu0 %v878
    %1050 = vmatmul.mubr.bf16.gmra.mrb[0].mxu0 %v877
    %v1051 = vpop.f32.mrb[0].mxu0
    %v1052 = vadd.f32 %v768, %v1051
    %v1053 = vpop.f32.mrb[0].mxu0
    %v1054 = vpop.f32.mrb[0].mxu0
    %v1055 = vadd.f32 %v773, %v1054
    %v1056 = vpop.f32.mrb[0].mxu0
    %1057 = vmatprep.mubr.bf16.mxu0 %v880
    %1058 = vmatmul.mubr.bf16.gmra.mrb[0].mxu0 %v879
    %v1059 = vpop.f32.mrb[0].mxu0
    %v1060 = vadd.f32 %v778, %v1059
    %v1061 = vpop.f32.mrb[0].mxu0
    %v1062 = vpop.f32.mrb[0].mxu0
    %v1063 = vadd.f32 %v783, %v1062
    %v1064 = vpop.f32.mrb[0].mxu0
    %1065 = vmatprep.mubr.bf16.mxu0 %v882
    %1066 = vmatmul.mubr.bf16.gmra.mrb[0].mxu0 %v881
    %v1067 = vpop.f32.mrb[0].mxu0
    %v1068 = vadd.f32 %v788, %v1067
    %v1069 = vpop.f32.mrb[0].mxu0
    %v1070 = vpop.f32.mrb[0].mxu0
    %v1071 = vadd.f32 %v793, %v1070
    %v1072 = vpop.f32.mrb[0].mxu0
    %1073 = vmatprep.mubr.bf16.mxu0 %v884
    %1074 = vmatmul.mubr.bf16.gmra.mrb[0].mxu0 %v883
    %v1075 = vpop.f32.mrb[0].mxu0
    %v1076 = vadd.f32 %v798, %v1075
    %v1077 = vpop.f32.mrb[0].mxu0
    %v1078 = vpop.f32.mrb[0].mxu0
    %v1079 = vadd.f32 %v803, %v1078
    %v1080 = vpop.f32.mrb[0].mxu0
    %1081 = vmatprep.mubr.bf16.mxu0 %v886
    %1082 = vmatmul.mubr.bf16.gmra.mrb[0].mxu0 %v885
    %v1083 = vpop.f32.mrb[0].mxu0
    %v1084 = vadd.f32 %v808, %v1083
    %v1085 = vpop.f32.mrb[0].mxu0
    %v1086 = vpop.f32.mrb[0].mxu0
    %v1087 = vadd.f32 %v813, %v1086
    %v1088 = vpop.f32.mrb[0].mxu0
    %1089 = vmatprep.mubr.bf16.mxu0 %v888
    %1090 = vmatmul.mubr.bf16.gmra.mrb[0].mxu0 %v887
    %v1091 = vpop.f32.mrb[0].mxu0
    %v1092 = vadd.f32 %v818, %v1091
    %v1093 = vpop.f32.mrb[0].mxu0
    %v1094 = vpop.f32.mrb[0].mxu0
    %v1095 = vadd.f32 %v823, %v1094
    %v1096 = vpop.f32.mrb[0].mxu0
    %1097 = vdwg.mxu0
    %v1098 = vmax.f32 %v1036, 0.0
    %v1099 = vmax.f32 %v1039, 0.0
    %v1100 = vmax.f32 %v1044, 0.0
    %v1101 = vmax.f32 %v1047, 0.0
    %v1102 = vmax.f32 %v1052, 0.0
    %v1103 = vmax.f32 %v1055, 0.0
    %v1104 = vmax.f32 %v1060, 0.0
    %v1105 = vmax.f32 %v1063, 0.0
    %v1106 = vmax.f32 %v1068, 0.0
    %v1107 = vmax.f32 %v1071, 0.0
    %v1108 = vmax.f32 %v1076, 0.0
    %v1109 = vmax.f32 %v1079, 0.0
    %v1110 = vmax.f32 %v1084, 0.0
    %v1111 = vmax.f32 %v1087, 0.0
    %v1112 = vmax.f32 %v1092, 0.0
    %v1113 = vmax.f32 %v1095, 0.0
    %v1114 = vpack.c.bf16 %v1099, %v1098
    %v1115 = vpack.c.bf16 %v1101, %v1100
    %v1116 = vpack.c.bf16 %v1103, %v1102
    %v1117 = vpack.c.bf16 %v1105, %v1104
    %v1118 = vpack.c.bf16 %v1107, %v1106
    %v1119 = vpack.c.bf16 %v1109, %v1108
    %v1120 = vpack.c.bf16 %v1111, %v1110
    %v1121 = vpack.c.bf16 %v1113, %v1112
    %v1122 = vld [vmem:[%s5] sm:$0xf]
    %v1123 = vld [vmem:[%s5 + $0x4] sm:$0xf]
    %v1124 = vld [vmem:[%s5 + $0x8] sm:$0xf]
    %v1125 = vld [vmem:[%s5 + $0xc] sm:$0xf]
    %v1126 = vld [vmem:[%s5 + $0x10] sm:$0xf]
    %v1127 = vld [vmem:[%s5 + $0x14] sm:$0xf]
    %v1128 = vld [vmem:[%s5 + $0x18] sm:$0xf]
    %v1129 = vld [vmem:[%s5 + $0x1c] sm:$0xf]
    %1131 = vset.pattern.permute.xlu0 0
    %1132 = vperm.xlu0 %1131, %v69
    %v1133 = vpop.permute.xlu0 %1132
    %1136 = vset.pattern.permute.xlu0 0
    %1137 = vperm.xlu0 %1136, %v70
    %v1138 = vpop.permute.xlu0 %1137
    %1141 = vset.pattern.permute.xlu0 0
    %1142 = vperm.xlu0 %1141, %v71
    %v1143 = vpop.permute.xlu0 %1142
    %1146 = vset.pattern.permute.xlu0 0
    %1147 = vperm.xlu0 %1146, %v72
    %v1148 = vpop.permute.xlu0 %1147
    %1151 = vset.pattern.permute.xlu0 0
    %1152 = vperm.xlu0 %1151, %v73
    %v1153 = vpop.permute.xlu0 %1152
    %1156 = vset.pattern.permute.xlu0 0
    %1157 = vperm.xlu0 %1156, %v74
    %v1158 = vpop.permute.xlu0 %1157
    %1161 = vset.pattern.permute.xlu0 0
    %1162 = vperm.xlu0 %1161, %v75
    %v1163 = vpop.permute.xlu0 %1162
    %1166 = vset.pattern.permute.xlu0 0
    %1167 = vperm.xlu0 %1166, %v76
    %v1168 = vpop.permute.xlu0 %1167
    %v1178 = vunpack.c.l.b16 %v1122
    %v1179 = vunpack.c.l.b16 %v1123
    %v1180 = vunpack.c.l.b16 %v1124
    %v1181 = vunpack.c.l.b16 %v1125
    %v1182 = vunpack.c.l.b16 %v1126
    %v1183 = vunpack.c.l.b16 %v1127
    %v1184 = vunpack.c.l.b16 %v1128
    %v1185 = vunpack.c.l.b16 %v1129
    %v1186 = vpack.c.b16 %v1179, %v1178
    %v1187 = vpack.c.b16 %v1181, %v1180
    %v1188 = vpack.c.b16 %v1183, %v1182
    %v1189 = vpack.c.b16 %v1185, %v1184
    %v1191 = vsel %vm619, %v1186, 0
    %v1194 = vsel %vm619, %v1187, 0
    %v1197 = vsel %vm619, %v1188, 0
    %v1200 = vsel %vm619, %v1189, 0
    %1202 = vmatprep.subr.bf16.mxu0 0
    %1203 = vmatpush1.bf16.msra.mxu0 %v1114
    %1204 = vmatprep.subr.bf16.mxu0 0
    %1205 = vmatpush1.bf16.msra.mxu0 %v1115
    %1206 = vmatprep.subr.bf16.mxu0 0
    %1207 = vmatpush1.bf16.msra.mxu0 %v1116
    %1208 = vmatprep.subr.bf16.mxu0 0
    %1209 = vmatpush1.bf16.msra.mxu0 %v1117
    %1210 = vmatprep.subr.bf16.mxu0 0
    %1211 = vmatpush1.bf16.msra.mxu0 0
    %1212 = vmatprep.subr.bf16.mxu0 0
    %1213 = vmatpush1.bf16.msra.mxu0 0
    %1214 = vmatprep.subr.bf16.mxu0 0
    %1215 = vmatpush1.bf16.msra.mxu0 0
    %1216 = vmatprep.subr.bf16.mxu0 0
    %1217 = vmatpush1.bf16.msra.mxu0 0
    %1218 = vmatprep.subr.bf16.mxu0 0
    %1219 = vmatpush1.bf16.msra.mxu0 0
    %1220 = vmatprep.subr.bf16.mxu0 0
    %1221 = vmatpush1.bf16.msra.mxu0 0
    %1222 = vmatprep.subr.bf16.mxu0 0
    %1223 = vmatpush1.bf16.msra.mxu0 0
    %1224 = vmatprep.subr.bf16.mxu0 0
    %1225 = vmatpush1.bf16.msra.mxu0 0
    %1226 = vmatprep.subr.bf16.mxu0 0
    %1227 = vmatpush1.bf16.msra.mxu0 0
    %1228 = vmatprep.subr.bf16.mxu0 0
    %1229 = vmatpush1.bf16.msra.mxu0 0
    %1230 = vmatprep.subr.bf16.mxu0 0
    %1231 = vmatpush1.bf16.msra.mxu0 0
    %1232 = vmatprep.subr.bf16.mxu0 0
    %1233 = vmatpush1.bf16.msra.mxu0 0
    %1234 = vmatprep.mubr.bf16.mxu0 0
    %1235 = vmatmul.mubr.bf16.gmra.mrb[0].mxu0 %v1191
    %v1236 = vpop.f32.mrb[0].mxu0
    %v1237 = vadd.f32 %v1133, %v1236
    %v1238 = vpop.f32.mrb[0].mxu0
    %v1239 = vpop.f32.mrb[0].mxu0
    %v1240 = vadd.f32 %v1138, %v1239
    %v1241 = vpop.f32.mrb[0].mxu0
    %1242 = vmatprep.mubr.bf16.mxu0 0
    %1243 = vmatmul.mubr.bf16.gmra.mrb[0].mxu0 %v1194
    %v1244 = vpop.f32.mrb[0].mxu0
    %v1245 = vadd.f32 %v1143, %v1244
    %v1246 = vpop.f32.mrb[0].mxu0
    %v1247 = vpop.f32.mrb[0].mxu0
    %v1248 = vadd.f32 %v1148, %v1247
    %v1249 = vpop.f32.mrb[0].mxu0
    %1250 = vmatprep.mubr.bf16.mxu0 0
    %1251 = vmatmul.mubr.bf16.gmra.mrb[0].mxu0 %v1197
    %v1252 = vpop.f32.mrb[0].mxu0
    %v1253 = vadd.f32 %v1153, %v1252
    %v1254 = vpop.f32.mrb[0].mxu0
    %v1255 = vpop.f32.mrb[0].mxu0
    %v1256 = vadd.f32 %v1158, %v1255
    %v1257 = vpop.f32.mrb[0].mxu0
    %1258 = vmatprep.mubr.bf16.mxu0 0
    %1259 = vmatmul.mubr.bf16.gmra.mrb[0].mxu0 %v1200
    %v1260 = vpop.f32.mrb[0].mxu0
    %v1261 = vadd.f32 %v1163, %v1260
    %v1262 = vpop.f32.mrb[0].mxu0
    %v1263 = vpop.f32.mrb[0].mxu0
    %v1264 = vadd.f32 %v1168, %v1263
    %v1265 = vpop.f32.mrb[0].mxu0
    %1266 = vdwg.mxu0
    %v1267 = vmax.f32 %v1237, 0.0
    %v1268 = vmax.f32 %v1240, 0.0
    %v1269 = vmax.f32 %v1245, 0.0
    %v1270 = vmax.f32 %v1248, 0.0
    %v1271 = vmax.f32 %v1253, 0.0
    %v1272 = vmax.f32 %v1256, 0.0
    %v1273 = vmax.f32 %v1261, 0.0
    %v1274 = vmax.f32 %v1264, 0.0
    %v1275 = vpack.c.bf16 %v1268, %v1267
    %v1276 = vpack.c.bf16 %v1270, %v1269
    %v1277 = vpack.c.bf16 %v1272, %v1271
    %v1278 = vpack.c.bf16 %v1274, %v1273
    %v1279 = vld [vmem:[%s6] sm:$0xf]
    %v1280 = vld [vmem:[%s6 + $0x4] sm:$0xf]
    %v1281 = vld [vmem:[%s6 + $0x8] sm:$0xf]
    %v1282 = vld [vmem:[%s6 + $0xc] sm:$0xf]
    %v1283 = vld [vmem:[%s6 + $0x10] sm:$0xf]
    %v1284 = vld [vmem:[%s6 + $0x14] sm:$0xf]
    %v1285 = vld [vmem:[%s6 + $0x18] sm:$0xf]
    %v1286 = vld [vmem:[%s6 + $0x1c] sm:$0xf]
    %v1287 = vld [vmem:[%s6 + $0x20] sm:$0xf]
    %v1288 = vld [vmem:[%s6 + $0x24] sm:$0xf]
    %v1289 = vld [vmem:[%s6 + $0x28] sm:$0xf]
    %v1290 = vld [vmem:[%s6 + $0x2c] sm:$0xf]
    %v1291 = vld [vmem:[%s6 + $0x30] sm:$0xf]
    %v1292 = vld [vmem:[%s6 + $0x34] sm:$0xf]
    %v1293 = vld [vmem:[%s6 + $0x38] sm:$0xf]
    %v1294 = vld [vmem:[%s6 + $0x3c] sm:$0xf]
    %v1295 = vld [vmem:[%s6 + $0x40] sm:$0xf]
    %v1296 = vld [vmem:[%s6 + $0x44] sm:$0xf]
    %v1297 = vld [vmem:[%s6 + $0x48] sm:$0xf]
    %v1298 = vld [vmem:[%s6 + $0x4c] sm:$0xf]
    %v1299 = vld [vmem:[%s6 + $0x50] sm:$0xf]
    %v1300 = vld [vmem:[%s6 + $0x54] sm:$0xf]
    %v1301 = vld [vmem:[%s6 + $0x58] sm:$0xf]
    %v1302 = vld [vmem:[%s6 + $0x5c] sm:$0xf]
    %v1303 = vld [vmem:[%s6 + $0x60] sm:$0xf]
    %v1304 = vld [vmem:[%s6 + $0x64] sm:$0xf]
    %v1305 = vld [vmem:[%s6 + $0x68] sm:$0xf]
    %v1306 = vld [vmem:[%s6 + $0x6c] sm:$0xf]
    %v1307 = vld [vmem:[%s6 + $0x70] sm:$0xf]
    %v1308 = vld [vmem:[%s6 + $0x74] sm:$0xf]
    %v1309 = vld [vmem:[%s6 + $0x78] sm:$0xf]
    %v1310 = vld [vmem:[%s6 + $0x7c] sm:$0xf]
    %v1343 = vunpack.c.l.b16 %v1279
    %v1344 = vunpack.c.l.b16 %v1280
    %v1345 = vunpack.c.l.b16 %v1281
    %v1346 = vunpack.c.l.b16 %v1282
    %v1347 = vunpack.c.l.b16 %v1283
    %v1348 = vunpack.c.l.b16 %v1284
    %v1349 = vunpack.c.l.b16 %v1285
    %v1350 = vunpack.c.l.b16 %v1286
    %v1351 = vunpack.c.l.b16 %v1287
    %v1352 = vunpack.c.l.b16 %v1288
    %v1353 = vunpack.c.l.b16 %v1289
    %v1354 = vunpack.c.l.b16 %v1290
    %v1355 = vunpack.c.l.b16 %v1291
    %v1356 = vunpack.c.l.b16 %v1292
    %v1357 = vunpack.c.l.b16 %v1293
    %v1358 = vunpack.c.l.b16 %v1294
    %v1359 = vunpack.c.l.b16 %v1295
    %v1360 = vunpack.c.l.b16 %v1296
    %v1361 = vunpack.c.l.b16 %v1297
    %v1362 = vunpack.c.l.b16 %v1298
    %v1363 = vunpack.c.l.b16 %v1299
    %v1364 = vunpack.c.l.b16 %v1300
    %v1365 = vunpack.c.l.b16 %v1301
    %v1366 = vunpack.c.l.b16 %v1302
    %v1367 = vunpack.c.l.b16 %v1303
    %v1368 = vunpack.c.l.b16 %v1304
    %v1369 = vunpack.c.l.b16 %v1305
    %v1370 = vunpack.c.l.b16 %v1306
    %v1371 = vunpack.c.l.b16 %v1307
    %v1372 = vunpack.c.l.b16 %v1308
    %v1373 = vunpack.c.l.b16 %v1309
    %v1374 = vunpack.c.l.b16 %v1310
    %v1375 = vpack.c.b16 %v1344, %v1343
    %v1376 = vpack.c.b16 %v1346, %v1345
    %v1377 = vpack.c.b16 %v1348, %v1347
    %v1378 = vpack.c.b16 %v1350, %v1349
    %v1379 = vpack.c.b16 %v1352, %v1351
    %v1380 = vpack.c.b16 %v1354, %v1353
    %v1381 = vpack.c.b16 %v1356, %v1355
    %v1382 = vpack.c.b16 %v1358, %v1357
    %v1383 = vpack.c.b16 %v1360, %v1359
    %v1384 = vpack.c.b16 %v1362, %v1361
    %v1385 = vpack.c.b16 %v1364, %v1363
    %v1386 = vpack.c.b16 %v1366, %v1365
    %v1387 = vpack.c.b16 %v1368, %v1367
    %v1388 = vpack.c.b16 %v1370, %v1369
    %v1389 = vpack.c.b16 %v1372, %v1371
    %v1390 = vpack.c.b16 %v1374, %v1373
    %v1392 = vsel %vm619, %v1375, 0
    %v1395 = vsel %vm619, %v1376, 0
    %v1398 = vsel %vm619, %v1377, 0
    %v1401 = vsel %vm619, %v1378, 0
    %v1404 = vsel %vm619, %v1379, 0
    %v1407 = vsel %vm619, %v1380, 0
    %v1410 = vsel %vm619, %v1381, 0
    %v1413 = vsel %vm619, %v1382, 0
    %v1416 = vsel %vm619, %v1383, 0
    %v1419 = vsel %vm619, %v1384, 0
    %v1422 = vsel %vm619, %v1385, 0
    %v1425 = vsel %vm619, %v1386, 0
    %v1428 = vsel %vm619, %v1387, 0
    %v1431 = vsel %vm619, %v1388, 0
    %v1434 = vsel %vm619, %v1389, 0
    %v1437 = vsel %vm619, %v1390, 0
    %1439 = vmatprep.subr.bf16.mxu0 0
    %1440 = vmatpush1.bf16.msra.mxu0 %v1118
    %1441 = vmatprep.subr.bf16.mxu0 0
    %1442 = vmatpush1.bf16.msra.mxu0 %v1119
    %1443 = vmatprep.subr.bf16.mxu0 0
    %1444 = vmatpush1.bf16.msra.mxu0 %v1120
    %1445 = vmatprep.subr.bf16.mxu0 0
    %1446 = vmatpush1.bf16.msra.mxu0 %v1121
    %1447 = vmatprep.subr.bf16.mxu0 0
    %1448 = vmatpush1.bf16.msra.mxu0 0
    %1449 = vmatprep.subr.bf16.mxu0 0
    %1450 = vmatpush1.bf16.msra.mxu0 0
    %1451 = vmatprep.subr.bf16.mxu0 0
    %1452 = vmatpush1.bf16.msra.mxu0 0
    %1453 = vmatprep.subr.bf16.mxu0 0
    %1454 = vmatpush1.bf16.msra.mxu0 0
    %1455 = vmatprep.subr.bf16.mxu0 0
    %1456 = vmatpush1.bf16.msra.mxu0 0
    %1457 = vmatprep.subr.bf16.mxu0 0
    %1458 = vmatpush1.bf16.msra.mxu0 0
    %1459 = vmatprep.subr.bf16.mxu0 0
    %1460 = vmatpush1.bf16.msra.mxu0 0
    %1461 = vmatprep.subr.bf16.mxu0 0
    %1462 = vmatpush1.bf16.msra.mxu0 0
    %1463 = vmatprep.subr.bf16.mxu0 0
    %1464 = vmatpush1.bf16.msra.mxu0 0
    %1465 = vmatprep.subr.bf16.mxu0 0
    %1466 = vmatpush1.bf16.msra.mxu0 0
    %1467 = vmatprep.subr.bf16.mxu0 0
    %1468 = vmatpush1.bf16.msra.mxu0 0
    %1469 = vmatprep.subr.bf16.mxu0 0
    %1470 = vmatpush1.bf16.msra.mxu0 0
    %1471 = vmatprep.mubr.bf16.mxu0 0
    %1472 = vmatmul.mubr.bf16.gmra.mrb[0].mxu0 %v1392
    %v1473 = vpop.f32.mrb[0].mxu0
    %v1474 = vadd.f32 0.0, %v1473
    %v1475 = vpop.f32.mrb[0].mxu0
    %v1476 = vpop.f32.mrb[0].mxu0
    %v1477 = vadd.f32 0.0, %v1476
    %v1478 = vpop.f32.mrb[0].mxu0
    %1479 = vmatprep.mubr.bf16.mxu0 0
    %1480 = vmatmul.mubr.bf16.gmra.mrb[0].mxu0 %v1395
    %v1481 = vpop.f32.mrb[0].mxu0
    %v1482 = vadd.f32 0.0, %v1481
    %v1483 = vpop.f32.mrb[0].mxu0
    %v1484 = vpop.f32.mrb[0].mxu0
    %v1485 = vadd.f32 0.0, %v1484
    %v1486 = vpop.f32.mrb[0].mxu0
    %1487 = vmatprep.mubr.bf16.mxu0 0
    %1488 = vmatmul.mubr.bf16.gmra.mrb[0].mxu0 %v1398
    %v1489 = vpop.f32.mrb[0].mxu0
    %v1490 = vadd.f32 0.0, %v1489
    %v1491 = vpop.f32.mrb[0].mxu0
    %v1492 = vpop.f32.mrb[0].mxu0
    %v1493 = vadd.f32 0.0, %v1492
    %v1494 = vpop.f32.mrb[0].mxu0
    %1495 = vmatprep.mubr.bf16.mxu0 0
    %1496 = vmatmul.mubr.bf16.gmra.mrb[0].mxu0 %v1401
    %v1497 = vpop.f32.mrb[0].mxu0
    %v1498 = vadd.f32 0.0, %v1497
    %v1499 = vpop.f32.mrb[0].mxu0
    %v1500 = vpop.f32.mrb[0].mxu0
    %v1501 = vadd.f32 0.0, %v1500
    %v1502 = vpop.f32.mrb[0].mxu0
    %1503 = vmatprep.mubr.bf16.mxu0 0
    %1504 = vmatmul.mubr.bf16.gmra.mrb[0].mxu0 %v1404
    %v1505 = vpop.f32.mrb[0].mxu0
    %v1506 = vadd.f32 0.0, %v1505
    %v1507 = vpop.f32.mrb[0].mxu0
    %v1508 = vpop.f32.mrb[0].mxu0
    %v1509 = vadd.f32 0.0, %v1508
    %v1510 = vpop.f32.mrb[0].mxu0
    %1511 = vmatprep.mubr.bf16.mxu0 0
    %1512 = vmatmul.mubr.bf16.gmra.mrb[0].mxu0 %v1407
    %v1513 = vpop.f32.mrb[0].mxu0
    %v1514 = vadd.f32 0.0, %v1513
    %v1515 = vpop.f32.mrb[0].mxu0
    %v1516 = vpop.f32.mrb[0].mxu0
    %v1517 = vadd.f32 0.0, %v1516
    %v1518 = vpop.f32.mrb[0].mxu0
    %1519 = vmatprep.mubr.bf16.mxu0 0
    %1520 = vmatmul.mubr.bf16.gmra.mrb[0].mxu0 %v1410
    %v1521 = vpop.f32.mrb[0].mxu0
    %v1522 = vadd.f32 0.0, %v1521
    %v1523 = vpop.f32.mrb[0].mxu0
    %v1524 = vpop.f32.mrb[0].mxu0
    %v1525 = vadd.f32 0.0, %v1524
    %v1526 = vpop.f32.mrb[0].mxu0
    %1527 = vmatprep.mubr.bf16.mxu0 0
    %1528 = vmatmul.mubr.bf16.gmra.mrb[0].mxu0 %v1413
    %v1529 = vpop.f32.mrb[0].mxu0
    %v1530 = vadd.f32 0.0, %v1529
    %v1531 = vpop.f32.mrb[0].mxu0
    %v1532 = vpop.f32.mrb[0].mxu0
    %v1533 = vadd.f32 0.0, %v1532
    %v1534 = vpop.f32.mrb[0].mxu0
    %1535 = vmatprep.mubr.bf16.mxu0 0
    %1536 = vmatmul.mubr.bf16.gmra.mrb[0].mxu0 %v1416
    %v1537 = vpop.f32.mrb[0].mxu0
    %v1538 = vadd.f32 0.0, %v1537
    %v1539 = vpop.f32.mrb[0].mxu0
    %v1540 = vpop.f32.mrb[0].mxu0
    %v1541 = vadd.f32 0.0, %v1540
    %v1542 = vpop.f32.mrb[0].mxu0
    %1543 = vmatprep.mubr.bf16.mxu0 0
    %1544 = vmatmul.mubr.bf16.gmra.mrb[0].mxu0 %v1419
    %v1545 = vpop.f32.mrb[0].mxu0
    %v1546 = vadd.f32 0.0, %v1545
    %v1547 = vpop.f32.mrb[0].mxu0
    %v1548 = vpop.f32.mrb[0].mxu0
    %v1549 = vadd.f32 0.0, %v1548
    %v1550 = vpop.f32.mrb[0].mxu0
    %1551 = vmatprep.mubr.bf16.mxu0 0
    %1552 = vmatmul.mubr.bf16.gmra.mrb[0].mxu0 %v1422
    %v1553 = vpop.f32.mrb[0].mxu0
    %v1554 = vadd.f32 0.0, %v1553
    %v1555 = vpop.f32.mrb[0].mxu0
    %v1556 = vpop.f32.mrb[0].mxu0
    %v1557 = vadd.f32 0.0, %v1556
    %v1558 = vpop.f32.mrb[0].mxu0
    %1559 = vmatprep.mubr.bf16.mxu0 0
    %1560 = vmatmul.mubr.bf16.gmra.mrb[0].mxu0 %v1425
    %v1561 = vpop.f32.mrb[0].mxu0
    %v1562 = vadd.f32 0.0, %v1561
    %v1563 = vpop.f32.mrb[0].mxu0
    %v1564 = vpop.f32.mrb[0].mxu0
    %v1565 = vadd.f32 0.0, %v1564
    %v1566 = vpop.f32.mrb[0].mxu0
    %1567 = vmatprep.mubr.bf16.mxu0 0
    %1568 = vmatmul.mubr.bf16.gmra.mrb[0].mxu0 %v1428
    %v1569 = vpop.f32.mrb[0].mxu0
    %v1570 = vadd.f32 0.0, %v1569
    %v1571 = vpop.f32.mrb[0].mxu0
    %v1572 = vpop.f32.mrb[0].mxu0
    %v1573 = vadd.f32 0.0, %v1572
    %v1574 = vpop.f32.mrb[0].mxu0
    %1575 = vmatprep.mubr.bf16.mxu0 0
    %1576 = vmatmul.mubr.bf16.gmra.mrb[0].mxu0 %v1431
    %v1577 = vpop.f32.mrb[0].mxu0
    %v1578 = vadd.f32 0.0, %v1577
    %v1579 = vpop.f32.mrb[0].mxu0
    %v1580 = vpop.f32.mrb[0].mxu0
    %v1581 = vadd.f32 0.0, %v1580
    %v1582 = vpop.f32.mrb[0].mxu0
    %1583 = vmatprep.mubr.bf16.mxu0 0
    %1584 = vmatmul.mubr.bf16.gmra.mrb[0].mxu0 %v1434
    %v1585 = vpop.f32.mrb[0].mxu0
    %v1586 = vadd.f32 0.0, %v1585
    %v1587 = vpop.f32.mrb[0].mxu0
    %v1588 = vpop.f32.mrb[0].mxu0
    %v1589 = vadd.f32 0.0, %v1588
    %v1590 = vpop.f32.mrb[0].mxu0
    %1591 = vmatprep.mubr.bf16.mxu0 0
    %1592 = vmatmul.mubr.bf16.gmra.mrb[0].mxu0 %v1437
    %v1593 = vpop.f32.mrb[0].mxu0
    %v1594 = vadd.f32 0.0, %v1593
    %v1595 = vpop.f32.mrb[0].mxu0
    %v1596 = vpop.f32.mrb[0].mxu0
    %v1597 = vadd.f32 0.0, %v1596
    %v1598 = vpop.f32.mrb[0].mxu0
    %1599 = vdwg.mxu0
    %v1600 = vpack.c.bf16 %v1477, %v1474
    %v1601 = vpack.c.bf16 %v1485, %v1482
    %v1602 = vpack.c.bf16 %v1493, %v1490
    %v1603 = vpack.c.bf16 %v1501, %v1498
    %v1604 = vpack.c.bf16 %v1509, %v1506
    %v1605 = vpack.c.bf16 %v1517, %v1514
    %v1606 = vpack.c.bf16 %v1525, %v1522
    %v1607 = vpack.c.bf16 %v1533, %v1530
    %v1608 = vpack.c.bf16 %v1541, %v1538
    %v1609 = vpack.c.bf16 %v1549, %v1546
    %v1610 = vpack.c.bf16 %v1557, %v1554
    %v1611 = vpack.c.bf16 %v1565, %v1562
    %v1612 = vpack.c.bf16 %v1573, %v1570
    %v1613 = vpack.c.bf16 %v1581, %v1578
    %v1614 = vpack.c.bf16 %v1589, %v1586
    %v1615 = vpack.c.bf16 %v1597, %v1594
    %1616 = vxpose.xlu0.c.b16.start [1/8] %v1275, 128
    %1617 = vxpose.xlu0.c.b16.cont [2/8] %v1276, 128
    %1618 = vxpose.xlu0.c.b16.cont [3/8] %v1277, 128
    %1619 = vxpose.xlu0.c.b16.cont [4/8] %v1278, 128
    %1620 = vxpose.xlu0.c.b16.cont [5/8] 0, 128
    %1621 = vxpose.xlu0.c.b16.cont [6/8] 0, 128
    %1622 = vxpose.xlu0.c.b16.cont [7/8] 0, 128
    %1623 = vxpose.xlu0.c.b16.end [8/8] 0, 128
    %v1624 = vpop.trf.xlu0
    %v1625 = vpop.trf.xlu0
    %v1626 = vpop.trf.xlu0
    %v1627 = vpop.trf.xlu0
    %v1628 = vpop.trf.xlu0
    %v1629 = vpop.trf.xlu0
    %v1630 = vpop.trf.xlu0
    %v1631 = vpop.trf.xlu0
    %v1633 = vsel %vm619, %v1624, 0
    %1635 = vmatprep.subr.bf16.mxu0 %v722
    %1636 = vmatpush1.bf16.msra.mxu0 %v721
    %1637 = vmatprep.subr.bf16.mxu0 %v724
    %1638 = vmatpush1.bf16.msra.mxu0 %v723
    %1639 = vmatprep.subr.bf16.mxu0 %v726
    %1640 = vmatpush1.bf16.msra.mxu0 %v725
    %1641 = vmatprep.subr.bf16.mxu0 %v728
    %1642 = vmatpush1.bf16.msra.mxu0 %v727
    %1643 = vmatprep.subr.bf16.mxu0 0
    %1644 = vmatpush1.bf16.msra.mxu0 0
    %1645 = vmatprep.subr.bf16.mxu0 0
    %1646 = vmatpush1.bf16.msra.mxu0 0
    %1647 = vmatprep.subr.bf16.mxu0 0
    %1648 = vmatpush1.bf16.msra.mxu0 0
    %1649 = vmatprep.subr.bf16.mxu0 0
    %1650 = vmatpush1.bf16.msra.mxu0 0
    %1651 = vmatprep.subr.bf16.mxu0 0
    %1652 = vmatpush1.bf16.msra.mxu0 0
    %1653 = vmatprep.subr.bf16.mxu0 0
    %1654 = vmatpush1.bf16.msra.mxu0 0
    %1655 = vmatprep.subr.bf16.mxu0 0
    %1656 = vmatpush1.bf16.msra.mxu0 0
    %1657 = vmatprep.subr.bf16.mxu0 0
    %1658 = vmatpush1.bf16.msra.mxu0 0
    %1659 = vmatprep.subr.bf16.mxu0 0
    %1660 = vmatpush1.bf16.msra.mxu0 0
    %1661 = vmatprep.subr.bf16.mxu0 0
    %1662 = vmatpush1.bf16.msra.mxu0 0
    %1663 = vmatprep.subr.bf16.mxu0 0
    %1664 = vmatpush1.bf16.msra.mxu0 0
    %1665 = vmatprep.subr.bf16.mxu0 0
    %1666 = vmatpush1.bf16.msra.mxu0 0
    %1667 = vmatprep.mubr.bf16.mxu0 0
    %1668 = vmatmul.mubr.bf16.gmra.mrb[0].mxu0 %v1633
    %v1669 = vpop.f32.mrb[0].mxu0
    %v1670 = vadd.f32 0.0, %v1669
    %v1671 = vpop.f32.mrb[0].mxu0
    %v1672 = vadd.f32 0.0, %v1671
    %v1673 = vpop.f32.mrb[0].mxu0
    %v1674 = vpop.f32.mrb[0].mxu0
    %1675 = vdwg.mxu0
    %v1676 = vrot.slane %v1670, 4
    %v1677 = vmax.f32 %v1670, %v1676
    %v1678 = vrot.slane %v1677, 2
    %v1679 = vmax.f32 %v1677, %v1678
    %v1680 = vrot.slane %v1679, 1
    %v1681 = vmax.f32 %v1679, %v1680
    %v1682 = vrot.slane %v1672, 4
    %v1683 = vmax.f32 %v1672, %v1682
    %v1684 = vrot.slane %v1683, 2
    %v1685 = vmax.f32 %v1683, %v1684
    %v1686 = vrot.slane %v1685, 1
    %v1687 = vmax.f32 %v1685, %v1686
    %v1688 = vsub.f32 %v1670, %v1681
    %v1689 = vsub.f32 %v1672, %v1687
    %v1690 = vmul.f32 %v1688, 1.442695
    %v1691 = vpow.pop %v1690
    %v1692 = vmul.f32 %v1689, 1.442695
    %v1693 = vpow.pop %v1692
    %1695 = vset.pattern.permute.xlu0 0
    %1696 = vperm.xlu0 %1695, %v141
    %v1697 = vpop.permute.xlu0 %1696
    %v1699 = vmul.f32 %v1691, %v1697
    %v1700 = vmul.f32 %v1693, %v1697
    %v1701 = vrot.slane %v1699, 4
    %v1702 = vadd.f32 %v1699, %v1701
    %v1703 = vrot.slane %v1702, 2
    %v1704 = vadd.f32 %v1702, %v1703
    %v1705 = vrot.slane %v1704, 1
    %v1706 = vadd.f32 %v1704, %v1705
    %v1707 = vrot.slane %v1700, 4
    %v1708 = vadd.f32 %v1700, %v1707
    %v1709 = vrot.slane %v1708, 2
    %v1710 = vadd.f32 %v1708, %v1709
    %v1711 = vrot.slane %v1710, 1
    %v1712 = vadd.f32 %v1710, %v1711
    %v1713 = vrcp.pop %v1706
    %v1714 = vrcp.pop %v1712
    %v1715 = vmul.f32 %v1699, %v1713
    %v1716 = vmul.f32 %v1700, %v1714
    %v1717 = vpack.c.bf16 %v1715, %v1715
    %v1718 = vpack.c.bf16 %v1716, %v1716
    %1720 = vset.pattern.permute.xlu0 0
    %1721 = vperm.xlu0 %1720, %v77
    %v1722 = vpop.permute.xlu0 %1721
    %1725 = vset.pattern.permute.xlu0 0
    %1726 = vperm.xlu0 %1725, %v78
    %v1727 = vpop.permute.xlu0 %1726
    %1730 = vset.pattern.permute.xlu0 0
    %1731 = vperm.xlu0 %1730, %v79
    %v1732 = vpop.permute.xlu0 %1731
    %1735 = vset.pattern.permute.xlu0 0
    %1736 = vperm.xlu0 %1735, %v80
    %v1737 = vpop.permute.xlu0 %1736
    %1740 = vset.pattern.permute.xlu0 0
    %1741 = vperm.xlu0 %1740, %v81
    %v1742 = vpop.permute.xlu0 %1741
    %1745 = vset.pattern.permute.xlu0 0
    %1746 = vperm.xlu0 %1745, %v82
    %v1747 = vpop.permute.xlu0 %1746
    %1750 = vset.pattern.permute.xlu0 0
    %1751 = vperm.xlu0 %1750, %v83
    %v1752 = vpop.permute.xlu0 %1751
    %1755 = vset.pattern.permute.xlu0 0
    %1756 = vperm.xlu0 %1755, %v84
    %v1757 = vpop.permute.xlu0 %1756
    %1760 = vset.pattern.permute.xlu0 0
    %1761 = vperm.xlu0 %1760, %v85
    %v1762 = vpop.permute.xlu0 %1761
    %1765 = vset.pattern.permute.xlu0 0
    %1766 = vperm.xlu0 %1765, %v86
    %v1767 = vpop.permute.xlu0 %1766
    %1770 = vset.pattern.permute.xlu0 0
    %1771 = vperm.xlu0 %1770, %v87
    %v1772 = vpop.permute.xlu0 %1771
    %1775 = vset.pattern.permute.xlu0 0
    %1776 = vperm.xlu0 %1775, %v88
    %v1777 = vpop.permute.xlu0 %1776
    %1780 = vset.pattern.permute.xlu0 0
    %1781 = vperm.xlu0 %1780, %v89
    %v1782 = vpop.permute.xlu0 %1781
    %1785 = vset.pattern.permute.xlu0 0
    %1786 = vperm.xlu0 %1785, %v90
    %v1787 = vpop.permute.xlu0 %1786
    %1790 = vset.pattern.permute.xlu0 0
    %1791 = vperm.xlu0 %1790, %v91
    %v1792 = vpop.permute.xlu0 %1791
    %1795 = vset.pattern.permute.xlu0 0
    %1796 = vperm.xlu0 %1795, %v92
    %v1797 = vpop.permute.xlu0 %1796
    %1800 = vset.pattern.permute.xlu0 0
    %1801 = vperm.xlu0 %1800, %v93
    %v1802 = vpop.permute.xlu0 %1801
    %1805 = vset.pattern.permute.xlu0 0
    %1806 = vperm.xlu0 %1805, %v94
    %v1807 = vpop.permute.xlu0 %1806
    %1810 = vset.pattern.permute.xlu0 0
    %1811 = vperm.xlu0 %1810, %v95
    %v1812 = vpop.permute.xlu0 %1811
    %1815 = vset.pattern.permute.xlu0 0
    %1816 = vperm.xlu0 %1815, %v96
    %v1817 = vpop.permute.xlu0 %1816
    %1820 = vset.pattern.permute.xlu0 0
    %1821 = vperm.xlu0 %1820, %v97
    %v1822 = vpop.permute.xlu0 %1821
    %1825 = vset.pattern.permute.xlu0 0
    %1826 = vperm.xlu0 %1825, %v98
    %v1827 = vpop.permute.xlu0 %1826
    %1830 = vset.pattern.permute.xlu0 0
    %1831 = vperm.xlu0 %1830, %v99
    %v1832 = vpop.permute.xlu0 %1831
    %1835 = vset.pattern.permute.xlu0 0
    %1836 = vperm.xlu0 %1835, %v100
    %v1837 = vpop.permute.xlu0 %1836
    %1840 = vset.pattern.permute.xlu0 0
    %1841 = vperm.xlu0 %1840, %v101
    %v1842 = vpop.permute.xlu0 %1841
    %1845 = vset.pattern.permute.xlu0 0
    %1846 = vperm.xlu0 %1845, %v102
    %v1847 = vpop.permute.xlu0 %1846
    %1850 = vset.pattern.permute.xlu0 0
    %1851 = vperm.xlu0 %1850, %v103
    %v1852 = vpop.permute.xlu0 %1851
    %1855 = vset.pattern.permute.xlu0 0
    %1856 = vperm.xlu0 %1855, %v104
    %v1857 = vpop.permute.xlu0 %1856
    %1860 = vset.pattern.permute.xlu0 0
    %1861 = vperm.xlu0 %1860, %v105
    %v1862 = vpop.permute.xlu0 %1861
    %1865 = vset.pattern.permute.xlu0 0
    %1866 = vperm.xlu0 %1865, %v106
    %v1867 = vpop.permute.xlu0 %1866
    %1870 = vset.pattern.permute.xlu0 0
    %1871 = vperm.xlu0 %1870, %v107
    %v1872 = vpop.permute.xlu0 %1871
    %1875 = vset.pattern.permute.xlu0 0
    %1876 = vperm.xlu0 %1875, %v108
    %v1877 = vpop.permute.xlu0 %1876
    %vm1879 = vcmask 64512
    %v1881 = vsel %vm1879, %v1600, 0
    %v1884 = vsel %vm1879, %v1601, 0
    %v1887 = vsel %vm1879, %v1602, 0
    %v1890 = vsel %vm1879, %v1603, 0
    %v1893 = vsel %vm1879, %v1604, 0
    %v1896 = vsel %vm1879, %v1605, 0
    %v1899 = vsel %vm1879, %v1606, 0
    %v1902 = vsel %vm1879, %v1607, 0
    %v1905 = vsel %vm1879, %v1608, 0
    %v1908 = vsel %vm1879, %v1609, 0
    %v1911 = vsel %vm1879, %v1610, 0
    %v1914 = vsel %vm1879, %v1611, 0
    %v1917 = vsel %vm1879, %v1612, 0
    %v1920 = vsel %vm1879, %v1613, 0
    %v1923 = vsel %vm1879, %v1614, 0
    %v1926 = vsel %vm1879, %v1615, 0
    %vm1928 = vcmask 1043456
    %v1930 = vsel %vm1928, %v1717, 0
    %v1933 = vsel %vm1928, %v1718, 0
    %1935 = vmatprep.subr.bf16.mxu0 %v1933
    %1936 = vmatpush1.bf16.msra.mxu0 %v1930
    %1937 = vmatprep.subr.bf16.mxu0 0
    %1938 = vmatpush1.bf16.msra.mxu0 0
    %1939 = vmatprep.subr.bf16.mxu0 0
    %1940 = vmatpush1.bf16.msra.mxu0 0
    %1941 = vmatprep.subr.bf16.mxu0 0
    %1942 = vmatpush1.bf16.msra.mxu0 0
    %1943 = vmatprep.subr.bf16.mxu0 0
    %1944 = vmatpush1.bf16.msra.mxu0 0
    %1945 = vmatprep.subr.bf16.mxu0 0
    %1946 = vmatpush1.bf16.msra.mxu0 0
    %1947 = vmatprep.subr.bf16.mxu0 0
    %1948 = vmatpush1.bf16.msra.mxu0 0
    %1949 = vmatprep.subr.bf16.mxu0 0
    %1950 = vmatpush1.bf16.msra.mxu0 0
    %1951 = vmatprep.subr.bf16.mxu0 0
    %1952 = vmatpush1.bf16.msra.mxu0 0
    %1953 = vmatprep.subr.bf16.mxu0 0
    %1954 = vmatpush1.bf16.msra.mxu0 0
    %1955 = vmatprep.subr.bf16.mxu0 0
    %1956 = vmatpush1.bf16.msra.mxu0 0
    %1957 = vmatprep.subr.bf16.mxu0 0
    %1958 = vmatpush1.bf16.msra.mxu0 0
    %1959 = vmatprep.subr.bf16.mxu0 0
    %1960 = vmatpush1.bf16.msra.mxu0 0
    %1961 = vmatprep.subr.bf16.mxu0 0
    %1962 = vmatpush1.bf16.msra.mxu0 0
    %1963 = vmatprep.subr.bf16.mxu0 0
    %1964 = vmatpush1.bf16.msra.mxu0 0
    %1965 = vmatprep.subr.bf16.mxu0 0
    %1966 = vmatpush1.bf16.msra.mxu0 0
    %1967 = vmatprep.mubr.bf16.mxu0 0
    %1968 = vmatmul.mubr.bf16.gmra.mrb[0].mxu0 %v1881
    %v1969 = vpop.f32.mrb[0].mxu0
    %v1970 = vadd.f32 %v1722, %v1969
    %v1971 = vpop.f32.mrb[0].mxu0
    %v1972 = vadd.f32 %v1722, %v1971
    %v1973 = vpop.f32.mrb[0].mxu0
    %v1974 = vadd.f32 %v1727, %v1973
    %v1975 = vpop.f32.mrb[0].mxu0
    %v1976 = vadd.f32 %v1727, %v1975
    %1977 = vmatprep.mubr.bf16.mxu0 0
    %1978 = vmatmul.mubr.bf16.gmra.mrb[0].mxu0 %v1884
    %v1979 = vpop.f32.mrb[0].mxu0
    %v1980 = vadd.f32 %v1732, %v1979
    %v1981 = vpop.f32.mrb[0].mxu0
    %v1982 = vadd.f32 %v1732, %v1981
    %v1983 = vpop.f32.mrb[0].mxu0
    %v1984 = vadd.f32 %v1737, %v1983
    %v1985 = vpop.f32.mrb[0].mxu0
    %v1986 = vadd.f32 %v1737, %v1985
    %1987 = vmatprep.mubr.bf16.mxu0 0
    %1988 = vmatmul.mubr.bf16.gmra.mrb[0].mxu0 %v1887
    %v1989 = vpop.f32.mrb[0].mxu0
    %v1990 = vadd.f32 %v1742, %v1989
    %v1991 = vpop.f32.mrb[0].mxu0
    %v1992 = vadd.f32 %v1742, %v1991
    %v1993 = vpop.f32.mrb[0].mxu0
    %v1994 = vadd.f32 %v1747, %v1993
    %v1995 = vpop.f32.mrb[0].mxu0
    %v1996 = vadd.f32 %v1747, %v1995
    %1997 = vmatprep.mubr.bf16.mxu0 0
    %1998 = vmatmul.mubr.bf16.gmra.mrb[0].mxu0 %v1890
    %v1999 = vpop.f32.mrb[0].mxu0
    %v2000 = vadd.f32 %v1752, %v1999
    %v2001 = vpop.f32.mrb[0].mxu0
    %v2002 = vadd.f32 %v1752, %v2001
    %v2003 = vpop.f32.mrb[0].mxu0
    %v2004 = vadd.f32 %v1757, %v2003
    %v2005 = vpop.f32.mrb[0].mxu0
    %v2006 = vadd.f32 %v1757, %v2005
    %2007 = vmatprep.mubr.bf16.mxu0 0
    %2008 = vmatmul.mubr.bf16.gmra.mrb[0].mxu0 %v1893
    %v2009 = vpop.f32.mrb[0].mxu0
    %v2010 = vadd.f32 %v1762, %v2009
    %v2011 = vpop.f32.mrb[0].mxu0
    %v2012 = vadd.f32 %v1762, %v2011
    %v2013 = vpop.f32.mrb[0].mxu0
    %v2014 = vadd.f32 %v1767, %v2013
    %v2015 = vpop.f32.mrb[0].mxu0
    %v2016 = vadd.f32 %v1767, %v2015
    %2017 = vmatprep.mubr.bf16.mxu0 0
    %2018 = vmatmul.mubr.bf16.gmra.mrb[0].mxu0 %v1896
    %v2019 = vpop.f32.mrb[0].mxu0
    %v2020 = vadd.f32 %v1772, %v2019
    %v2021 = vpop.f32.mrb[0].mxu0
    %v2022 = vadd.f32 %v1772, %v2021
    %v2023 = vpop.f32.mrb[0].mxu0
    %v2024 = vadd.f32 %v1777, %v2023
    %v2025 = vpop.f32.mrb[0].mxu0
    %v2026 = vadd.f32 %v1777, %v2025
    %2027 = vmatprep.mubr.bf16.mxu0 0
    %2028 = vmatmul.mubr.bf16.gmra.mrb[0].mxu0 %v1899
    %v2029 = vpop.f32.mrb[0].mxu0
    %v2030 = vadd.f32 %v1782, %v2029
    %v2031 = vpop.f32.mrb[0].mxu0
    %v2032 = vadd.f32 %v1782, %v2031
    %v2033 = vpop.f32.mrb[0].mxu0
    %v2034 = vadd.f32 %v1787, %v2033
    %v2035 = vpop.f32.mrb[0].mxu0
    %v2036 = vadd.f32 %v1787, %v2035
    %2037 = vmatprep.mubr.bf16.mxu0 0
    %2038 = vmatmul.mubr.bf16.gmra.mrb[0].mxu0 %v1902
    %v2039 = vpop.f32.mrb[0].mxu0
    %v2040 = vadd.f32 %v1792, %v2039
    %v2041 = vpop.f32.mrb[0].mxu0
    %v2042 = vadd.f32 %v1792, %v2041
    %v2043 = vpop.f32.mrb[0].mxu0
    %v2044 = vadd.f32 %v1797, %v2043
    %v2045 = vpop.f32.mrb[0].mxu0
    %v2046 = vadd.f32 %v1797, %v2045
    %2047 = vmatprep.mubr.bf16.mxu0 0
    %2048 = vmatmul.mubr.bf16.gmra.mrb[0].mxu0 %v1905
    %v2049 = vpop.f32.mrb[0].mxu0
    %v2050 = vadd.f32 %v1802, %v2049
    %v2051 = vpop.f32.mrb[0].mxu0
    %v2052 = vadd.f32 %v1802, %v2051
    %v2053 = vpop.f32.mrb[0].mxu0
    %v2054 = vadd.f32 %v1807, %v2053
    %v2055 = vpop.f32.mrb[0].mxu0
    %v2056 = vadd.f32 %v1807, %v2055
    %2057 = vmatprep.mubr.bf16.mxu0 0
    %2058 = vmatmul.mubr.bf16.gmra.mrb[0].mxu0 %v1908
    %v2059 = vpop.f32.mrb[0].mxu0
    %v2060 = vadd.f32 %v1812, %v2059
    %v2061 = vpop.f32.mrb[0].mxu0
    %v2062 = vadd.f32 %v1812, %v2061
    %v2063 = vpop.f32.mrb[0].mxu0
    %v2064 = vadd.f32 %v1817, %v2063
    %v2065 = vpop.f32.mrb[0].mxu0
    %v2066 = vadd.f32 %v1817, %v2065
    %2067 = vmatprep.mubr.bf16.mxu0 0
    %2068 = vmatmul.mubr.bf16.gmra.mrb[0].mxu0 %v1911
    %v2069 = vpop.f32.mrb[0].mxu0
    %v2070 = vadd.f32 %v1822, %v2069
    %v2071 = vpop.f32.mrb[0].mxu0
    %v2072 = vadd.f32 %v1822, %v2071
    %v2073 = vpop.f32.mrb[0].mxu0
    %v2074 = vadd.f32 %v1827, %v2073
    %v2075 = vpop.f32.mrb[0].mxu0
    %v2076 = vadd.f32 %v1827, %v2075
    %2077 = vmatprep.mubr.bf16.mxu0 0
    %2078 = vmatmul.mubr.bf16.gmra.mrb[0].mxu0 %v1914
    %v2079 = vpop.f32.mrb[0].mxu0
    %v2080 = vadd.f32 %v1832, %v2079
    %v2081 = vpop.f32.mrb[0].mxu0
    %v2082 = vadd.f32 %v1832, %v2081
    %v2083 = vpop.f32.mrb[0].mxu0
    %v2084 = vadd.f32 %v1837, %v2083
    %v2085 = vpop.f32.mrb[0].mxu0
    %v2086 = vadd.f32 %v1837, %v2085
    %2087 = vmatprep.mubr.bf16.mxu0 0
    %2088 = vmatmul.mubr.bf16.gmra.mrb[0].mxu0 %v1917
    %v2089 = vpop.f32.mrb[0].mxu0
    %v2090 = vadd.f32 %v1842, %v2089
    %v2091 = vpop.f32.mrb[0].mxu0
    %v2092 = vadd.f32 %v1842, %v2091
    %v2093 = vpop.f32.mrb[0].mxu0
    %v2094 = vadd.f32 %v1847, %v2093
    %v2095 = vpop.f32.mrb[0].mxu0
    %v2096 = vadd.f32 %v1847, %v2095
    %2097 = vmatprep.mubr.bf16.mxu0 0
    %2098 = vmatmul.mubr.bf16.gmra.mrb[0].mxu0 %v1920
    %v2099 = vpop.f32.mrb[0].mxu0
    %v2100 = vadd.f32 %v1852, %v2099
    %v2101 = vpop.f32.mrb[0].mxu0
    %v2102 = vadd.f32 %v1852, %v2101
    %v2103 = vpop.f32.mrb[0].mxu0
    %v2104 = vadd.f32 %v1857, %v2103
    %v2105 = vpop.f32.mrb[0].mxu0
    %v2106 = vadd.f32 %v1857, %v2105
    %2107 = vmatprep.mubr.bf16.mxu0 0
    %2108 = vmatmul.mubr.bf16.gmra.mrb[0].mxu0 %v1923
    %v2109 = vpop.f32.mrb[0].mxu0
    %v2110 = vadd.f32 %v1862, %v2109
    %v2111 = vpop.f32.mrb[0].mxu0
    %v2112 = vadd.f32 %v1862, %v2111
    %v2113 = vpop.f32.mrb[0].mxu0
    %v2114 = vadd.f32 %v1867, %v2113
    %v2115 = vpop.f32.mrb[0].mxu0
    %v2116 = vadd.f32 %v1867, %v2115
    %2117 = vmatprep.mubr.bf16.mxu0 0
    %2118 = vmatmul.mubr.bf16.gmra.mrb[0].mxu0 %v1926
    %v2119 = vpop.f32.mrb[0].mxu0
    %v2120 = vadd.f32 %v1872, %v2119
    %v2121 = vpop.f32.mrb[0].mxu0
    %v2122 = vadd.f32 %v1872, %v2121
    %v2123 = vpop.f32.mrb[0].mxu0
    %v2124 = vadd.f32 %v1877, %v2123
    %v2125 = vpop.f32.mrb[0].mxu0
    %v2126 = vadd.f32 %v1877, %v2125
    %2127 = vdwg.mxu0
    %v2128 = vmax.f32 %v1970, 0.0
    %v2129 = vmax.f32 %v1972, 0.0
    %v2130 = vmax.f32 %v1974, 0.0
    %v2131 = vmax.f32 %v1976, 0.0
    %v2132 = vmax.f32 %v1980, 0.0
    %v2133 = vmax.f32 %v1982, 0.0
    %v2134 = vmax.f32 %v1984, 0.0
    %v2135 = vmax.f32 %v1986, 0.0
    %v2136 = vmax.f32 %v1990, 0.0
    %v2137 = vmax.f32 %v1992, 0.0
    %v2138 = vmax.f32 %v1994, 0.0
    %v2139 = vmax.f32 %v1996, 0.0
    %v2140 = vmax.f32 %v2000, 0.0
    %v2141 = vmax.f32 %v2002, 0.0
    %v2142 = vmax.f32 %v2004, 0.0
    %v2143 = vmax.f32 %v2006, 0.0
    %v2144 = vmax.f32 %v2010, 0.0
    %v2145 = vmax.f32 %v2012, 0.0
    %v2146 = vmax.f32 %v2014, 0.0
    %v2147 = vmax.f32 %v2016, 0.0
    %v2148 = vmax.f32 %v2020, 0.0
    %v2149 = vmax.f32 %v2022, 0.0
    %v2150 = vmax.f32 %v2024, 0.0
    %v2151 = vmax.f32 %v2026, 0.0
    %v2152 = vmax.f32 %v2030, 0.0
    %v2153 = vmax.f32 %v2032, 0.0
    %v2154 = vmax.f32 %v2034, 0.0
    %v2155 = vmax.f32 %v2036, 0.0
    %v2156 = vmax.f32 %v2040, 0.0
    %v2157 = vmax.f32 %v2042, 0.0
    %v2158 = vmax.f32 %v2044, 0.0
    %v2159 = vmax.f32 %v2046, 0.0
    %v2160 = vmax.f32 %v2050, 0.0
    %v2161 = vmax.f32 %v2052, 0.0
    %v2162 = vmax.f32 %v2054, 0.0
    %v2163 = vmax.f32 %v2056, 0.0
    %v2164 = vmax.f32 %v2060, 0.0
    %v2165 = vmax.f32 %v2062, 0.0
    %v2166 = vmax.f32 %v2064, 0.0
    %v2167 = vmax.f32 %v2066, 0.0
    %v2168 = vmax.f32 %v2070, 0.0
    %v2169 = vmax.f32 %v2072, 0.0
    %v2170 = vmax.f32 %v2074, 0.0
    %v2171 = vmax.f32 %v2076, 0.0
    %v2172 = vmax.f32 %v2080, 0.0
    %v2173 = vmax.f32 %v2082, 0.0
    %v2174 = vmax.f32 %v2084, 0.0
    %v2175 = vmax.f32 %v2086, 0.0
    %v2176 = vmax.f32 %v2090, 0.0
    %v2177 = vmax.f32 %v2092, 0.0
    %v2178 = vmax.f32 %v2094, 0.0
    %v2179 = vmax.f32 %v2096, 0.0
    %v2180 = vmax.f32 %v2100, 0.0
    %v2181 = vmax.f32 %v2102, 0.0
    %v2182 = vmax.f32 %v2104, 0.0
    %v2183 = vmax.f32 %v2106, 0.0
    %v2184 = vmax.f32 %v2110, 0.0
    %v2185 = vmax.f32 %v2112, 0.0
    %v2186 = vmax.f32 %v2114, 0.0
    %v2187 = vmax.f32 %v2116, 0.0
    %v2188 = vmax.f32 %v2120, 0.0
    %v2189 = vmax.f32 %v2122, 0.0
    %v2190 = vmax.f32 %v2124, 0.0
    %v2191 = vmax.f32 %v2126, 0.0
    %v2192 = vpack.c.bf16 %v2130, %v2128
    %v2193 = vpack.c.bf16 %v2131, %v2129
    %v2194 = vpack.c.bf16 %v2134, %v2132
    %v2195 = vpack.c.bf16 %v2135, %v2133
    %v2196 = vpack.c.bf16 %v2138, %v2136
    %v2197 = vpack.c.bf16 %v2139, %v2137
    %v2198 = vpack.c.bf16 %v2142, %v2140
    %v2199 = vpack.c.bf16 %v2143, %v2141
    %v2200 = vpack.c.bf16 %v2146, %v2144
    %v2201 = vpack.c.bf16 %v2147, %v2145
    %v2202 = vpack.c.bf16 %v2150, %v2148
    %v2203 = vpack.c.bf16 %v2151, %v2149
    %v2204 = vpack.c.bf16 %v2154, %v2152
    %v2205 = vpack.c.bf16 %v2155, %v2153
    %v2206 = vpack.c.bf16 %v2158, %v2156
    %v2207 = vpack.c.bf16 %v2159, %v2157
    %v2208 = vpack.c.bf16 %v2162, %v2160
    %v2209 = vpack.c.bf16 %v2163, %v2161
    %v2210 = vpack.c.bf16 %v2166, %v2164
    %v2211 = vpack.c.bf16 %v2167, %v2165
    %v2212 = vpack.c.bf16 %v2170, %v2168
    %v2213 = vpack.c.bf16 %v2171, %v2169
    %v2214 = vpack.c.bf16 %v2174, %v2172
    %v2215 = vpack.c.bf16 %v2175, %v2173
    %v2216 = vpack.c.bf16 %v2178, %v2176
    %v2217 = vpack.c.bf16 %v2179, %v2177
    %v2218 = vpack.c.bf16 %v2182, %v2180
    %v2219 = vpack.c.bf16 %v2183, %v2181
    %v2220 = vpack.c.bf16 %v2186, %v2184
    %v2221 = vpack.c.bf16 %v2187, %v2185
    %v2222 = vpack.c.bf16 %v2190, %v2188
    %v2223 = vpack.c.bf16 %v2191, %v2189
    %v2224 = vld [vmem:[%s7] sm:$0xff]
    %v2225 = vld [vmem:[%s7 + $0x8] sm:$0xff]
    %v2226 = vld [vmem:[%s7 + $0x10] sm:$0xff]
    %v2227 = vld [vmem:[%s7 + $0x18] sm:$0xff]
    %v2228 = vld [vmem:[%s7 + $0x20] sm:$0xff]
    %v2229 = vld [vmem:[%s7 + $0x28] sm:$0xff]
    %v2230 = vld [vmem:[%s7 + $0x30] sm:$0xff]
    %v2231 = vld [vmem:[%s7 + $0x38] sm:$0xff]
    %v2232 = vld [vmem:[%s7 + $0x40] sm:$0xff]
    %v2233 = vld [vmem:[%s7 + $0x48] sm:$0xff]
    %v2234 = vld [vmem:[%s7 + $0x50] sm:$0xff]
    %v2235 = vld [vmem:[%s7 + $0x58] sm:$0xff]
    %v2236 = vld [vmem:[%s7 + $0x60] sm:$0xff]
    %v2237 = vld [vmem:[%s7 + $0x68] sm:$0xff]
    %v2238 = vld [vmem:[%s7 + $0x70] sm:$0xff]
    %v2239 = vld [vmem:[%s7 + $0x78] sm:$0xff]
    %v2240 = vld [vmem:[%s7 + $0x80] sm:$0xff]
    %v2241 = vld [vmem:[%s7 + $0x88] sm:$0xff]
    %v2242 = vld [vmem:[%s7 + $0x90] sm:$0xff]
    %v2243 = vld [vmem:[%s7 + $0x98] sm:$0xff]
    %v2244 = vld [vmem:[%s7 + $0xa0] sm:$0xff]
    %v2245 = vld [vmem:[%s7 + $0xa8] sm:$0xff]
    %v2246 = vld [vmem:[%s7 + $0xb0] sm:$0xff]
    %v2247 = vld [vmem:[%s7 + $0xb8] sm:$0xff]
    %v2248 = vld [vmem:[%s7 + $0xc0] sm:$0xff]
    %v2249 = vld [vmem:[%s7 + $0xc8] sm:$0xff]
    %v2250 = vld [vmem:[%s7 + $0xd0] sm:$0xff]
    %v2251 = vld [vmem:[%s7 + $0xd8] sm:$0xff]
    %v2252 = vld [vmem:[%s7 + $0xe0] sm:$0xff]
    %v2253 = vld [vmem:[%s7 + $0xe8] sm:$0xff]
    %v2254 = vld [vmem:[%s7 + $0xf0] sm:$0xff]
    %v2255 = vld [vmem:[%s7 + $0xf8] sm:$0xff]
    %v2256 = vld [vmem:[%s8] sm:$0xff]
    %v2257 = vld [vmem:[%s8 + $0x8] sm:$0xff]
    %v2258 = vld [vmem:[%s8 + $0x10] sm:$0xff]
    %v2259 = vld [vmem:[%s8 + $0x18] sm:$0xff]
    %v2260 = vld [vmem:[%s8 + $0x20] sm:$0xff]
    %v2261 = vld [vmem:[%s8 + $0x28] sm:$0xff]
    %v2262 = vld [vmem:[%s8 + $0x30] sm:$0xff]
    %v2263 = vld [vmem:[%s8 + $0x38] sm:$0xff]
    %v2264 = vld [vmem:[%s8 + $0x40] sm:$0xff]
    %v2265 = vld [vmem:[%s8 + $0x48] sm:$0xff]
    %v2266 = vld [vmem:[%s8 + $0x50] sm:$0xff]
    %v2267 = vld [vmem:[%s8 + $0x58] sm:$0xff]
    %v2268 = vld [vmem:[%s8 + $0x60] sm:$0xff]
    %v2269 = vld [vmem:[%s8 + $0x68] sm:$0xff]
    %v2270 = vld [vmem:[%s8 + $0x70] sm:$0xff]
    %v2271 = vld [vmem:[%s8 + $0x78] sm:$0xff]
    %v2272 = vld [vmem:[%s8 + $0x80] sm:$0xff]
    %v2273 = vld [vmem:[%s8 + $0x88] sm:$0xff]
    %v2274 = vld [vmem:[%s8 + $0x90] sm:$0xff]
    %v2275 = vld [vmem:[%s8 + $0x98] sm:$0xff]
    %v2276 = vld [vmem:[%s8 + $0xa0] sm:$0xff]
    %v2277 = vld [vmem:[%s8 + $0xa8] sm:$0xff]
    %v2278 = vld [vmem:[%s8 + $0xb0] sm:$0xff]
    %v2279 = vld [vmem:[%s8 + $0xb8] sm:$0xff]
    %v2280 = vld [vmem:[%s8 + $0xc0] sm:$0xff]
    %v2281 = vld [vmem:[%s8 + $0xc8] sm:$0xff]
    %v2282 = vld [vmem:[%s8 + $0xd0] sm:$0xff]
    %v2283 = vld [vmem:[%s8 + $0xd8] sm:$0xff]
    %v2284 = vld [vmem:[%s8 + $0xe0] sm:$0xff]
    %v2285 = vld [vmem:[%s8 + $0xe8] sm:$0xff]
    %v2286 = vld [vmem:[%s8 + $0xf0] sm:$0xff]
    %v2287 = vld [vmem:[%s8 + $0xf8] sm:$0xff]
    %v2320 = vunpack.c.l.b16 %v2256
    %v2321 = vunpack.c.h.b16 %v2256
    %v2322 = vunpack.c.l.b16 %v2257
    %v2323 = vunpack.c.h.b16 %v2257
    %v2324 = vunpack.c.l.b16 %v2258
    %v2325 = vunpack.c.h.b16 %v2258
    %v2326 = vunpack.c.l.b16 %v2259
    %v2327 = vunpack.c.h.b16 %v2259
    %v2328 = vunpack.c.l.b16 %v2260
    %v2329 = vunpack.c.h.b16 %v2260
    %v2330 = vunpack.c.l.b16 %v2261
    %v2331 = vunpack.c.h.b16 %v2261
    %v2332 = vunpack.c.l.b16 %v2262
    %v2333 = vunpack.c.h.b16 %v2262
    %v2334 = vunpack.c.l.b16 %v2263
    %v2335 = vunpack.c.h.b16 %v2263
    %v2336 = vunpack.c.l.b16 %v2264
    %v2337 = vunpack.c.h.b16 %v2264
    %v2338 = vunpack.c.l.b16 %v2265
    %v2339 = vunpack.c.h.b16 %v2265
    %v2340 = vunpack.c.l.b16 %v2266
    %v2341 = vunpack.c.h.b16 %v2266
    %v2342 = vunpack.c.l.b16 %v2267
    %v2343 = vunpack.c.h.b16 %v2267
    %v2344 = vunpack.c.l.b16 %v2268
    %v2345 = vunpack.c.h.b16 %v2268
    %v2346 = vunpack.c.l.b16 %v2269
    %v2347 = vunpack.c.h.b16 %v2269
    %v2348 = vunpack.c.l.b16 %v2270
    %v2349 = vunpack.c.h.b16 %v2270
    %v2350 = vunpack.c.l.b16 %v2271
    %v2351 = vunpack.c.h.b16 %v2271
    %v2352 = vunpack.c.l.b16 %v2272
    %v2353 = vunpack.c.h.b16 %v2272
    %v2354 = vunpack.c.l.b16 %v2273
    %v2355 = vunpack.c.h.b16 %v2273
    %v2356 = vunpack.c.l.b16 %v2274
    %v2357 = vunpack.c.h.b16 %v2274
    %v2358 = vunpack.c.l.b16 %v2275
    %v2359 = vunpack.c.h.b16 %v2275
    %v2360 = vunpack.c.l.b16 %v2276
    %v2361 = vunpack.c.h.b16 %v2276
    %v2362 = vunpack.c.l.b16 %v2277
    %v2363 = vunpack.c.h.b16 %v2277
    %v2364 = vunpack.c.l.b16 %v2278
    %v2365 = vunpack.c.h.b16 %v2278
    %v2366 = vunpack.c.l.b16 %v2279
    %v2367 = vunpack.c.h.b16 %v2279
    %v2368 = vunpack.c.l.b16 %v2280
    %v2369 = vunpack.c.h.b16 %v2280
    %v2370 = vunpack.c.l.b16 %v2281
    %v2371 = vunpack.c.h.b16 %v2281
    %v2372 = vunpack.c.l.b16 %v2282
    %v2373 = vunpack.c.h.b16 %v2282
    %v2374 = vunpack.c.l.b16 %v2283
    %v2375 = vunpack.c.h.b16 %v2283
    %v2376 = vunpack.c.l.b16 %v2284
    %v2377 = vunpack.c.h.b16 %v2284
    %v2378 = vunpack.c.l.b16 %v2285
    %v2379 = vunpack.c.h.b16 %v2285
    %v2380 = vunpack.c.l.b16 %v2286
    %v2381 = vunpack.c.h.b16 %v2286
    %v2382 = vunpack.c.l.b16 %v2287
    %v2383 = vunpack.c.h.b16 %v2287
    %v2384 = vpack.c.b16 %v2322, %v2320
    %v2385 = vpack.c.b16 %v2323, %v2321
    %v2386 = vpack.c.b16 %v2326, %v2324
    %v2387 = vpack.c.b16 %v2327, %v2325
    %v2388 = vpack.c.b16 %v2330, %v2328
    %v2389 = vpack.c.b16 %v2331, %v2329
    %v2390 = vpack.c.b16 %v2334, %v2332
    %v2391 = vpack.c.b16 %v2335, %v2333
    %v2392 = vpack.c.b16 %v2338, %v2336
    %v2393 = vpack.c.b16 %v2339, %v2337
    %v2394 = vpack.c.b16 %v2342, %v2340
    %v2395 = vpack.c.b16 %v2343, %v2341
    %v2396 = vpack.c.b16 %v2346, %v2344
    %v2397 = vpack.c.b16 %v2347, %v2345
    %v2398 = vpack.c.b16 %v2350, %v2348
    %v2399 = vpack.c.b16 %v2351, %v2349
    %v2400 = vpack.c.b16 %v2354, %v2352
    %v2401 = vpack.c.b16 %v2355, %v2353
    %v2402 = vpack.c.b16 %v2358, %v2356
    %v2403 = vpack.c.b16 %v2359, %v2357
    %v2404 = vpack.c.b16 %v2362, %v2360
    %v2405 = vpack.c.b16 %v2363, %v2361
    %v2406 = vpack.c.b16 %v2366, %v2364
    %v2407 = vpack.c.b16 %v2367, %v2365
    %v2408 = vpack.c.b16 %v2370, %v2368
    %v2409 = vpack.c.b16 %v2371, %v2369
    %v2410 = vpack.c.b16 %v2374, %v2372
    %v2411 = vpack.c.b16 %v2375, %v2373
    %v2412 = vpack.c.b16 %v2378, %v2376
    %v2413 = vpack.c.b16 %v2379, %v2377
    %v2414 = vpack.c.b16 %v2382, %v2380
    %v2415 = vpack.c.b16 %v2383, %v2381
    %2448 = vmatprep.subr.bf16.mxu0 %v391
    %2449 = vmatpush1.bf16.msra.mxu0 %v390
    %2450 = vmatprep.subr.bf16.mxu0 %v393
    %2451 = vmatpush1.bf16.msra.mxu0 %v392
    %2452 = vmatprep.subr.bf16.mxu0 %v395
    %2453 = vmatpush1.bf16.msra.mxu0 %v394
    %2454 = vmatprep.subr.bf16.mxu0 %v397
    %2455 = vmatpush1.bf16.msra.mxu0 %v396
    %2456 = vmatprep.subr.bf16.mxu0 %v399
    %2457 = vmatpush1.bf16.msra.mxu0 %v398
    %2458 = vmatprep.subr.bf16.mxu0 %v401
    %2459 = vmatpush1.bf16.msra.mxu0 %v400
    %2460 = vmatprep.subr.bf16.mxu0 %v403
    %2461 = vmatpush1.bf16.msra.mxu0 %v402
    %2462 = vmatprep.subr.bf16.mxu0 %v405
    %2463 = vmatpush1.bf16.msra.mxu0 %v404
    %2464 = vmatprep.subr.bf16.mxu0 %v407
    %2465 = vmatpush1.bf16.msra.mxu0 %v406
    %2466 = vmatprep.subr.bf16.mxu0 %v409
    %2467 = vmatpush1.bf16.msra.mxu0 %v408
    %2468 = vmatprep.subr.bf16.mxu0 %v411
    %2469 = vmatpush1.bf16.msra.mxu0 %v410
    %2470 = vmatprep.subr.bf16.mxu0 %v413
    %2471 = vmatpush1.bf16.msra.mxu0 %v412
    %2472 = vmatprep.subr.bf16.mxu0 %v415
    %2473 = vmatpush1.bf16.msra.mxu0 %v414
    %2474 = vmatprep.subr.bf16.mxu0 %v417
    %2475 = vmatpush1.bf16.msra.mxu0 %v416
    %2476 = vmatprep.subr.bf16.mxu0 %v419
    %2477 = vmatpush1.bf16.msra.mxu0 %v418
    %2478 = vmatprep.subr.bf16.mxu0 %v421
    %2479 = vmatpush1.bf16.msra.mxu0 %v420
    %2480 = vmatprep.mubr.bf16.mxu0 %v2385
    %2481 = vmatmul.mubr.bf16.gmra.mrb[0].mxu0 %v2384
    %v2482 = vpop.f32.mrb[0].mxu0
    %v2483 = vadd.f32 0.0, %v2482
    %v2484 = vpop.f32.mrb[0].mxu0
    %v2485 = vadd.f32 0.0, %v2484
    %v2486 = vpop.f32.mrb[0].mxu0
    %v2487 = vadd.f32 0.0, %v2486
    %v2488 = vpop.f32.mrb[0].mxu0
    %v2489 = vadd.f32 0.0, %v2488
    %2490 = vmatprep.mubr.bf16.mxu0 %v2387
    %2491 = vmatmul.mubr.bf16.gmra.mrb[0].mxu0 %v2386
    %v2492 = vpop.f32.mrb[0].mxu0
    %v2493 = vadd.f32 0.0, %v2492
    %v2494 = vpop.f32.mrb[0].mxu0
    %v2495 = vadd.f32 0.0, %v2494
    %v2496 = vpop.f32.mrb[0].mxu0
    %v2497 = vadd.f32 0.0, %v2496
    %v2498 = vpop.f32.mrb[0].mxu0
    %v2499 = vadd.f32 0.0, %v2498
    %2500 = vmatprep.mubr.bf16.mxu0 %v2389
    %2501 = vmatmul.mubr.bf16.gmra.mrb[0].mxu0 %v2388
    %v2502 = vpop.f32.mrb[0].mxu0
    %v2503 = vadd.f32 0.0, %v2502
    %v2504 = vpop.f32.mrb[0].mxu0
    %v2505 = vadd.f32 0.0, %v2504
    %v2506 = vpop.f32.mrb[0].mxu0
    %v2507 = vadd.f32 0.0, %v2506
    %v2508 = vpop.f32.mrb[0].mxu0
    %v2509 = vadd.f32 0.0, %v2508
    %2510 = vmatprep.mubr.bf16.mxu0 %v2391
    %2511 = vmatmul.mubr.bf16.gmra.mrb[0].mxu0 %v2390
    %v2512 = vpop.f32.mrb[0].mxu0
    %v2513 = vadd.f32 0.0, %v2512
    %v2514 = vpop.f32.mrb[0].mxu0
    %v2515 = vadd.f32 0.0, %v2514
    %v2516 = vpop.f32.mrb[0].mxu0
    %v2517 = vadd.f32 0.0, %v2516
    %v2518 = vpop.f32.mrb[0].mxu0
    %v2519 = vadd.f32 0.0, %v2518
    %2520 = vmatprep.mubr.bf16.mxu0 %v2393
    %2521 = vmatmul.mubr.bf16.gmra.mrb[0].mxu0 %v2392
    %v2522 = vpop.f32.mrb[0].mxu0
    %v2523 = vadd.f32 0.0, %v2522
    %v2524 = vpop.f32.mrb[0].mxu0
    %v2525 = vadd.f32 0.0, %v2524
    %v2526 = vpop.f32.mrb[0].mxu0
    %v2527 = vadd.f32 0.0, %v2526
    %v2528 = vpop.f32.mrb[0].mxu0
    %v2529 = vadd.f32 0.0, %v2528
    %2530 = vmatprep.mubr.bf16.mxu0 %v2395
    %2531 = vmatmul.mubr.bf16.gmra.mrb[0].mxu0 %v2394
    %v2532 = vpop.f32.mrb[0].mxu0
    %v2533 = vadd.f32 0.0, %v2532
    %v2534 = vpop.f32.mrb[0].mxu0
    %v2535 = vadd.f32 0.0, %v2534
    %v2536 = vpop.f32.mrb[0].mxu0
    %v2537 = vadd.f32 0.0, %v2536
    %v2538 = vpop.f32.mrb[0].mxu0
    %v2539 = vadd.f32 0.0, %v2538
    %2540 = vmatprep.mubr.bf16.mxu0 %v2397
    %2541 = vmatmul.mubr.bf16.gmra.mrb[0].mxu0 %v2396
    %v2542 = vpop.f32.mrb[0].mxu0
    %v2543 = vadd.f32 0.0, %v2542
    %v2544 = vpop.f32.mrb[0].mxu0
    %v2545 = vadd.f32 0.0, %v2544
    %v2546 = vpop.f32.mrb[0].mxu0
    %v2547 = vadd.f32 0.0, %v2546
    %v2548 = vpop.f32.mrb[0].mxu0
    %v2549 = vadd.f32 0.0, %v2548
    %2550 = vmatprep.mubr.bf16.mxu0 %v2399
    %2551 = vmatmul.mubr.bf16.gmra.mrb[0].mxu0 %v2398
    %v2552 = vpop.f32.mrb[0].mxu0
    %v2553 = vadd.f32 0.0, %v2552
    %v2554 = vpop.f32.mrb[0].mxu0
    %v2555 = vadd.f32 0.0, %v2554
    %v2556 = vpop.f32.mrb[0].mxu0
    %v2557 = vadd.f32 0.0, %v2556
    %v2558 = vpop.f32.mrb[0].mxu0
    %v2559 = vadd.f32 0.0, %v2558
    %2560 = vmatprep.mubr.bf16.mxu0 %v2401
    %2561 = vmatmul.mubr.bf16.gmra.mrb[0].mxu0 %v2400
    %v2562 = vpop.f32.mrb[0].mxu0
    %v2563 = vadd.f32 0.0, %v2562
    %v2564 = vpop.f32.mrb[0].mxu0
    %v2565 = vadd.f32 0.0, %v2564
    %v2566 = vpop.f32.mrb[0].mxu0
    %v2567 = vadd.f32 0.0, %v2566
    %v2568 = vpop.f32.mrb[0].mxu0
    %v2569 = vadd.f32 0.0, %v2568
    %2570 = vmatprep.mubr.bf16.mxu0 %v2403
    %2571 = vmatmul.mubr.bf16.gmra.mrb[0].mxu0 %v2402
    %v2572 = vpop.f32.mrb[0].mxu0
    %v2573 = vadd.f32 0.0, %v2572
    %v2574 = vpop.f32.mrb[0].mxu0
    %v2575 = vadd.f32 0.0, %v2574
    %v2576 = vpop.f32.mrb[0].mxu0
    %v2577 = vadd.f32 0.0, %v2576
    %v2578 = vpop.f32.mrb[0].mxu0
    %v2579 = vadd.f32 0.0, %v2578
    %2580 = vmatprep.mubr.bf16.mxu0 %v2405
    %2581 = vmatmul.mubr.bf16.gmra.mrb[0].mxu0 %v2404
    %v2582 = vpop.f32.mrb[0].mxu0
    %v2583 = vadd.f32 0.0, %v2582
    %v2584 = vpop.f32.mrb[0].mxu0
    %v2585 = vadd.f32 0.0, %v2584
    %v2586 = vpop.f32.mrb[0].mxu0
    %v2587 = vadd.f32 0.0, %v2586
    %v2588 = vpop.f32.mrb[0].mxu0
    %v2589 = vadd.f32 0.0, %v2588
    %2590 = vmatprep.mubr.bf16.mxu0 %v2407
    %2591 = vmatmul.mubr.bf16.gmra.mrb[0].mxu0 %v2406
    %v2592 = vpop.f32.mrb[0].mxu0
    %v2593 = vadd.f32 0.0, %v2592
    %v2594 = vpop.f32.mrb[0].mxu0
    %v2595 = vadd.f32 0.0, %v2594
    %v2596 = vpop.f32.mrb[0].mxu0
    %v2597 = vadd.f32 0.0, %v2596
    %v2598 = vpop.f32.mrb[0].mxu0
    %v2599 = vadd.f32 0.0, %v2598
    %2600 = vmatprep.mubr.bf16.mxu0 %v2409
    %2601 = vmatmul.mubr.bf16.gmra.mrb[0].mxu0 %v2408
    %v2602 = vpop.f32.mrb[0].mxu0
    %v2603 = vadd.f32 0.0, %v2602
    %v2604 = vpop.f32.mrb[0].mxu0
    %v2605 = vadd.f32 0.0, %v2604
    %v2606 = vpop.f32.mrb[0].mxu0
    %v2607 = vadd.f32 0.0, %v2606
    %v2608 = vpop.f32.mrb[0].mxu0
    %v2609 = vadd.f32 0.0, %v2608
    %2610 = vmatprep.mubr.bf16.mxu0 %v2411
    %2611 = vmatmul.mubr.bf16.gmra.mrb[0].mxu0 %v2410
    %v2612 = vpop.f32.mrb[0].mxu0
    %v2613 = vadd.f32 0.0, %v2612
    %v2614 = vpop.f32.mrb[0].mxu0
    %v2615 = vadd.f32 0.0, %v2614
    %v2616 = vpop.f32.mrb[0].mxu0
    %v2617 = vadd.f32 0.0, %v2616
    %v2618 = vpop.f32.mrb[0].mxu0
    %v2619 = vadd.f32 0.0, %v2618
    %2620 = vmatprep.mubr.bf16.mxu0 %v2413
    %2621 = vmatmul.mubr.bf16.gmra.mrb[0].mxu0 %v2412
    %v2622 = vpop.f32.mrb[0].mxu0
    %v2623 = vadd.f32 0.0, %v2622
    %v2624 = vpop.f32.mrb[0].mxu0
    %v2625 = vadd.f32 0.0, %v2624
    %v2626 = vpop.f32.mrb[0].mxu0
    %v2627 = vadd.f32 0.0, %v2626
    %v2628 = vpop.f32.mrb[0].mxu0
    %v2629 = vadd.f32 0.0, %v2628
    %2630 = vmatprep.mubr.bf16.mxu0 %v2415
    %2631 = vmatmul.mubr.bf16.gmra.mrb[0].mxu0 %v2414
    %v2632 = vpop.f32.mrb[0].mxu0
    %v2633 = vadd.f32 0.0, %v2632
    %v2634 = vpop.f32.mrb[0].mxu0
    %v2635 = vadd.f32 0.0, %v2634
    %v2636 = vpop.f32.mrb[0].mxu0
    %v2637 = vadd.f32 0.0, %v2636
    %v2638 = vpop.f32.mrb[0].mxu0
    %v2639 = vadd.f32 0.0, %v2638
    %2640 = vdwg.mxu0
    %v2673 = vunpack.c.l.b16 %v2224
    %v2674 = vunpack.c.h.b16 %v2224
    %v2675 = vunpack.c.l.b16 %v2225
    %v2676 = vunpack.c.h.b16 %v2225
    %v2677 = vunpack.c.l.b16 %v2226
    %v2678 = vunpack.c.h.b16 %v2226
    %v2679 = vunpack.c.l.b16 %v2227
    %v2680 = vunpack.c.h.b16 %v2227
    %v2681 = vunpack.c.l.b16 %v2228
    %v2682 = vunpack.c.h.b16 %v2228
    %v2683 = vunpack.c.l.b16 %v2229
    %v2684 = vunpack.c.h.b16 %v2229
    %v2685 = vunpack.c.l.b16 %v2230
    %v2686 = vunpack.c.h.b16 %v2230
    %v2687 = vunpack.c.l.b16 %v2231
    %v2688 = vunpack.c.h.b16 %v2231
    %v2689 = vunpack.c.l.b16 %v2232
    %v2690 = vunpack.c.h.b16 %v2232
    %v2691 = vunpack.c.l.b16 %v2233
    %v2692 = vunpack.c.h.b16 %v2233
    %v2693 = vunpack.c.l.b16 %v2234
    %v2694 = vunpack.c.h.b16 %v2234
    %v2695 = vunpack.c.l.b16 %v2235
    %v2696 = vunpack.c.h.b16 %v2235
    %v2697 = vunpack.c.l.b16 %v2236
    %v2698 = vunpack.c.h.b16 %v2236
    %v2699 = vunpack.c.l.b16 %v2237
    %v2700 = vunpack.c.h.b16 %v2237
    %v2701 = vunpack.c.l.b16 %v2238
    %v2702 = vunpack.c.h.b16 %v2238
    %v2703 = vunpack.c.l.b16 %v2239
    %v2704 = vunpack.c.h.b16 %v2239
    %v2705 = vunpack.c.l.b16 %v2240
    %v2706 = vunpack.c.h.b16 %v2240
    %v2707 = vunpack.c.l.b16 %v2241
    %v2708 = vunpack.c.h.b16 %v2241
    %v2709 = vunpack.c.l.b16 %v2242
    %v2710 = vunpack.c.h.b16 %v2242
    %v2711 = vunpack.c.l.b16 %v2243
    %v2712 = vunpack.c.h.b16 %v2243
    %v2713 = vunpack.c.l.b16 %v2244
    %v2714 = vunpack.c.h.b16 %v2244
    %v2715 = vunpack.c.l.b16 %v2245
    %v2716 = vunpack.c.h.b16 %v2245
    %v2717 = vunpack.c.l.b16 %v2246
    %v2718 = vunpack.c.h.b16 %v2246
    %v2719 = vunpack.c.l.b16 %v2247
    %v2720 = vunpack.c.h.b16 %v2247
    %v2721 = vunpack.c.l.b16 %v2248
    %v2722 = vunpack.c.h.b16 %v2248
    %v2723 = vunpack.c.l.b16 %v2249
    %v2724 = vunpack.c.h.b16 %v2249
    %v2725 = vunpack.c.l.b16 %v2250
    %v2726 = vunpack.c.h.b16 %v2250
    %v2727 = vunpack.c.l.b16 %v2251
    %v2728 = vunpack.c.h.b16 %v2251
    %v2729 = vunpack.c.l.b16 %v2252
    %v2730 = vunpack.c.h.b16 %v2252
    %v2731 = vunpack.c.l.b16 %v2253
    %v2732 = vunpack.c.h.b16 %v2253
    %v2733 = vunpack.c.l.b16 %v2254
    %v2734 = vunpack.c.h.b16 %v2254
    %v2735 = vunpack.c.l.b16 %v2255
    %v2736 = vunpack.c.h.b16 %v2255
    %v2737 = vpack.c.b16 %v2675, %v2673
    %v2738 = vpack.c.b16 %v2676, %v2674
    %v2739 = vpack.c.b16 %v2679, %v2677
    %v2740 = vpack.c.b16 %v2680, %v2678
    %v2741 = vpack.c.b16 %v2683, %v2681
    %v2742 = vpack.c.b16 %v2684, %v2682
    %v2743 = vpack.c.b16 %v2687, %v2685
    %v2744 = vpack.c.b16 %v2688, %v2686
    %v2745 = vpack.c.b16 %v2691, %v2689
    %v2746 = vpack.c.b16 %v2692, %v2690
    %v2747 = vpack.c.b16 %v2695, %v2693
    %v2748 = vpack.c.b16 %v2696, %v2694
    %v2749 = vpack.c.b16 %v2699, %v2697
    %v2750 = vpack.c.b16 %v2700, %v2698
    %v2751 = vpack.c.b16 %v2703, %v2701
    %v2752 = vpack.c.b16 %v2704, %v2702
    %v2753 = vpack.c.b16 %v2707, %v2705
    %v2754 = vpack.c.b16 %v2708, %v2706
    %v2755 = vpack.c.b16 %v2711, %v2709
    %v2756 = vpack.c.b16 %v2712, %v2710
    %v2757 = vpack.c.b16 %v2715, %v2713
    %v2758 = vpack.c.b16 %v2716, %v2714
    %v2759 = vpack.c.b16 %v2719, %v2717
    %v2760 = vpack.c.b16 %v2720, %v2718
    %v2761 = vpack.c.b16 %v2723, %v2721
    %v2762 = vpack.c.b16 %v2724, %v2722
    %v2763 = vpack.c.b16 %v2727, %v2725
    %v2764 = vpack.c.b16 %v2728, %v2726
    %v2765 = vpack.c.b16 %v2731, %v2729
    %v2766 = vpack.c.b16 %v2732, %v2730
    %v2767 = vpack.c.b16 %v2735, %v2733
    %v2768 = vpack.c.b16 %v2736, %v2734
    %2801 = vmatprep.subr.bf16.mxu0 %v2193
    %2802 = vmatpush1.bf16.msra.mxu0 %v2192
    %2803 = vmatprep.subr.bf16.mxu0 %v2195
    %2804 = vmatpush1.bf16.msra.mxu0 %v2194
    %2805 = vmatprep.subr.bf16.mxu0 %v2197
    %2806 = vmatpush1.bf16.msra.mxu0 %v2196
    %2807 = vmatprep.subr.bf16.mxu0 %v2199
    %2808 = vmatpush1.bf16.msra.mxu0 %v2198
    %2809 = vmatprep.subr.bf16.mxu0 %v2201
    %2810 = vmatpush1.bf16.msra.mxu0 %v2200
    %2811 = vmatprep.subr.bf16.mxu0 %v2203
    %2812 = vmatpush1.bf16.msra.mxu0 %v2202
    %2813 = vmatprep.subr.bf16.mxu0 %v2205
    %2814 = vmatpush1.bf16.msra.mxu0 %v2204
    %2815 = vmatprep.subr.bf16.mxu0 %v2207
    %2816 = vmatpush1.bf16.msra.mxu0 %v2206
    %2817 = vmatprep.subr.bf16.mxu0 %v2209
    %2818 = vmatpush1.bf16.msra.mxu0 %v2208
    %2819 = vmatprep.subr.bf16.mxu0 %v2211
    %2820 = vmatpush1.bf16.msra.mxu0 %v2210
    %2821 = vmatprep.subr.bf16.mxu0 %v2213
    %2822 = vmatpush1.bf16.msra.mxu0 %v2212
    %2823 = vmatprep.subr.bf16.mxu0 %v2215
    %2824 = vmatpush1.bf16.msra.mxu0 %v2214
    %2825 = vmatprep.subr.bf16.mxu0 %v2217
    %2826 = vmatpush1.bf16.msra.mxu0 %v2216
    %2827 = vmatprep.subr.bf16.mxu0 %v2219
    %2828 = vmatpush1.bf16.msra.mxu0 %v2218
    %2829 = vmatprep.subr.bf16.mxu0 %v2221
    %2830 = vmatpush1.bf16.msra.mxu0 %v2220
    %2831 = vmatprep.subr.bf16.mxu0 %v2223
    %2832 = vmatpush1.bf16.msra.mxu0 %v2222
    %2833 = vmatprep.mubr.bf16.mxu0 %v2738
    %2834 = vmatmul.mubr.bf16.gmra.mrb[0].mxu0 %v2737
    %v2835 = vpop.f32.mrb[0].mxu0
    %v2836 = vadd.f32 %v2483, %v2835
    %v2837 = vpop.f32.mrb[0].mxu0
    %v2838 = vadd.f32 %v2485, %v2837
    %v2839 = vpop.f32.mrb[0].mxu0
    %v2840 = vadd.f32 %v2487, %v2839
    %v2841 = vpop.f32.mrb[0].mxu0
    %v2842 = vadd.f32 %v2489, %v2841
    %2843 = vmatprep.mubr.bf16.mxu0 %v2740
    %2844 = vmatmul.mubr.bf16.gmra.mrb[0].mxu0 %v2739
    %v2845 = vpop.f32.mrb[0].mxu0
    %v2846 = vadd.f32 %v2493, %v2845
    %v2847 = vpop.f32.mrb[0].mxu0
    %v2848 = vadd.f32 %v2495, %v2847
    %v2849 = vpop.f32.mrb[0].mxu0
    %v2850 = vadd.f32 %v2497, %v2849
    %v2851 = vpop.f32.mrb[0].mxu0
    %v2852 = vadd.f32 %v2499, %v2851
    %2853 = vmatprep.mubr.bf16.mxu0 %v2742
    %2854 = vmatmul.mubr.bf16.gmra.mrb[0].mxu0 %v2741
    %v2855 = vpop.f32.mrb[0].mxu0
    %v2856 = vadd.f32 %v2503, %v2855
    %v2857 = vpop.f32.mrb[0].mxu0
    %v2858 = vadd.f32 %v2505, %v2857
    %v2859 = vpop.f32.mrb[0].mxu0
    %v2860 = vadd.f32 %v2507, %v2859
    %v2861 = vpop.f32.mrb[0].mxu0
    %v2862 = vadd.f32 %v2509, %v2861
    %2863 = vmatprep.mubr.bf16.mxu0 %v2744
    %2864 = vmatmul.mubr.bf16.gmra.mrb[0].mxu0 %v2743
    %v2865 = vpop.f32.mrb[0].mxu0
    %v2866 = vadd.f32 %v2513, %v2865
    %v2867 = vpop.f32.mrb[0].mxu0
    %v2868 = vadd.f32 %v2515, %v2867
    %v2869 = vpop.f32.mrb[0].mxu0
    %v2870 = vadd.f32 %v2517, %v2869
    %v2871 = vpop.f32.mrb[0].mxu0
    %v2872 = vadd.f32 %v2519, %v2871
    %2873 = vmatprep.mubr.bf16.mxu0 %v2746
    %2874 = vmatmul.mubr.bf16.gmra.mrb[0].mxu0 %v2745
    %v2875 = vpop.f32.mrb[0].mxu0
    %v2876 = vadd.f32 %v2523, %v2875
    %v2877 = vpop.f32.mrb[0].mxu0
    %v2878 = vadd.f32 %v2525, %v2877
    %v2879 = vpop.f32.mrb[0].mxu0
    %v2880 = vadd.f32 %v2527, %v2879
    %v2881 = vpop.f32.mrb[0].mxu0
    %v2882 = vadd.f32 %v2529, %v2881
    %2883 = vmatprep.mubr.bf16.mxu0 %v2748
    %2884 = vmatmul.mubr.bf16.gmra.mrb[0].mxu0 %v2747
    %v2885 = vpop.f32.mrb[0].mxu0
    %v2886 = vadd.f32 %v2533, %v2885
    %v2887 = vpop.f32.mrb[0].mxu0
    %v2888 = vadd.f32 %v2535, %v2887
    %v2889 = vpop.f32.mrb[0].mxu0
    %v2890 = vadd.f32 %v2537, %v2889
    %v2891 = vpop.f32.mrb[0].mxu0
    %v2892 = vadd.f32 %v2539, %v2891
    %2893 = vmatprep.mubr.bf16.mxu0 %v2750
    %2894 = vmatmul.mubr.bf16.gmra.mrb[0].mxu0 %v2749
    %v2895 = vpop.f32.mrb[0].mxu0
    %v2896 = vadd.f32 %v2543, %v2895
    %v2897 = vpop.f32.mrb[0].mxu0
    %v2898 = vadd.f32 %v2545, %v2897
    %v2899 = vpop.f32.mrb[0].mxu0
    %v2900 = vadd.f32 %v2547, %v2899
    %v2901 = vpop.f32.mrb[0].mxu0
    %v2902 = vadd.f32 %v2549, %v2901
    %2903 = vmatprep.mubr.bf16.mxu0 %v2752
    %2904 = vmatmul.mubr.bf16.gmra.mrb[0].mxu0 %v2751
    %v2905 = vpop.f32.mrb[0].mxu0
    %v2906 = vadd.f32 %v2553, %v2905
    %v2907 = vpop.f32.mrb[0].mxu0
    %v2908 = vadd.f32 %v2555, %v2907
    %v2909 = vpop.f32.mrb[0].mxu0
    %v2910 = vadd.f32 %v2557, %v2909
    %v2911 = vpop.f32.mrb[0].mxu0
    %v2912 = vadd.f32 %v2559, %v2911
    %2913 = vmatprep.mubr.bf16.mxu0 %v2754
    %2914 = vmatmul.mubr.bf16.gmra.mrb[0].mxu0 %v2753
    %v2915 = vpop.f32.mrb[0].mxu0
    %v2916 = vadd.f32 %v2563, %v2915
    %v2917 = vpop.f32.mrb[0].mxu0
    %v2918 = vadd.f32 %v2565, %v2917
    %v2919 = vpop.f32.mrb[0].mxu0
    %v2920 = vadd.f32 %v2567, %v2919
    %v2921 = vpop.f32.mrb[0].mxu0
    %v2922 = vadd.f32 %v2569, %v2921
    %2923 = vmatprep.mubr.bf16.mxu0 %v2756
    %2924 = vmatmul.mubr.bf16.gmra.mrb[0].mxu0 %v2755
    %v2925 = vpop.f32.mrb[0].mxu0
    %v2926 = vadd.f32 %v2573, %v2925
    %v2927 = vpop.f32.mrb[0].mxu0
    %v2928 = vadd.f32 %v2575, %v2927
    %v2929 = vpop.f32.mrb[0].mxu0
    %v2930 = vadd.f32 %v2577, %v2929
    %v2931 = vpop.f32.mrb[0].mxu0
    %v2932 = vadd.f32 %v2579, %v2931
    %2933 = vmatprep.mubr.bf16.mxu0 %v2758
    %2934 = vmatmul.mubr.bf16.gmra.mrb[0].mxu0 %v2757
    %v2935 = vpop.f32.mrb[0].mxu0
    %v2936 = vadd.f32 %v2583, %v2935
    %v2937 = vpop.f32.mrb[0].mxu0
    %v2938 = vadd.f32 %v2585, %v2937
    %v2939 = vpop.f32.mrb[0].mxu0
    %v2940 = vadd.f32 %v2587, %v2939
    %v2941 = vpop.f32.mrb[0].mxu0
    %v2942 = vadd.f32 %v2589, %v2941
    %2943 = vmatprep.mubr.bf16.mxu0 %v2760
    %2944 = vmatmul.mubr.bf16.gmra.mrb[0].mxu0 %v2759
    %v2945 = vpop.f32.mrb[0].mxu0
    %v2946 = vadd.f32 %v2593, %v2945
    %v2947 = vpop.f32.mrb[0].mxu0
    %v2948 = vadd.f32 %v2595, %v2947
    %v2949 = vpop.f32.mrb[0].mxu0
    %v2950 = vadd.f32 %v2597, %v2949
    %v2951 = vpop.f32.mrb[0].mxu0
    %v2952 = vadd.f32 %v2599, %v2951
    %2953 = vmatprep.mubr.bf16.mxu0 %v2762
    %2954 = vmatmul.mubr.bf16.gmra.mrb[0].mxu0 %v2761
    %v2955 = vpop.f32.mrb[0].mxu0
    %v2956 = vadd.f32 %v2603, %v2955
    %v2957 = vpop.f32.mrb[0].mxu0
    %v2958 = vadd.f32 %v2605, %v2957
    %v2959 = vpop.f32.mrb[0].mxu0
    %v2960 = vadd.f32 %v2607, %v2959
    %v2961 = vpop.f32.mrb[0].mxu0
    %v2962 = vadd.f32 %v2609, %v2961
    %2963 = vmatprep.mubr.bf16.mxu0 %v2764
    %2964 = vmatmul.mubr.bf16.gmra.mrb[0].mxu0 %v2763
    %v2965 = vpop.f32.mrb[0].mxu0
    %v2966 = vadd.f32 %v2613, %v2965
    %v2967 = vpop.f32.mrb[0].mxu0
    %v2968 = vadd.f32 %v2615, %v2967
    %v2969 = vpop.f32.mrb[0].mxu0
    %v2970 = vadd.f32 %v2617, %v2969
    %v2971 = vpop.f32.mrb[0].mxu0
    %v2972 = vadd.f32 %v2619, %v2971
    %2973 = vmatprep.mubr.bf16.mxu0 %v2766
    %2974 = vmatmul.mubr.bf16.gmra.mrb[0].mxu0 %v2765
    %v2975 = vpop.f32.mrb[0].mxu0
    %v2976 = vadd.f32 %v2623, %v2975
    %v2977 = vpop.f32.mrb[0].mxu0
    %v2978 = vadd.f32 %v2625, %v2977
    %v2979 = vpop.f32.mrb[0].mxu0
    %v2980 = vadd.f32 %v2627, %v2979
    %v2981 = vpop.f32.mrb[0].mxu0
    %v2982 = vadd.f32 %v2629, %v2981
    %2983 = vmatprep.mubr.bf16.mxu0 %v2768
    %2984 = vmatmul.mubr.bf16.gmra.mrb[0].mxu0 %v2767
    %v2985 = vpop.f32.mrb[0].mxu0
    %v2986 = vadd.f32 %v2633, %v2985
    %v2987 = vpop.f32.mrb[0].mxu0
    %v2988 = vadd.f32 %v2635, %v2987
    %v2989 = vpop.f32.mrb[0].mxu0
    %v2990 = vadd.f32 %v2637, %v2989
    %v2991 = vpop.f32.mrb[0].mxu0
    %v2992 = vadd.f32 %v2639, %v2991
    %2993 = vdwg.mxu0
    %2995 = vset.pattern.permute.xlu0 0
    %2996 = vperm.xlu0 %2995, %v109
    %v2997 = vpop.permute.xlu0 %2996
    %3000 = vset.pattern.permute.xlu0 0
    %3001 = vperm.xlu0 %3000, %v110
    %v3002 = vpop.permute.xlu0 %3001
    %3005 = vset.pattern.permute.xlu0 0
    %3006 = vperm.xlu0 %3005, %v111
    %v3007 = vpop.permute.xlu0 %3006
    %3010 = vset.pattern.permute.xlu0 0
    %3011 = vperm.xlu0 %3010, %v112
    %v3012 = vpop.permute.xlu0 %3011
    %3015 = vset.pattern.permute.xlu0 0
    %3016 = vperm.xlu0 %3015, %v113
    %v3017 = vpop.permute.xlu0 %3016
    %3020 = vset.pattern.permute.xlu0 0
    %3021 = vperm.xlu0 %3020, %v114
    %v3022 = vpop.permute.xlu0 %3021
    %3025 = vset.pattern.permute.xlu0 0
    %3026 = vperm.xlu0 %3025, %v115
    %v3027 = vpop.permute.xlu0 %3026
    %3030 = vset.pattern.permute.xlu0 0
    %3031 = vperm.xlu0 %3030, %v116
    %v3032 = vpop.permute.xlu0 %3031
    %3035 = vset.pattern.permute.xlu0 0
    %3036 = vperm.xlu0 %3035, %v117
    %v3037 = vpop.permute.xlu0 %3036
    %3040 = vset.pattern.permute.xlu0 0
    %3041 = vperm.xlu0 %3040, %v118
    %v3042 = vpop.permute.xlu0 %3041
    %3045 = vset.pattern.permute.xlu0 0
    %3046 = vperm.xlu0 %3045, %v119
    %v3047 = vpop.permute.xlu0 %3046
    %3050 = vset.pattern.permute.xlu0 0
    %3051 = vperm.xlu0 %3050, %v120
    %v3052 = vpop.permute.xlu0 %3051
    %3055 = vset.pattern.permute.xlu0 0
    %3056 = vperm.xlu0 %3055, %v121
    %v3057 = vpop.permute.xlu0 %3056
    %3060 = vset.pattern.permute.xlu0 0
    %3061 = vperm.xlu0 %3060, %v122
    %v3062 = vpop.permute.xlu0 %3061
    %3065 = vset.pattern.permute.xlu0 0
    %3066 = vperm.xlu0 %3065, %v123
    %v3067 = vpop.permute.xlu0 %3066
    %3070 = vset.pattern.permute.xlu0 0
    %3071 = vperm.xlu0 %3070, %v124
    %v3072 = vpop.permute.xlu0 %3071
    %3075 = vset.pattern.permute.xlu0 0
    %3076 = vperm.xlu0 %3075, %v125
    %v3077 = vpop.permute.xlu0 %3076
    %3080 = vset.pattern.permute.xlu0 0
    %3081 = vperm.xlu0 %3080, %v126
    %v3082 = vpop.permute.xlu0 %3081
    %3085 = vset.pattern.permute.xlu0 0
    %3086 = vperm.xlu0 %3085, %v127
    %v3087 = vpop.permute.xlu0 %3086
    %3090 = vset.pattern.permute.xlu0 0
    %3091 = vperm.xlu0 %3090, %v128
    %v3092 = vpop.permute.xlu0 %3091
    %3095 = vset.pattern.permute.xlu0 0
    %3096 = vperm.xlu0 %3095, %v129
    %v3097 = vpop.permute.xlu0 %3096
    %3100 = vset.pattern.permute.xlu0 0
    %3101 = vperm.xlu0 %3100, %v130
    %v3102 = vpop.permute.xlu0 %3101
    %3105 = vset.pattern.permute.xlu0 0
    %3106 = vperm.xlu0 %3105, %v131
    %v3107 = vpop.permute.xlu0 %3106
    %3110 = vset.pattern.permute.xlu0 0
    %3111 = vperm.xlu0 %3110, %v132
    %v3112 = vpop.permute.xlu0 %3111
    %3115 = vset.pattern.permute.xlu0 0
    %3116 = vperm.xlu0 %3115, %v133
    %v3117 = vpop.permute.xlu0 %3116
    %3120 = vset.pattern.permute.xlu0 0
    %3121 = vperm.xlu0 %3120, %v134
    %v3122 = vpop.permute.xlu0 %3121
    %3125 = vset.pattern.permute.xlu0 0
    %3126 = vperm.xlu0 %3125, %v135
    %v3127 = vpop.permute.xlu0 %3126
    %3130 = vset.pattern.permute.xlu0 0
    %3131 = vperm.xlu0 %3130, %v136
    %v3132 = vpop.permute.xlu0 %3131
    %3135 = vset.pattern.permute.xlu0 0
    %3136 = vperm.xlu0 %3135, %v137
    %v3137 = vpop.permute.xlu0 %3136
    %3140 = vset.pattern.permute.xlu0 0
    %3141 = vperm.xlu0 %3140, %v138
    %v3142 = vpop.permute.xlu0 %3141
    %3145 = vset.pattern.permute.xlu0 0
    %3146 = vperm.xlu0 %3145, %v139
    %v3147 = vpop.permute.xlu0 %3146
    %3150 = vset.pattern.permute.xlu0 0
    %3151 = vperm.xlu0 %3150, %v140
    %v3152 = vpop.permute.xlu0 %3151
    %v3154 = vadd.f32 %v2836, %v2997
    %v3155 = vadd.f32 %v2838, %v2997
    %v3156 = vadd.f32 %v2840, %v3002
    %v3157 = vadd.f32 %v2842, %v3002
    %v3158 = vadd.f32 %v2846, %v3007
    %v3159 = vadd.f32 %v2848, %v3007
    %v3160 = vadd.f32 %v2850, %v3012
    %v3161 = vadd.f32 %v2852, %v3012
    %v3162 = vadd.f32 %v2856, %v3017
    %v3163 = vadd.f32 %v2858, %v3017
    %v3164 = vadd.f32 %v2860, %v3022
    %v3165 = vadd.f32 %v2862, %v3022
    %v3166 = vadd.f32 %v2866, %v3027
    %v3167 = vadd.f32 %v2868, %v3027
    %v3168 = vadd.f32 %v2870, %v3032
    %v3169 = vadd.f32 %v2872, %v3032
    %v3170 = vadd.f32 %v2876, %v3037
    %v3171 = vadd.f32 %v2878, %v3037
    %v3172 = vadd.f32 %v2880, %v3042
    %v3173 = vadd.f32 %v2882, %v3042
    %v3174 = vadd.f32 %v2886, %v3047
    %v3175 = vadd.f32 %v2888, %v3047
    %v3176 = vadd.f32 %v2890, %v3052
    %v3177 = vadd.f32 %v2892, %v3052
    %v3178 = vadd.f32 %v2896, %v3057
    %v3179 = vadd.f32 %v2898, %v3057
    %v3180 = vadd.f32 %v2900, %v3062
    %v3181 = vadd.f32 %v2902, %v3062
    %v3182 = vadd.f32 %v2906, %v3067
    %v3183 = vadd.f32 %v2908, %v3067
    %v3184 = vadd.f32 %v2910, %v3072
    %v3185 = vadd.f32 %v2912, %v3072
    %v3186 = vadd.f32 %v2916, %v3077
    %v3187 = vadd.f32 %v2918, %v3077
    %v3188 = vadd.f32 %v2920, %v3082
    %v3189 = vadd.f32 %v2922, %v3082
    %v3190 = vadd.f32 %v2926, %v3087
    %v3191 = vadd.f32 %v2928, %v3087
    %v3192 = vadd.f32 %v2930, %v3092
    %v3193 = vadd.f32 %v2932, %v3092
    %v3194 = vadd.f32 %v2936, %v3097
    %v3195 = vadd.f32 %v2938, %v3097
    %v3196 = vadd.f32 %v2940, %v3102
    %v3197 = vadd.f32 %v2942, %v3102
    %v3198 = vadd.f32 %v2946, %v3107
    %v3199 = vadd.f32 %v2948, %v3107
    %v3200 = vadd.f32 %v2950, %v3112
    %v3201 = vadd.f32 %v2952, %v3112
    %v3202 = vadd.f32 %v2956, %v3117
    %v3203 = vadd.f32 %v2958, %v3117
    %v3204 = vadd.f32 %v2960, %v3122
    %v3205 = vadd.f32 %v2962, %v3122
    %v3206 = vadd.f32 %v2966, %v3127
    %v3207 = vadd.f32 %v2968, %v3127
    %v3208 = vadd.f32 %v2970, %v3132
    %v3209 = vadd.f32 %v2972, %v3132
    %v3210 = vadd.f32 %v2976, %v3137
    %v3211 = vadd.f32 %v2978, %v3137
    %v3212 = vadd.f32 %v2980, %v3142
    %v3213 = vadd.f32 %v2982, %v3142
    %v3214 = vadd.f32 %v2986, %v3147
    %v3215 = vadd.f32 %v2988, %v3147
    %v3216 = vadd.f32 %v2990, %v3152
    %v3217 = vadd.f32 %v2992, %v3152
    %v3218 = vmax.f32 %v3154, 0.0
    %v3219 = vmax.f32 %v3155, 0.0
    %v3220 = vmax.f32 %v3156, 0.0
    %v3221 = vmax.f32 %v3157, 0.0
    %v3222 = vmax.f32 %v3158, 0.0
    %v3223 = vmax.f32 %v3159, 0.0
    %v3224 = vmax.f32 %v3160, 0.0
    %v3225 = vmax.f32 %v3161, 0.0
    %v3226 = vmax.f32 %v3162, 0.0
    %v3227 = vmax.f32 %v3163, 0.0
    %v3228 = vmax.f32 %v3164, 0.0
    %v3229 = vmax.f32 %v3165, 0.0
    %v3230 = vmax.f32 %v3166, 0.0
    %v3231 = vmax.f32 %v3167, 0.0
    %v3232 = vmax.f32 %v3168, 0.0
    %v3233 = vmax.f32 %v3169, 0.0
    %v3234 = vmax.f32 %v3170, 0.0
    %v3235 = vmax.f32 %v3171, 0.0
    %v3236 = vmax.f32 %v3172, 0.0
    %v3237 = vmax.f32 %v3173, 0.0
    %v3238 = vmax.f32 %v3174, 0.0
    %v3239 = vmax.f32 %v3175, 0.0
    %v3240 = vmax.f32 %v3176, 0.0
    %v3241 = vmax.f32 %v3177, 0.0
    %v3242 = vmax.f32 %v3178, 0.0
    %v3243 = vmax.f32 %v3179, 0.0
    %v3244 = vmax.f32 %v3180, 0.0
    %v3245 = vmax.f32 %v3181, 0.0
    %v3246 = vmax.f32 %v3182, 0.0
    %v3247 = vmax.f32 %v3183, 0.0
    %v3248 = vmax.f32 %v3184, 0.0
    %v3249 = vmax.f32 %v3185, 0.0
    %v3250 = vmax.f32 %v3186, 0.0
    %v3251 = vmax.f32 %v3187, 0.0
    %v3252 = vmax.f32 %v3188, 0.0
    %v3253 = vmax.f32 %v3189, 0.0
    %v3254 = vmax.f32 %v3190, 0.0
    %v3255 = vmax.f32 %v3191, 0.0
    %v3256 = vmax.f32 %v3192, 0.0
    %v3257 = vmax.f32 %v3193, 0.0
    %v3258 = vmax.f32 %v3194, 0.0
    %v3259 = vmax.f32 %v3195, 0.0
    %v3260 = vmax.f32 %v3196, 0.0
    %v3261 = vmax.f32 %v3197, 0.0
    %v3262 = vmax.f32 %v3198, 0.0
    %v3263 = vmax.f32 %v3199, 0.0
    %v3264 = vmax.f32 %v3200, 0.0
    %v3265 = vmax.f32 %v3201, 0.0
    %v3266 = vmax.f32 %v3202, 0.0
    %v3267 = vmax.f32 %v3203, 0.0
    %v3268 = vmax.f32 %v3204, 0.0
    %v3269 = vmax.f32 %v3205, 0.0
    %v3270 = vmax.f32 %v3206, 0.0
    %v3271 = vmax.f32 %v3207, 0.0
    %v3272 = vmax.f32 %v3208, 0.0
    %v3273 = vmax.f32 %v3209, 0.0
    %v3274 = vmax.f32 %v3210, 0.0
    %v3275 = vmax.f32 %v3211, 0.0
    %v3276 = vmax.f32 %v3212, 0.0
    %v3277 = vmax.f32 %v3213, 0.0
    %v3278 = vmax.f32 %v3214, 0.0
    %v3279 = vmax.f32 %v3215, 0.0
    %v3280 = vmax.f32 %v3216, 0.0
    %v3281 = vmax.f32 %v3217, 0.0
    %v3282 = vpack.c.bf16 %v3220, %v3218
    %v3283 = vpack.c.bf16 %v3221, %v3219
    %v3284 = vpack.c.bf16 %v3224, %v3222
    %v3285 = vpack.c.bf16 %v3225, %v3223
    %v3286 = vpack.c.bf16 %v3228, %v3226
    %v3287 = vpack.c.bf16 %v3229, %v3227
    %v3288 = vpack.c.bf16 %v3232, %v3230
    %v3289 = vpack.c.bf16 %v3233, %v3231
    %v3290 = vpack.c.bf16 %v3236, %v3234
    %v3291 = vpack.c.bf16 %v3237, %v3235
    %v3292 = vpack.c.bf16 %v3240, %v3238
    %v3293 = vpack.c.bf16 %v3241, %v3239
    %v3294 = vpack.c.bf16 %v3244, %v3242
    %v3295 = vpack.c.bf16 %v3245, %v3243
    %v3296 = vpack.c.bf16 %v3248, %v3246
    %v3297 = vpack.c.bf16 %v3249, %v3247
    %v3298 = vpack.c.bf16 %v3252, %v3250
    %v3299 = vpack.c.bf16 %v3253, %v3251
    %v3300 = vpack.c.bf16 %v3256, %v3254
    %v3301 = vpack.c.bf16 %v3257, %v3255
    %v3302 = vpack.c.bf16 %v3260, %v3258
    %v3303 = vpack.c.bf16 %v3261, %v3259
    %v3304 = vpack.c.bf16 %v3264, %v3262
    %v3305 = vpack.c.bf16 %v3265, %v3263
    %v3306 = vpack.c.bf16 %v3268, %v3266
    %v3307 = vpack.c.bf16 %v3269, %v3267
    %v3308 = vpack.c.bf16 %v3272, %v3270
    %v3309 = vpack.c.bf16 %v3273, %v3271
    %v3310 = vpack.c.bf16 %v3276, %v3274
    %v3311 = vpack.c.bf16 %v3277, %v3275
    %v3312 = vpack.c.bf16 %v3280, %v3278
    %v3313 = vpack.c.bf16 %v3281, %v3279
    %v3346 = vunpack.c.l.b16 %v3282
    %v3347 = vunpack.c.l.b16 %v3283
    %v3348 = vunpack.c.h.b16 %v3282
    %v3349 = vunpack.c.h.b16 %v3283
    %v3350 = vunpack.c.l.b16 %v3284
    %v3351 = vunpack.c.l.b16 %v3285
    %v3352 = vunpack.c.h.b16 %v3284
    %v3353 = vunpack.c.h.b16 %v3285
    %v3354 = vunpack.c.l.b16 %v3286
    %v3355 = vunpack.c.l.b16 %v3287
    %v3356 = vunpack.c.h.b16 %v3286
    %v3357 = vunpack.c.h.b16 %v3287
    %v3358 = vunpack.c.l.b16 %v3288
    %v3359 = vunpack.c.l.b16 %v3289
    %v3360 = vunpack.c.h.b16 %v3288
    %v3361 = vunpack.c.h.b16 %v3289
    %v3362 = vunpack.c.l.b16 %v3290
    %v3363 = vunpack.c.l.b16 %v3291
    %v3364 = vunpack.c.h.b16 %v3290
    %v3365 = vunpack.c.h.b16 %v3291
    %v3366 = vunpack.c.l.b16 %v3292
    %v3367 = vunpack.c.l.b16 %v3293
    %v3368 = vunpack.c.h.b16 %v3292
    %v3369 = vunpack.c.h.b16 %v3293
    %v3370 = vunpack.c.l.b16 %v3294
    %v3371 = vunpack.c.l.b16 %v3295
    %v3372 = vunpack.c.h.b16 %v3294
    %v3373 = vunpack.c.h.b16 %v3295
    %v3374 = vunpack.c.l.b16 %v3296
    %v3375 = vunpack.c.l.b16 %v3297
    %v3376 = vunpack.c.h.b16 %v3296
    %v3377 = vunpack.c.h.b16 %v3297
    %v3378 = vunpack.c.l.b16 %v3298
    %v3379 = vunpack.c.l.b16 %v3299
    %v3380 = vunpack.c.h.b16 %v3298
    %v3381 = vunpack.c.h.b16 %v3299
    %v3382 = vunpack.c.l.b16 %v3300
    %v3383 = vunpack.c.l.b16 %v3301
    %v3384 = vunpack.c.h.b16 %v3300
    %v3385 = vunpack.c.h.b16 %v3301
    %v3386 = vunpack.c.l.b16 %v3302
    %v3387 = vunpack.c.l.b16 %v3303
    %v3388 = vunpack.c.h.b16 %v3302
    %v3389 = vunpack.c.h.b16 %v3303
    %v3390 = vunpack.c.l.b16 %v3304
    %v3391 = vunpack.c.l.b16 %v3305
    %v3392 = vunpack.c.h.b16 %v3304
    %v3393 = vunpack.c.h.b16 %v3305
    %v3394 = vunpack.c.l.b16 %v3306
    %v3395 = vunpack.c.l.b16 %v3307
    %v3396 = vunpack.c.h.b16 %v3306
    %v3397 = vunpack.c.h.b16 %v3307
    %v3398 = vunpack.c.l.b16 %v3308
    %v3399 = vunpack.c.l.b16 %v3309
    %v3400 = vunpack.c.h.b16 %v3308
    %v3401 = vunpack.c.h.b16 %v3309
    %v3402 = vunpack.c.l.b16 %v3310
    %v3403 = vunpack.c.l.b16 %v3311
    %v3404 = vunpack.c.h.b16 %v3310
    %v3405 = vunpack.c.h.b16 %v3311
    %v3406 = vunpack.c.l.b16 %v3312
    %v3407 = vunpack.c.l.b16 %v3313
    %v3408 = vunpack.c.h.b16 %v3312
    %v3409 = vunpack.c.h.b16 %v3313
    %v3410 = vpack.c.b16 %v3347, %v3346
    %v3411 = vpack.c.b16 %v3349, %v3348
    %v3412 = vpack.c.b16 %v3351, %v3350
    %v3413 = vpack.c.b16 %v3353, %v3352
    %v3414 = vpack.c.b16 %v3355, %v3354
    %v3415 = vpack.c.b16 %v3357, %v3356
    %v3416 = vpack.c.b16 %v3359, %v3358
    %v3417 = vpack.c.b16 %v3361, %v3360
    %v3418 = vpack.c.b16 %v3363, %v3362
    %v3419 = vpack.c.b16 %v3365, %v3364
    %v3420 = vpack.c.b16 %v3367, %v3366
    %v3421 = vpack.c.b16 %v3369, %v3368
    %v3422 = vpack.c.b16 %v3371, %v3370
    %v3423 = vpack.c.b16 %v3373, %v3372
    %v3424 = vpack.c.b16 %v3375, %v3374
    %v3425 = vpack.c.b16 %v3377, %v3376
    %v3426 = vpack.c.b16 %v3379, %v3378
    %v3427 = vpack.c.b16 %v3381, %v3380
    %v3428 = vpack.c.b16 %v3383, %v3382
    %v3429 = vpack.c.b16 %v3385, %v3384
    %v3430 = vpack.c.b16 %v3387, %v3386
    %v3431 = vpack.c.b16 %v3389, %v3388
    %v3432 = vpack.c.b16 %v3391, %v3390
    %v3433 = vpack.c.b16 %v3393, %v3392
    %v3434 = vpack.c.b16 %v3395, %v3394
    %v3435 = vpack.c.b16 %v3397, %v3396
    %v3436 = vpack.c.b16 %v3399, %v3398
    %v3437 = vpack.c.b16 %v3401, %v3400
    %v3438 = vpack.c.b16 %v3403, %v3402
    %v3439 = vpack.c.b16 %v3405, %v3404
    %v3440 = vpack.c.b16 %v3407, %v3406
    %v3441 = vpack.c.b16 %v3409, %v3408
    %3474 = vst [vmem:[#allocation2] sm:$0xff] %v3410
    %3475 = vst [vmem:[#allocation2 + $0x8] sm:$0xff] %v3411
    %3476 = vst [vmem:[#allocation2 + $0x10] sm:$0xff] %v3412
    %3477 = vst [vmem:[#allocation2 + $0x18] sm:$0xff] %v3413
    %3478 = vst [vmem:[#allocation2 + $0x20] sm:$0xff] %v3414
    %3479 = vst [vmem:[#allocation2 + $0x28] sm:$0xff] %v3415
    %3480 = vst [vmem:[#allocation2 + $0x30] sm:$0xff] %v3416
    %3481 = vst [vmem:[#allocation2 + $0x38] sm:$0xff] %v3417
    %3482 = vst [vmem:[#allocation2 + $0x40] sm:$0xff] %v3418
    %3483 = vst [vmem:[#allocation2 + $0x48] sm:$0xff] %v3419
    %3484 = vst [vmem:[#allocation2 + $0x50] sm:$0xff] %v3420
    %3485 = vst [vmem:[#allocation2 + $0x58] sm:$0xff] %v3421
    %3486 = vst [vmem:[#allocation2 + $0x60] sm:$0xff] %v3422
    %3487 = vst [vmem:[#allocation2 + $0x68] sm:$0xff] %v3423
    %3488 = vst [vmem:[#allocation2 + $0x70] sm:$0xff] %v3424
    %3489 = vst [vmem:[#allocation2 + $0x78] sm:$0xff] %v3425
    %3490 = vst [vmem:[#allocation2 + $0x80] sm:$0xff] %v3426
    %3491 = vst [vmem:[#allocation2 + $0x88] sm:$0xff] %v3427
    %3492 = vst [vmem:[#allocation2 + $0x90] sm:$0xff] %v3428
    %3493 = vst [vmem:[#allocation2 + $0x98] sm:$0xff] %v3429
    %3494 = vst [vmem:[#allocation2 + $0xa0] sm:$0xff] %v3430
    %3495 = vst [vmem:[#allocation2 + $0xa8] sm:$0xff] %v3431
    %3496 = vst [vmem:[#allocation2 + $0xb0] sm:$0xff] %v3432
    %3497 = vst [vmem:[#allocation2 + $0xb8] sm:$0xff] %v3433
    %3498 = vst [vmem:[#allocation2 + $0xc0] sm:$0xff] %v3434
    %3499 = vst [vmem:[#allocation2 + $0xc8] sm:$0xff] %v3435
    %3500 = vst [vmem:[#allocation2 + $0xd0] sm:$0xff] %v3436
    %3501 = vst [vmem:[#allocation2 + $0xd8] sm:$0xff] %v3437
    %3502 = vst [vmem:[#allocation2 + $0xe0] sm:$0xff] %v3438
    %3503 = vst [vmem:[#allocation2 + $0xe8] sm:$0xff] %v3439
    %3504 = vst [vmem:[#allocation2 + $0xf0] sm:$0xff] %v3440
    %3505 = vst [vmem:[#allocation2 + $0xf8] sm:$0xff] %v3441
    %s3506 = scalar_lea.vmem %s1, 128
    %v3507 = vld [vmem:[%s3506] sm:$0xf]
    %v3508 = vld [vmem:[%s3506 + $0x4] sm:$0xf]
    %v3509 = vld [vmem:[%s3506 + $0x8] sm:$0xf]
    %v3510 = vld [vmem:[%s3506 + $0xc] sm:$0xf]
    %v3511 = vld [vmem:[%s3506 + $0x10] sm:$0xf]
    %v3512 = vld [vmem:[%s3506 + $0x14] sm:$0xf]
    %v3513 = vld [vmem:[%s3506 + $0x18] sm:$0xf]
    %v3514 = vld [vmem:[%s3506 + $0x1c] sm:$0xf]
    %v3515 = vld [vmem:[%s3506 + $0x20] sm:$0xf]
    %v3516 = vld [vmem:[%s3506 + $0x24] sm:$0xf]
    %v3517 = vld [vmem:[%s3506 + $0x28] sm:$0xf]
    %v3518 = vld [vmem:[%s3506 + $0x2c] sm:$0xf]
    %v3519 = vld [vmem:[%s3506 + $0x30] sm:$0xf]
    %v3520 = vld [vmem:[%s3506 + $0x34] sm:$0xf]
    %v3521 = vld [vmem:[%s3506 + $0x38] sm:$0xf]
    %v3522 = vld [vmem:[%s3506 + $0x3c] sm:$0xf]
    %v3523 = vld [vmem:[%s3506 + $0x40] sm:$0xf]
    %v3524 = vld [vmem:[%s3506 + $0x44] sm:$0xf]
    %v3525 = vld [vmem:[%s3506 + $0x48] sm:$0xf]
    %v3526 = vld [vmem:[%s3506 + $0x4c] sm:$0xf]
    %v3527 = vld [vmem:[%s3506 + $0x50] sm:$0xf]
    %v3528 = vld [vmem:[%s3506 + $0x54] sm:$0xf]
    %v3529 = vld [vmem:[%s3506 + $0x58] sm:$0xf]
    %v3530 = vld [vmem:[%s3506 + $0x5c] sm:$0xf]
    %v3531 = vld [vmem:[%s3506 + $0x60] sm:$0xf]
    %v3532 = vld [vmem:[%s3506 + $0x64] sm:$0xf]
    %v3533 = vld [vmem:[%s3506 + $0x68] sm:$0xf]
    %v3534 = vld [vmem:[%s3506 + $0x6c] sm:$0xf]
    %v3535 = vld [vmem:[%s3506 + $0x70] sm:$0xf]
    %v3536 = vld [vmem:[%s3506 + $0x74] sm:$0xf]
    %v3537 = vld [vmem:[%s3506 + $0x78] sm:$0xf]
    %v3538 = vld [vmem:[%s3506 + $0x7c] sm:$0xf]
    %v3539 = vld [vmem:[%s2] sm:$0xff]
    %v3540 = vld [vmem:[%s2 + $0x8] sm:$0xff]
    %v3541 = vld [vmem:[%s2 + $0x10] sm:$0xff]
    %v3542 = vld [vmem:[%s2 + $0x18] sm:$0xff]
    %v3543 = vld [vmem:[%s2 + $0x20] sm:$0xff]
    %v3544 = vld [vmem:[%s2 + $0x28] sm:$0xff]
    %v3545 = vld [vmem:[%s2 + $0x30] sm:$0xff]
    %v3546 = vld [vmem:[%s2 + $0x38] sm:$0xff]
    %s3547 = scalar_lea.vmem %s0, 256
    %v3548 = vld [vmem:[%s3547] sm:$0xff]
    %v3549 = vld [vmem:[%s3547 + $0x8] sm:$0xff]
    %v3550 = vld [vmem:[%s3547 + $0x10] sm:$0xff]
    %v3551 = vld [vmem:[%s3547 + $0x18] sm:$0xff]
    %v3552 = vld [vmem:[%s3547 + $0x20] sm:$0xff]
    %v3553 = vld [vmem:[%s3547 + $0x28] sm:$0xff]
    %v3554 = vld [vmem:[%s3547 + $0x30] sm:$0xff]
    %v3555 = vld [vmem:[%s3547 + $0x38] sm:$0xff]
    %v3556 = vld [vmem:[%s3547 + $0x40] sm:$0xff]
    %v3557 = vld [vmem:[%s3547 + $0x48] sm:$0xff]
    %v3558 = vld [vmem:[%s3547 + $0x50] sm:$0xff]
    %v3559 = vld [vmem:[%s3547 + $0x58] sm:$0xff]
    %v3560 = vld [vmem:[%s3547 + $0x60] sm:$0xff]
    %v3561 = vld [vmem:[%s3547 + $0x68] sm:$0xff]
    %v3562 = vld [vmem:[%s3547 + $0x70] sm:$0xff]
    %v3563 = vld [vmem:[%s3547 + $0x78] sm:$0xff]
    %v3564 = vld [vmem:[%s3547 + $0x80] sm:$0xff]
    %v3565 = vld [vmem:[%s3547 + $0x88] sm:$0xff]
    %v3566 = vld [vmem:[%s3547 + $0x90] sm:$0xff]
    %v3567 = vld [vmem:[%s3547 + $0x98] sm:$0xff]
    %v3568 = vld [vmem:[%s3547 + $0xa0] sm:$0xff]
    %v3569 = vld [vmem:[%s3547 + $0xa8] sm:$0xff]
    %v3570 = vld [vmem:[%s3547 + $0xb0] sm:$0xff]
    %v3571 = vld [vmem:[%s3547 + $0xb8] sm:$0xff]
    %v3572 = vld [vmem:[%s3547 + $0xc0] sm:$0xff]
    %v3573 = vld [vmem:[%s3547 + $0xc8] sm:$0xff]
    %v3574 = vld [vmem:[%s3547 + $0xd0] sm:$0xff]
    %v3575 = vld [vmem:[%s3547 + $0xd8] sm:$0xff]
    %v3576 = vld [vmem:[%s3547 + $0xe0] sm:$0xff]
    %v3577 = vld [vmem:[%s3547 + $0xe8] sm:$0xff]
    %v3578 = vld [vmem:[%s3547 + $0xf0] sm:$0xff]
    %v3579 = vld [vmem:[%s3547 + $0xf8] sm:$0xff]
    %v3588 = vunpack.c.l.b16 %v3539
    %v3589 = vunpack.c.h.b16 %v3539
    %v3590 = vunpack.c.l.b16 %v3540
    %v3591 = vunpack.c.h.b16 %v3540
    %v3592 = vunpack.c.l.b16 %v3541
    %v3593 = vunpack.c.h.b16 %v3541
    %v3594 = vunpack.c.l.b16 %v3542
    %v3595 = vunpack.c.h.b16 %v3542
    %v3596 = vunpack.c.l.b16 %v3543
    %v3597 = vunpack.c.h.b16 %v3543
    %v3598 = vunpack.c.l.b16 %v3544
    %v3599 = vunpack.c.h.b16 %v3544
    %v3600 = vunpack.c.l.b16 %v3545
    %v3601 = vunpack.c.h.b16 %v3545
    %v3602 = vunpack.c.l.b16 %v3546
    %v3603 = vunpack.c.h.b16 %v3546
    %v3604 = vpack.c.b16 %v3590, %v3588
    %v3605 = vpack.c.b16 %v3591, %v3589
    %v3606 = vpack.c.b16 %v3594, %v3592
    %v3607 = vpack.c.b16 %v3595, %v3593
    %v3608 = vpack.c.b16 %v3598, %v3596
    %v3609 = vpack.c.b16 %v3599, %v3597
    %v3610 = vpack.c.b16 %v3602, %v3600
    %v3611 = vpack.c.b16 %v3603, %v3601
    %v3652 = vunpack.c.l.b16 %v3548
    %v3653 = vunpack.c.h.b16 %v3548
    %v3654 = vunpack.c.l.b16 %v3549
    %v3655 = vunpack.c.h.b16 %v3549
    %v3656 = vunpack.c.l.b16 %v3550
    %v3657 = vunpack.c.h.b16 %v3550
    %v3658 = vunpack.c.l.b16 %v3551
    %v3659 = vunpack.c.h.b16 %v3551
    %v3660 = vunpack.c.l.b16 %v3552
    %v3661 = vunpack.c.h.b16 %v3552
    %v3662 = vunpack.c.l.b16 %v3553
    %v3663 = vunpack.c.h.b16 %v3553
    %v3664 = vunpack.c.l.b16 %v3554
    %v3665 = vunpack.c.h.b16 %v3554
    %v3666 = vunpack.c.l.b16 %v3555
    %v3667 = vunpack.c.h.b16 %v3555
    %v3668 = vunpack.c.l.b16 %v3556
    %v3669 = vunpack.c.h.b16 %v3556
    %v3670 = vunpack.c.l.b16 %v3557
    %v3671 = vunpack.c.h.b16 %v3557
    %v3672 = vunpack.c.l.b16 %v3558
    %v3673 = vunpack.c.h.b16 %v3558
    %v3674 = vunpack.c.l.b16 %v3559
    %v3675 = vunpack.c.h.b16 %v3559
    %v3676 = vunpack.c.l.b16 %v3560
    %v3677 = vunpack.c.h.b16 %v3560
    %v3678 = vunpack.c.l.b16 %v3561
    %v3679 = vunpack.c.h.b16 %v3561
    %v3680 = vunpack.c.l.b16 %v3562
    %v3681 = vunpack.c.h.b16 %v3562
    %v3682 = vunpack.c.l.b16 %v3563
    %v3683 = vunpack.c.h.b16 %v3563
    %v3684 = vunpack.c.l.b16 %v3564
    %v3685 = vunpack.c.h.b16 %v3564
    %v3686 = vunpack.c.l.b16 %v3565
    %v3687 = vunpack.c.h.b16 %v3565
    %v3688 = vunpack.c.l.b16 %v3566
    %v3689 = vunpack.c.h.b16 %v3566
    %v3690 = vunpack.c.l.b16 %v3567
    %v3691 = vunpack.c.h.b16 %v3567
    %v3692 = vunpack.c.l.b16 %v3568
    %v3693 = vunpack.c.h.b16 %v3568
    %v3694 = vunpack.c.l.b16 %v3569
    %v3695 = vunpack.c.h.b16 %v3569
    %v3696 = vunpack.c.l.b16 %v3570
    %v3697 = vunpack.c.h.b16 %v3570
    %v3698 = vunpack.c.l.b16 %v3571
    %v3699 = vunpack.c.h.b16 %v3571
    %v3700 = vunpack.c.l.b16 %v3572
    %v3701 = vunpack.c.h.b16 %v3572
    %v3702 = vunpack.c.l.b16 %v3573
    %v3703 = vunpack.c.h.b16 %v3573
    %v3704 = vunpack.c.l.b16 %v3574
    %v3705 = vunpack.c.h.b16 %v3574
    %v3706 = vunpack.c.l.b16 %v3575
    %v3707 = vunpack.c.h.b16 %v3575
    %v3708 = vunpack.c.l.b16 %v3576
    %v3709 = vunpack.c.h.b16 %v3576
    %v3710 = vunpack.c.l.b16 %v3577
    %v3711 = vunpack.c.h.b16 %v3577
    %v3712 = vunpack.c.l.b16 %v3578
    %v3713 = vunpack.c.h.b16 %v3578
    %v3714 = vunpack.c.l.b16 %v3579
    %v3715 = vunpack.c.h.b16 %v3579
    %v3716 = vpack.c.b16 %v3654, %v3652
    %v3717 = vpack.c.b16 %v3655, %v3653
    %v3718 = vpack.c.b16 %v3658, %v3656
    %v3719 = vpack.c.b16 %v3659, %v3657
    %v3720 = vpack.c.b16 %v3662, %v3660
    %v3721 = vpack.c.b16 %v3663, %v3661
    %v3722 = vpack.c.b16 %v3666, %v3664
    %v3723 = vpack.c.b16 %v3667, %v3665
    %v3724 = vpack.c.b16 %v3670, %v3668
    %v3725 = vpack.c.b16 %v3671, %v3669
    %v3726 = vpack.c.b16 %v3674, %v3672
    %v3727 = vpack.c.b16 %v3675, %v3673
    %v3728 = vpack.c.b16 %v3678, %v3676
    %v3729 = vpack.c.b16 %v3679, %v3677
    %v3730 = vpack.c.b16 %v3682, %v3680
    %v3731 = vpack.c.b16 %v3683, %v3681
    %v3732 = vpack.c.b16 %v3686, %v3684
    %v3733 = vpack.c.b16 %v3687, %v3685
    %v3734 = vpack.c.b16 %v3690, %v3688
    %v3735 = vpack.c.b16 %v3691, %v3689
    %v3736 = vpack.c.b16 %v3694, %v3692
    %v3737 = vpack.c.b16 %v3695, %v3693
    %v3738 = vpack.c.b16 %v3698, %v3696
    %v3739 = vpack.c.b16 %v3699, %v3697
    %v3740 = vpack.c.b16 %v3702, %v3700
    %v3741 = vpack.c.b16 %v3703, %v3701
    %v3742 = vpack.c.b16 %v3706, %v3704
    %v3743 = vpack.c.b16 %v3707, %v3705
    %v3744 = vpack.c.b16 %v3710, %v3708
    %v3745 = vpack.c.b16 %v3711, %v3709
    %v3746 = vpack.c.b16 %v3714, %v3712
    %v3747 = vpack.c.b16 %v3715, %v3713
    %3780 = vmatprep.subr.bf16.mxu0 %v3717
    %3781 = vmatpush1.bf16.msra.mxu0 %v3716
    %3782 = vmatprep.subr.bf16.mxu0 %v3719
    %3783 = vmatpush1.bf16.msra.mxu0 %v3718
    %3784 = vmatprep.subr.bf16.mxu0 %v3721
    %3785 = vmatpush1.bf16.msra.mxu0 %v3720
    %3786 = vmatprep.subr.bf16.mxu0 %v3723
    %3787 = vmatpush1.bf16.msra.mxu0 %v3722
    %3788 = vmatprep.subr.bf16.mxu0 %v3725
    %3789 = vmatpush1.bf16.msra.mxu0 %v3724
    %3790 = vmatprep.subr.bf16.mxu0 %v3727
    %3791 = vmatpush1.bf16.msra.mxu0 %v3726
    %3792 = vmatprep.subr.bf16.mxu0 %v3729
    %3793 = vmatpush1.bf16.msra.mxu0 %v3728
    %3794 = vmatprep.subr.bf16.mxu0 %v3731
    %3795 = vmatpush1.bf16.msra.mxu0 %v3730
    %3796 = vmatprep.subr.bf16.mxu0 %v3733
    %3797 = vmatpush1.bf16.msra.mxu0 %v3732
    %3798 = vmatprep.subr.bf16.mxu0 %v3735
    %3799 = vmatpush1.bf16.msra.mxu0 %v3734
    %3800 = vmatprep.subr.bf16.mxu0 %v3737
    %3801 = vmatpush1.bf16.msra.mxu0 %v3736
    %3802 = vmatprep.subr.bf16.mxu0 %v3739
    %3803 = vmatpush1.bf16.msra.mxu0 %v3738
    %3804 = vmatprep.subr.bf16.mxu0 %v3741
    %3805 = vmatpush1.bf16.msra.mxu0 %v3740
    %3806 = vmatprep.subr.bf16.mxu0 %v3743
    %3807 = vmatpush1.bf16.msra.mxu0 %v3742
    %3808 = vmatprep.subr.bf16.mxu0 %v3745
    %3809 = vmatpush1.bf16.msra.mxu0 %v3744
    %3810 = vmatprep.subr.bf16.mxu0 %v3747
    %3811 = vmatpush1.bf16.msra.mxu0 %v3746
    %3812 = vmatprep.mubr.bf16.mxu0 %v3605
    %3813 = vmatmul.mubr.bf16.gmra.mrb[0].mxu0 %v3604
    %v3814 = vpop.f32.mrb[0].mxu0
    %v3815 = vadd.f32 %v217, %v3814
    %v3816 = vpop.f32.mrb[0].mxu0
    %v3817 = vadd.f32 %v217, %v3816
    %v3818 = vpop.f32.mrb[0].mxu0
    %v3819 = vadd.f32 %v222, %v3818
    %v3820 = vpop.f32.mrb[0].mxu0
    %v3821 = vadd.f32 %v222, %v3820
    %3822 = vmatprep.mubr.bf16.mxu0 %v3607
    %3823 = vmatmul.mubr.bf16.gmra.mrb[0].mxu0 %v3606
    %v3824 = vpop.f32.mrb[0].mxu0
    %v3825 = vadd.f32 %v227, %v3824
    %v3826 = vpop.f32.mrb[0].mxu0
    %v3827 = vadd.f32 %v227, %v3826
    %v3828 = vpop.f32.mrb[0].mxu0
    %v3829 = vadd.f32 %v232, %v3828
    %v3830 = vpop.f32.mrb[0].mxu0
    %v3831 = vadd.f32 %v232, %v3830
    %3832 = vmatprep.mubr.bf16.mxu0 %v3609
    %3833 = vmatmul.mubr.bf16.gmra.mrb[0].mxu0 %v3608
    %v3834 = vpop.f32.mrb[0].mxu0
    %v3835 = vadd.f32 %v237, %v3834
    %v3836 = vpop.f32.mrb[0].mxu0
    %v3837 = vadd.f32 %v237, %v3836
    %v3838 = vpop.f32.mrb[0].mxu0
    %v3839 = vadd.f32 %v242, %v3838
    %v3840 = vpop.f32.mrb[0].mxu0
    %v3841 = vadd.f32 %v242, %v3840
    %3842 = vmatprep.mubr.bf16.mxu0 %v3611
    %3843 = vmatmul.mubr.bf16.gmra.mrb[0].mxu0 %v3610
    %v3844 = vpop.f32.mrb[0].mxu0
    %v3845 = vadd.f32 %v247, %v3844
    %v3846 = vpop.f32.mrb[0].mxu0
    %v3847 = vadd.f32 %v247, %v3846
    %v3848 = vpop.f32.mrb[0].mxu0
    %v3849 = vadd.f32 %v252, %v3848
    %v3850 = vpop.f32.mrb[0].mxu0
    %v3851 = vadd.f32 %v252, %v3850
    %3852 = vdwg.mxu0
    %v3853 = vmax.f32 %v3815, 0.0
    %v3854 = vmax.f32 %v3817, 0.0
    %v3855 = vmax.f32 %v3819, 0.0
    %v3856 = vmax.f32 %v3821, 0.0
    %v3857 = vmax.f32 %v3825, 0.0
    %v3858 = vmax.f32 %v3827, 0.0
    %v3859 = vmax.f32 %v3829, 0.0
    %v3860 = vmax.f32 %v3831, 0.0
    %v3861 = vmax.f32 %v3835, 0.0
    %v3862 = vmax.f32 %v3837, 0.0
    %v3863 = vmax.f32 %v3839, 0.0
    %v3864 = vmax.f32 %v3841, 0.0
    %v3865 = vmax.f32 %v3845, 0.0
    %v3866 = vmax.f32 %v3847, 0.0
    %v3867 = vmax.f32 %v3849, 0.0
    %v3868 = vmax.f32 %v3851, 0.0
    %v3869 = vpack.c.bf16 %v3855, %v3853
    %v3870 = vpack.c.bf16 %v3856, %v3854
    %v3871 = vpack.c.bf16 %v3859, %v3857
    %v3872 = vpack.c.bf16 %v3860, %v3858
    %v3873 = vpack.c.bf16 %v3863, %v3861
    %v3874 = vpack.c.bf16 %v3864, %v3862
    %v3875 = vpack.c.bf16 %v3867, %v3865
    %v3876 = vpack.c.bf16 %v3868, %v3866
    %v3877 = vld [vmem:[%s3] sm:$0xf]
    %v3878 = vld [vmem:[%s3 + $0x4] sm:$0xf]
    %v3879 = vld [vmem:[%s3 + $0x8] sm:$0xf]
    %v3880 = vld [vmem:[%s3 + $0xc] sm:$0xf]
    %v3881 = vld [vmem:[%s3 + $0x10] sm:$0xf]
    %v3882 = vld [vmem:[%s3 + $0x14] sm:$0xf]
    %v3883 = vld [vmem:[%s3 + $0x18] sm:$0xf]
    %v3884 = vld [vmem:[%s3 + $0x1c] sm:$0xf]
    %v3893 = vunpack.c.l.b16 %v3877
    %v3894 = vunpack.c.l.b16 %v3878
    %v3895 = vunpack.c.l.b16 %v3879
    %v3896 = vunpack.c.l.b16 %v3880
    %v3897 = vunpack.c.l.b16 %v3881
    %v3898 = vunpack.c.l.b16 %v3882
    %v3899 = vunpack.c.l.b16 %v3883
    %v3900 = vunpack.c.l.b16 %v3884
    %v3901 = vpack.c.b16 %v3894, %v3893
    %v3902 = vpack.c.b16 %v3896, %v3895
    %v3903 = vpack.c.b16 %v3898, %v3897
    %v3904 = vpack.c.b16 %v3900, %v3899
    %v3906 = vsel %vm619, %v3901, 0
    %v3909 = vsel %vm619, %v3902, 0
    %v3912 = vsel %vm619, %v3903, 0
    %v3915 = vsel %vm619, %v3904, 0
    %3917 = vmatprep.subr.bf16.mxu0 %v3870
    %3918 = vmatpush1.bf16.msra.mxu0 %v3869
    %3919 = vmatprep.subr.bf16.mxu0 %v3872
    %3920 = vmatpush1.bf16.msra.mxu0 %v3871
    %3921 = vmatprep.subr.bf16.mxu0 %v3874
    %3922 = vmatpush1.bf16.msra.mxu0 %v3873
    %3923 = vmatprep.subr.bf16.mxu0 %v3876
    %3924 = vmatpush1.bf16.msra.mxu0 %v3875
    %3925 = vmatprep.subr.bf16.mxu0 0
    %3926 = vmatpush1.bf16.msra.mxu0 0
    %3927 = vmatprep.subr.bf16.mxu0 0
    %3928 = vmatpush1.bf16.msra.mxu0 0
    %3929 = vmatprep.subr.bf16.mxu0 0
    %3930 = vmatpush1.bf16.msra.mxu0 0
    %3931 = vmatprep.subr.bf16.mxu0 0
    %3932 = vmatpush1.bf16.msra.mxu0 0
    %3933 = vmatprep.subr.bf16.mxu0 0
    %3934 = vmatpush1.bf16.msra.mxu0 0
    %3935 = vmatprep.subr.bf16.mxu0 0
    %3936 = vmatpush1.bf16.msra.mxu0 0
    %3937 = vmatprep.subr.bf16.mxu0 0
    %3938 = vmatpush1.bf16.msra.mxu0 0
    %3939 = vmatprep.subr.bf16.mxu0 0
    %3940 = vmatpush1.bf16.msra.mxu0 0
    %3941 = vmatprep.subr.bf16.mxu0 0
    %3942 = vmatpush1.bf16.msra.mxu0 0
    %3943 = vmatprep.subr.bf16.mxu0 0
    %3944 = vmatpush1.bf16.msra.mxu0 0
    %3945 = vmatprep.subr.bf16.mxu0 0
    %3946 = vmatpush1.bf16.msra.mxu0 0
    %3947 = vmatprep.subr.bf16.mxu0 0
    %3948 = vmatpush1.bf16.msra.mxu0 0
    %3949 = vmatprep.mubr.bf16.mxu0 0
    %3950 = vmatmul.mubr.bf16.gmra.mrb[0].mxu0 %v3906
    %v3951 = vpop.f32.mrb[0].mxu0
    %v3952 = vadd.f32 %v562, %v3951
    %v3953 = vpop.f32.mrb[0].mxu0
    %v3954 = vadd.f32 %v562, %v3953
    %v3955 = vpop.f32.mrb[0].mxu0
    %v3956 = vadd.f32 %v567, %v3955
    %v3957 = vpop.f32.mrb[0].mxu0
    %v3958 = vadd.f32 %v567, %v3957
    %3959 = vmatprep.mubr.bf16.mxu0 0
    %3960 = vmatmul.mubr.bf16.gmra.mrb[0].mxu0 %v3909
    %v3961 = vpop.f32.mrb[0].mxu0
    %v3962 = vadd.f32 %v572, %v3961
    %v3963 = vpop.f32.mrb[0].mxu0
    %v3964 = vadd.f32 %v572, %v3963
    %v3965 = vpop.f32.mrb[0].mxu0
    %v3966 = vadd.f32 %v577, %v3965
    %v3967 = vpop.f32.mrb[0].mxu0
    %v3968 = vadd.f32 %v577, %v3967
    %3969 = vmatprep.mubr.bf16.mxu0 0
    %3970 = vmatmul.mubr.bf16.gmra.mrb[0].mxu0 %v3912
    %v3971 = vpop.f32.mrb[0].mxu0
    %v3972 = vadd.f32 %v582, %v3971
    %v3973 = vpop.f32.mrb[0].mxu0
    %v3974 = vadd.f32 %v582, %v3973
    %v3975 = vpop.f32.mrb[0].mxu0
    %v3976 = vadd.f32 %v587, %v3975
    %v3977 = vpop.f32.mrb[0].mxu0
    %v3978 = vadd.f32 %v587, %v3977
    %3979 = vmatprep.mubr.bf16.mxu0 0
    %3980 = vmatmul.mubr.bf16.gmra.mrb[0].mxu0 %v3915
    %v3981 = vpop.f32.mrb[0].mxu0
    %v3982 = vadd.f32 %v592, %v3981
    %v3983 = vpop.f32.mrb[0].mxu0
    %v3984 = vadd.f32 %v592, %v3983
    %v3985 = vpop.f32.mrb[0].mxu0
    %v3986 = vadd.f32 %v597, %v3985
    %v3987 = vpop.f32.mrb[0].mxu0
    %v3988 = vadd.f32 %v597, %v3987
    %3989 = vdwg.mxu0
    %v3990 = vmax.f32 %v3952, 0.0
    %v3991 = vmax.f32 %v3954, 0.0
    %v3992 = vmax.f32 %v3956, 0.0
    %v3993 = vmax.f32 %v3958, 0.0
    %v3994 = vmax.f32 %v3962, 0.0
    %v3995 = vmax.f32 %v3964, 0.0
    %v3996 = vmax.f32 %v3966, 0.0
    %v3997 = vmax.f32 %v3968, 0.0
    %v3998 = vmax.f32 %v3972, 0.0
    %v3999 = vmax.f32 %v3974, 0.0
    %v4000 = vmax.f32 %v3976, 0.0
    %v4001 = vmax.f32 %v3978, 0.0
    %v4002 = vmax.f32 %v3982, 0.0
    %v4003 = vmax.f32 %v3984, 0.0
    %v4004 = vmax.f32 %v3986, 0.0
    %v4005 = vmax.f32 %v3988, 0.0
    %v4006 = vpack.c.bf16 %v3992, %v3990
    %v4007 = vpack.c.bf16 %v3993, %v3991
    %v4008 = vpack.c.bf16 %v3996, %v3994
    %v4009 = vpack.c.bf16 %v3997, %v3995
    %v4010 = vpack.c.bf16 %v4000, %v3998
    %v4011 = vpack.c.bf16 %v4001, %v3999
    %v4012 = vpack.c.bf16 %v4004, %v4002
    %v4013 = vpack.c.bf16 %v4005, %v4003
    %v4014 = vld [vmem:[%s4] sm:$0xff]
    %v4015 = vld [vmem:[%s4 + $0x8] sm:$0xff]
    %v4016 = vld [vmem:[%s4 + $0x10] sm:$0xff]
    %v4017 = vld [vmem:[%s4 + $0x18] sm:$0xff]
    %v4018 = vld [vmem:[%s4 + $0x20] sm:$0xff]
    %v4019 = vld [vmem:[%s4 + $0x28] sm:$0xff]
    %v4020 = vld [vmem:[%s4 + $0x30] sm:$0xff]
    %v4021 = vld [vmem:[%s4 + $0x38] sm:$0xff]
    %v4022 = vld [vmem:[%s4 + $0x40] sm:$0xff]
    %v4023 = vld [vmem:[%s4 + $0x48] sm:$0xff]
    %v4024 = vld [vmem:[%s4 + $0x50] sm:$0xff]
    %v4025 = vld [vmem:[%s4 + $0x58] sm:$0xff]
    %v4026 = vld [vmem:[%s4 + $0x60] sm:$0xff]
    %v4027 = vld [vmem:[%s4 + $0x68] sm:$0xff]
    %v4028 = vld [vmem:[%s4 + $0x70] sm:$0xff]
    %v4029 = vld [vmem:[%s4 + $0x78] sm:$0xff]
    %v4046 = vunpack.c.l.b16 %v4014
    %v4047 = vunpack.c.h.b16 %v4014
    %v4048 = vunpack.c.l.b16 %v4015
    %v4049 = vunpack.c.h.b16 %v4015
    %v4050 = vunpack.c.l.b16 %v4016
    %v4051 = vunpack.c.h.b16 %v4016
    %v4052 = vunpack.c.l.b16 %v4017
    %v4053 = vunpack.c.h.b16 %v4017
    %v4054 = vunpack.c.l.b16 %v4018
    %v4055 = vunpack.c.h.b16 %v4018
    %v4056 = vunpack.c.l.b16 %v4019
    %v4057 = vunpack.c.h.b16 %v4019
    %v4058 = vunpack.c.l.b16 %v4020
    %v4059 = vunpack.c.h.b16 %v4020
    %v4060 = vunpack.c.l.b16 %v4021
    %v4061 = vunpack.c.h.b16 %v4021
    %v4062 = vunpack.c.l.b16 %v4022
    %v4063 = vunpack.c.h.b16 %v4022
    %v4064 = vunpack.c.l.b16 %v4023
    %v4065 = vunpack.c.h.b16 %v4023
    %v4066 = vunpack.c.l.b16 %v4024
    %v4067 = vunpack.c.h.b16 %v4024
    %v4068 = vunpack.c.l.b16 %v4025
    %v4069 = vunpack.c.h.b16 %v4025
    %v4070 = vunpack.c.l.b16 %v4026
    %v4071 = vunpack.c.h.b16 %v4026
    %v4072 = vunpack.c.l.b16 %v4027
    %v4073 = vunpack.c.h.b16 %v4027
    %v4074 = vunpack.c.l.b16 %v4028
    %v4075 = vunpack.c.h.b16 %v4028
    %v4076 = vunpack.c.l.b16 %v4029
    %v4077 = vunpack.c.h.b16 %v4029
    %v4078 = vpack.c.b16 %v4048, %v4046
    %v4079 = vpack.c.b16 %v4049, %v4047
    %v4080 = vpack.c.b16 %v4052, %v4050
    %v4081 = vpack.c.b16 %v4053, %v4051
    %v4082 = vpack.c.b16 %v4056, %v4054
    %v4083 = vpack.c.b16 %v4057, %v4055
    %v4084 = vpack.c.b16 %v4060, %v4058
    %v4085 = vpack.c.b16 %v4061, %v4059
    %v4086 = vpack.c.b16 %v4064, %v4062
    %v4087 = vpack.c.b16 %v4065, %v4063
    %v4088 = vpack.c.b16 %v4068, %v4066
    %v4089 = vpack.c.b16 %v4069, %v4067
    %v4090 = vpack.c.b16 %v4072, %v4070
    %v4091 = vpack.c.b16 %v4073, %v4071
    %v4092 = vpack.c.b16 %v4076, %v4074
    %v4093 = vpack.c.b16 %v4077, %v4075
    %v4142 = vunpack.c.l.b16 %v3507
    %v4143 = vunpack.c.l.b16 %v3508
    %v4144 = vunpack.c.l.b16 %v3509
    %v4145 = vunpack.c.l.b16 %v3510
    %v4146 = vunpack.c.l.b16 %v3511
    %v4147 = vunpack.c.l.b16 %v3512
    %v4148 = vunpack.c.l.b16 %v3513
    %v4149 = vunpack.c.l.b16 %v3514
    %v4150 = vunpack.c.l.b16 %v3515
    %v4151 = vunpack.c.l.b16 %v3516
    %v4152 = vunpack.c.l.b16 %v3517
    %v4153 = vunpack.c.l.b16 %v3518
    %v4154 = vunpack.c.l.b16 %v3519
    %v4155 = vunpack.c.l.b16 %v3520
    %v4156 = vunpack.c.l.b16 %v3521
    %v4157 = vunpack.c.l.b16 %v3522
    %v4158 = vunpack.c.l.b16 %v3523
    %v4159 = vunpack.c.l.b16 %v3524
    %v4160 = vunpack.c.l.b16 %v3525
    %v4161 = vunpack.c.l.b16 %v3526
    %v4162 = vunpack.c.l.b16 %v3527
    %v4163 = vunpack.c.l.b16 %v3528
    %v4164 = vunpack.c.l.b16 %v3529
    %v4165 = vunpack.c.l.b16 %v3530
    %v4166 = vunpack.c.l.b16 %v3531
    %v4167 = vunpack.c.l.b16 %v3532
    %v4168 = vunpack.c.l.b16 %v3533
    %v4169 = vunpack.c.l.b16 %v3534
    %v4170 = vunpack.c.l.b16 %v3535
    %v4171 = vunpack.c.l.b16 %v3536
    %v4172 = vunpack.c.l.b16 %v3537
    %v4173 = vunpack.c.l.b16 %v3538
    %v4174 = vpack.c.b16 %v4143, %v4142
    %v4175 = vpack.c.b16 %v4145, %v4144
    %v4176 = vpack.c.b16 %v4147, %v4146
    %v4177 = vpack.c.b16 %v4149, %v4148
    %v4178 = vpack.c.b16 %v4151, %v4150
    %v4179 = vpack.c.b16 %v4153, %v4152
    %v4180 = vpack.c.b16 %v4155, %v4154
    %v4181 = vpack.c.b16 %v4157, %v4156
    %v4182 = vpack.c.b16 %v4159, %v4158
    %v4183 = vpack.c.b16 %v4161, %v4160
    %v4184 = vpack.c.b16 %v4163, %v4162
    %v4185 = vpack.c.b16 %v4165, %v4164
    %v4186 = vpack.c.b16 %v4167, %v4166
    %v4187 = vpack.c.b16 %v4169, %v4168
    %v4188 = vpack.c.b16 %v4171, %v4170
    %v4189 = vpack.c.b16 %v4173, %v4172
    %4206 = vmatprep.subr.bf16.mxu0 0
    %4207 = vmatpush1.bf16.msra.mxu0 %v4174
    %4208 = vmatprep.subr.bf16.mxu0 0
    %4209 = vmatpush1.bf16.msra.mxu0 %v4175
    %4210 = vmatprep.subr.bf16.mxu0 0
    %4211 = vmatpush1.bf16.msra.mxu0 %v4176
    %4212 = vmatprep.subr.bf16.mxu0 0
    %4213 = vmatpush1.bf16.msra.mxu0 %v4177
    %4214 = vmatprep.subr.bf16.mxu0 0
    %4215 = vmatpush1.bf16.msra.mxu0 %v4178
    %4216 = vmatprep.subr.bf16.mxu0 0
    %4217 = vmatpush1.bf16.msra.mxu0 %v4179
    %4218 = vmatprep.subr.bf16.mxu0 0
    %4219 = vmatpush1.bf16.msra.mxu0 %v4180
    %4220 = vmatprep.subr.bf16.mxu0 0
    %4221 = vmatpush1.bf16.msra.mxu0 %v4181
    %4222 = vmatprep.subr.bf16.mxu0 0
    %4223 = vmatpush1.bf16.msra.mxu0 %v4182
    %4224 = vmatprep.subr.bf16.mxu0 0
    %4225 = vmatpush1.bf16.msra.mxu0 %v4183
    %4226 = vmatprep.subr.bf16.mxu0 0
    %4227 = vmatpush1.bf16.msra.mxu0 %v4184
    %4228 = vmatprep.subr.bf16.mxu0 0
    %4229 = vmatpush1.bf16.msra.mxu0 %v4185
    %4230 = vmatprep.subr.bf16.mxu0 0
    %4231 = vmatpush1.bf16.msra.mxu0 %v4186
    %4232 = vmatprep.subr.bf16.mxu0 0
    %4233 = vmatpush1.bf16.msra.mxu0 %v4187
    %4234 = vmatprep.subr.bf16.mxu0 0
    %4235 = vmatpush1.bf16.msra.mxu0 %v4188
    %4236 = vmatprep.subr.bf16.mxu0 0
    %4237 = vmatpush1.bf16.msra.mxu0 %v4189
    %4238 = vmatprep.mubr.bf16.mxu0 %v4079
    %4239 = vmatmul.mubr.bf16.gmra.mrb[0].mxu0 %v4078
    %v4240 = vpop.f32.mrb[0].mxu0
    %v4241 = vadd.f32 %v748, %v4240
    %v4242 = vpop.f32.mrb[0].mxu0
    %v4243 = vpop.f32.mrb[0].mxu0
    %v4244 = vadd.f32 %v753, %v4243
    %v4245 = vpop.f32.mrb[0].mxu0
    %4246 = vmatprep.mubr.bf16.mxu0 %v4081
    %4247 = vmatmul.mubr.bf16.gmra.mrb[0].mxu0 %v4080
    %v4248 = vpop.f32.mrb[0].mxu0
    %v4249 = vadd.f32 %v758, %v4248
    %v4250 = vpop.f32.mrb[0].mxu0
    %v4251 = vpop.f32.mrb[0].mxu0
    %v4252 = vadd.f32 %v763, %v4251
    %v4253 = vpop.f32.mrb[0].mxu0
    %4254 = vmatprep.mubr.bf16.mxu0 %v4083
    %4255 = vmatmul.mubr.bf16.gmra.mrb[0].mxu0 %v4082
    %v4256 = vpop.f32.mrb[0].mxu0
    %v4257 = vadd.f32 %v768, %v4256
    %v4258 = vpop.f32.mrb[0].mxu0
    %v4259 = vpop.f32.mrb[0].mxu0
    %v4260 = vadd.f32 %v773, %v4259
    %v4261 = vpop.f32.mrb[0].mxu0
    %4262 = vmatprep.mubr.bf16.mxu0 %v4085
    %4263 = vmatmul.mubr.bf16.gmra.mrb[0].mxu0 %v4084
    %v4264 = vpop.f32.mrb[0].mxu0
    %v4265 = vadd.f32 %v778, %v4264
    %v4266 = vpop.f32.mrb[0].mxu0
    %v4267 = vpop.f32.mrb[0].mxu0
    %v4268 = vadd.f32 %v783, %v4267
    %v4269 = vpop.f32.mrb[0].mxu0
    %4270 = vmatprep.mubr.bf16.mxu0 %v4087
    %4271 = vmatmul.mubr.bf16.gmra.mrb[0].mxu0 %v4086
    %v4272 = vpop.f32.mrb[0].mxu0
    %v4273 = vadd.f32 %v788, %v4272
    %v4274 = vpop.f32.mrb[0].mxu0
    %v4275 = vpop.f32.mrb[0].mxu0
    %v4276 = vadd.f32 %v793, %v4275
    %v4277 = vpop.f32.mrb[0].mxu0
    %4278 = vmatprep.mubr.bf16.mxu0 %v4089
    %4279 = vmatmul.mubr.bf16.gmra.mrb[0].mxu0 %v4088
    %v4280 = vpop.f32.mrb[0].mxu0
    %v4281 = vadd.f32 %v798, %v4280
    %v4282 = vpop.f32.mrb[0].mxu0
    %v4283 = vpop.f32.mrb[0].mxu0
    %v4284 = vadd.f32 %v803, %v4283
    %v4285 = vpop.f32.mrb[0].mxu0
    %4286 = vmatprep.mubr.bf16.mxu0 %v4091
    %4287 = vmatmul.mubr.bf16.gmra.mrb[0].mxu0 %v4090
    %v4288 = vpop.f32.mrb[0].mxu0
    %v4289 = vadd.f32 %v808, %v4288
    %v4290 = vpop.f32.mrb[0].mxu0
    %v4291 = vpop.f32.mrb[0].mxu0
    %v4292 = vadd.f32 %v813, %v4291
    %v4293 = vpop.f32.mrb[0].mxu0
    %4294 = vmatprep.mubr.bf16.mxu0 %v4093
    %4295 = vmatmul.mubr.bf16.gmra.mrb[0].mxu0 %v4092
    %v4296 = vpop.f32.mrb[0].mxu0
    %v4297 = vadd.f32 %v818, %v4296
    %v4298 = vpop.f32.mrb[0].mxu0
    %v4299 = vpop.f32.mrb[0].mxu0
    %v4300 = vadd.f32 %v823, %v4299
    %v4301 = vpop.f32.mrb[0].mxu0
    %4302 = vdwg.mxu0
    %v4303 = vmax.f32 %v4241, 0.0
    %v4304 = vmax.f32 %v4244, 0.0
    %v4305 = vmax.f32 %v4249, 0.0
    %v4306 = vmax.f32 %v4252, 0.0
    %v4307 = vmax.f32 %v4257, 0.0
    %v4308 = vmax.f32 %v4260, 0.0
    %v4309 = vmax.f32 %v4265, 0.0
    %v4310 = vmax.f32 %v4268, 0.0
    %v4311 = vmax.f32 %v4273, 0.0
    %v4312 = vmax.f32 %v4276, 0.0
    %v4313 = vmax.f32 %v4281, 0.0
    %v4314 = vmax.f32 %v4284, 0.0
    %v4315 = vmax.f32 %v4289, 0.0
    %v4316 = vmax.f32 %v4292, 0.0
    %v4317 = vmax.f32 %v4297, 0.0
    %v4318 = vmax.f32 %v4300, 0.0
    %v4319 = vpack.c.bf16 %v4304, %v4303
    %v4320 = vpack.c.bf16 %v4306, %v4305
    %v4321 = vpack.c.bf16 %v4308, %v4307
    %v4322 = vpack.c.bf16 %v4310, %v4309
    %v4323 = vpack.c.bf16 %v4312, %v4311
    %v4324 = vpack.c.bf16 %v4314, %v4313
    %v4325 = vpack.c.bf16 %v4316, %v4315
    %v4326 = vpack.c.bf16 %v4318, %v4317
    %v4327 = vld [vmem:[%s5] sm:$0xf]
    %v4328 = vld [vmem:[%s5 + $0x4] sm:$0xf]
    %v4329 = vld [vmem:[%s5 + $0x8] sm:$0xf]
    %v4330 = vld [vmem:[%s5 + $0xc] sm:$0xf]
    %v4331 = vld [vmem:[%s5 + $0x10] sm:$0xf]
    %v4332 = vld [vmem:[%s5 + $0x14] sm:$0xf]
    %v4333 = vld [vmem:[%s5 + $0x18] sm:$0xf]
    %v4334 = vld [vmem:[%s5 + $0x1c] sm:$0xf]
    %v4343 = vunpack.c.l.b16 %v4327
    %v4344 = vunpack.c.l.b16 %v4328
    %v4345 = vunpack.c.l.b16 %v4329
    %v4346 = vunpack.c.l.b16 %v4330
    %v4347 = vunpack.c.l.b16 %v4331
    %v4348 = vunpack.c.l.b16 %v4332
    %v4349 = vunpack.c.l.b16 %v4333
    %v4350 = vunpack.c.l.b16 %v4334
    %v4351 = vpack.c.b16 %v4344, %v4343
    %v4352 = vpack.c.b16 %v4346, %v4345
    %v4353 = vpack.c.b16 %v4348, %v4347
    %v4354 = vpack.c.b16 %v4350, %v4349
    %v4356 = vsel %vm619, %v4351, 0
    %v4359 = vsel %vm619, %v4352, 0
    %v4362 = vsel %vm619, %v4353, 0
    %v4365 = vsel %vm619, %v4354, 0
    %4367 = vmatprep.subr.bf16.mxu0 0
    %4368 = vmatpush1.bf16.msra.mxu0 %v4319
    %4369 = vmatprep.subr.bf16.mxu0 0
    %4370 = vmatpush1.bf16.msra.mxu0 %v4320
    %4371 = vmatprep.subr.bf16.mxu0 0
    %4372 = vmatpush1.bf16.msra.mxu0 %v4321
    %4373 = vmatprep.subr.bf16.mxu0 0
    %4374 = vmatpush1.bf16.msra.mxu0 %v4322
    %4375 = vmatprep.subr.bf16.mxu0 0
    %4376 = vmatpush1.bf16.msra.mxu0 0
    %4377 = vmatprep.subr.bf16.mxu0 0
    %4378 = vmatpush1.bf16.msra.mxu0 0
    %4379 = vmatprep.subr.bf16.mxu0 0
    %4380 = vmatpush1.bf16.msra.mxu0 0
    %4381 = vmatprep.subr.bf16.mxu0 0
    %4382 = vmatpush1.bf16.msra.mxu0 0
    %4383 = vmatprep.subr.bf16.mxu0 0
    %4384 = vmatpush1.bf16.msra.mxu0 0
    %4385 = vmatprep.subr.bf16.mxu0 0
    %4386 = vmatpush1.bf16.msra.mxu0 0
    %4387 = vmatprep.subr.bf16.mxu0 0
    %4388 = vmatpush1.bf16.msra.mxu0 0
    %4389 = vmatprep.subr.bf16.mxu0 0
    %4390 = vmatpush1.bf16.msra.mxu0 0
    %4391 = vmatprep.subr.bf16.mxu0 0
    %4392 = vmatpush1.bf16.msra.mxu0 0
    %4393 = vmatprep.subr.bf16.mxu0 0
    %4394 = vmatpush1.bf16.msra.mxu0 0
    %4395 = vmatprep.subr.bf16.mxu0 0
    %4396 = vmatpush1.bf16.msra.mxu0 0
    %4397 = vmatprep.subr.bf16.mxu0 0
    %4398 = vmatpush1.bf16.msra.mxu0 0
    %4399 = vmatprep.mubr.bf16.mxu0 0
    %4400 = vmatmul.mubr.bf16.gmra.mrb[0].mxu0 %v4356
    %v4401 = vpop.f32.mrb[0].mxu0
    %v4402 = vadd.f32 %v1133, %v4401
    %v4403 = vpop.f32.mrb[0].mxu0
    %v4404 = vpop.f32.mrb[0].mxu0
    %v4405 = vadd.f32 %v1138, %v4404
    %v4406 = vpop.f32.mrb[0].mxu0
    %4407 = vmatprep.mubr.bf16.mxu0 0
    %4408 = vmatmul.mubr.bf16.gmra.mrb[0].mxu0 %v4359
    %v4409 = vpop.f32.mrb[0].mxu0
    %v4410 = vadd.f32 %v1143, %v4409
    %v4411 = vpop.f32.mrb[0].mxu0
    %v4412 = vpop.f32.mrb[0].mxu0
    %v4413 = vadd.f32 %v1148, %v4412
    %v4414 = vpop.f32.mrb[0].mxu0
    %4415 = vmatprep.mubr.bf16.mxu0 0
    %4416 = vmatmul.mubr.bf16.gmra.mrb[0].mxu0 %v4362
    %v4417 = vpop.f32.mrb[0].mxu0
    %v4418 = vadd.f32 %v1153, %v4417
    %v4419 = vpop.f32.mrb[0].mxu0
    %v4420 = vpop.f32.mrb[0].mxu0
    %v4421 = vadd.f32 %v1158, %v4420
    %v4422 = vpop.f32.mrb[0].mxu0
    %4423 = vmatprep.mubr.bf16.mxu0 0
    %4424 = vmatmul.mubr.bf16.gmra.mrb[0].mxu0 %v4365
    %v4425 = vpop.f32.mrb[0].mxu0
    %v4426 = vadd.f32 %v1163, %v4425
    %v4427 = vpop.f32.mrb[0].mxu0
    %v4428 = vpop.f32.mrb[0].mxu0
    %v4429 = vadd.f32 %v1168, %v4428
    %v4430 = vpop.f32.mrb[0].mxu0
    %4431 = vdwg.mxu0
    %v4432 = vmax.f32 %v4402, 0.0
    %v4433 = vmax.f32 %v4405, 0.0
    %v4434 = vmax.f32 %v4410, 0.0
    %v4435 = vmax.f32 %v4413, 0.0
    %v4436 = vmax.f32 %v4418, 0.0
    %v4437 = vmax.f32 %v4421, 0.0
    %v4438 = vmax.f32 %v4426, 0.0
    %v4439 = vmax.f32 %v4429, 0.0
    %v4440 = vpack.c.bf16 %v4433, %v4432
    %v4441 = vpack.c.bf16 %v4435, %v4434
    %v4442 = vpack.c.bf16 %v4437, %v4436
    %v4443 = vpack.c.bf16 %v4439, %v4438
    %v4444 = vld [vmem:[%s6] sm:$0xf]
    %v4445 = vld [vmem:[%s6 + $0x4] sm:$0xf]
    %v4446 = vld [vmem:[%s6 + $0x8] sm:$0xf]
    %v4447 = vld [vmem:[%s6 + $0xc] sm:$0xf]
    %v4448 = vld [vmem:[%s6 + $0x10] sm:$0xf]
    %v4449 = vld [vmem:[%s6 + $0x14] sm:$0xf]
    %v4450 = vld [vmem:[%s6 + $0x18] sm:$0xf]
    %v4451 = vld [vmem:[%s6 + $0x1c] sm:$0xf]
    %v4452 = vld [vmem:[%s6 + $0x20] sm:$0xf]
    %v4453 = vld [vmem:[%s6 + $0x24] sm:$0xf]
    %v4454 = vld [vmem:[%s6 + $0x28] sm:$0xf]
    %v4455 = vld [vmem:[%s6 + $0x2c] sm:$0xf]
    %v4456 = vld [vmem:[%s6 + $0x30] sm:$0xf]
    %v4457 = vld [vmem:[%s6 + $0x34] sm:$0xf]
    %v4458 = vld [vmem:[%s6 + $0x38] sm:$0xf]
    %v4459 = vld [vmem:[%s6 + $0x3c] sm:$0xf]
    %v4460 = vld [vmem:[%s6 + $0x40] sm:$0xf]
    %v4461 = vld [vmem:[%s6 + $0x44] sm:$0xf]
    %v4462 = vld [vmem:[%s6 + $0x48] sm:$0xf]
    %v4463 = vld [vmem:[%s6 + $0x4c] sm:$0xf]
    %v4464 = vld [vmem:[%s6 + $0x50] sm:$0xf]
    %v4465 = vld [vmem:[%s6 + $0x54] sm:$0xf]
    %v4466 = vld [vmem:[%s6 + $0x58] sm:$0xf]
    %v4467 = vld [vmem:[%s6 + $0x5c] sm:$0xf]
    %v4468 = vld [vmem:[%s6 + $0x60] sm:$0xf]
    %v4469 = vld [vmem:[%s6 + $0x64] sm:$0xf]
    %v4470 = vld [vmem:[%s6 + $0x68] sm:$0xf]
    %v4471 = vld [vmem:[%s6 + $0x6c] sm:$0xf]
    %v4472 = vld [vmem:[%s6 + $0x70] sm:$0xf]
    %v4473 = vld [vmem:[%s6 + $0x74] sm:$0xf]
    %v4474 = vld [vmem:[%s6 + $0x78] sm:$0xf]
    %v4475 = vld [vmem:[%s6 + $0x7c] sm:$0xf]
    %v4508 = vunpack.c.l.b16 %v4444
    %v4509 = vunpack.c.l.b16 %v4445
    %v4510 = vunpack.c.l.b16 %v4446
    %v4511 = vunpack.c.l.b16 %v4447
    %v4512 = vunpack.c.l.b16 %v4448
    %v4513 = vunpack.c.l.b16 %v4449
    %v4514 = vunpack.c.l.b16 %v4450
    %v4515 = vunpack.c.l.b16 %v4451
    %v4516 = vunpack.c.l.b16 %v4452
    %v4517 = vunpack.c.l.b16 %v4453
    %v4518 = vunpack.c.l.b16 %v4454
    %v4519 = vunpack.c.l.b16 %v4455
    %v4520 = vunpack.c.l.b16 %v4456
    %v4521 = vunpack.c.l.b16 %v4457
    %v4522 = vunpack.c.l.b16 %v4458
    %v4523 = vunpack.c.l.b16 %v4459
    %v4524 = vunpack.c.l.b16 %v4460
    %v4525 = vunpack.c.l.b16 %v4461
    %v4526 = vunpack.c.l.b16 %v4462
    %v4527 = vunpack.c.l.b16 %v4463
    %v4528 = vunpack.c.l.b16 %v4464
    %v4529 = vunpack.c.l.b16 %v4465
    %v4530 = vunpack.c.l.b16 %v4466
    %v4531 = vunpack.c.l.b16 %v4467
    %v4532 = vunpack.c.l.b16 %v4468
    %v4533 = vunpack.c.l.b16 %v4469
    %v4534 = vunpack.c.l.b16 %v4470
    %v4535 = vunpack.c.l.b16 %v4471
    %v4536 = vunpack.c.l.b16 %v4472
    %v4537 = vunpack.c.l.b16 %v4473
    %v4538 = vunpack.c.l.b16 %v4474
    %v4539 = vunpack.c.l.b16 %v4475
    %v4540 = vpack.c.b16 %v4509, %v4508
    %v4541 = vpack.c.b16 %v4511, %v4510
    %v4542 = vpack.c.b16 %v4513, %v4512
    %v4543 = vpack.c.b16 %v4515, %v4514
    %v4544 = vpack.c.b16 %v4517, %v4516
    %v4545 = vpack.c.b16 %v4519, %v4518
    %v4546 = vpack.c.b16 %v4521, %v4520
    %v4547 = vpack.c.b16 %v4523, %v4522
    %v4548 = vpack.c.b16 %v4525, %v4524
    %v4549 = vpack.c.b16 %v4527, %v4526
    %v4550 = vpack.c.b16 %v4529, %v4528
    %v4551 = vpack.c.b16 %v4531, %v4530
    %v4552 = vpack.c.b16 %v4533, %v4532
    %v4553 = vpack.c.b16 %v4535, %v4534
    %v4554 = vpack.c.b16 %v4537, %v4536
    %v4555 = vpack.c.b16 %v4539, %v4538
    %v4557 = vsel %vm619, %v4540, 0
    %v4560 = vsel %vm619, %v4541, 0
    %v4563 = vsel %vm619, %v4542, 0
    %v4566 = vsel %vm619, %v4543, 0
    %v4569 = vsel %vm619, %v4544, 0
    %v4572 = vsel %vm619, %v4545, 0
    %v4575 = vsel %vm619, %v4546, 0
    %v4578 = vsel %vm619, %v4547, 0
    %v4581 = vsel %vm619, %v4548, 0
    %v4584 = vsel %vm619, %v4549, 0
    %v4587 = vsel %vm619, %v4550, 0
    %v4590 = vsel %vm619, %v4551, 0
    %v4593 = vsel %vm619, %v4552, 0
    %v4596 = vsel %vm619, %v4553, 0
    %v4599 = vsel %vm619, %v4554, 0
    %v4602 = vsel %vm619, %v4555, 0
    %4604 = vmatprep.subr.bf16.mxu0 0
    %4605 = vmatpush1.bf16.msra.mxu0 %v4323
    %4606 = vmatprep.subr.bf16.mxu0 0
    %4607 = vmatpush1.bf16.msra.mxu0 %v4324
    %4608 = vmatprep.subr.bf16.mxu0 0
    %4609 = vmatpush1.bf16.msra.mxu0 %v4325
    %4610 = vmatprep.subr.bf16.mxu0 0
    %4611 = vmatpush1.bf16.msra.mxu0 %v4326
    %4612 = vmatprep.subr.bf16.mxu0 0
    %4613 = vmatpush1.bf16.msra.mxu0 0
    %4614 = vmatprep.subr.bf16.mxu0 0
    %4615 = vmatpush1.bf16.msra.mxu0 0
    %4616 = vmatprep.subr.bf16.mxu0 0
    %4617 = vmatpush1.bf16.msra.mxu0 0
    %4618 = vmatprep.subr.bf16.mxu0 0
    %4619 = vmatpush1.bf16.msra.mxu0 0
    %4620 = vmatprep.subr.bf16.mxu0 0
    %4621 = vmatpush1.bf16.msra.mxu0 0
    %4622 = vmatprep.subr.bf16.mxu0 0
    %4623 = vmatpush1.bf16.msra.mxu0 0
    %4624 = vmatprep.subr.bf16.mxu0 0
    %4625 = vmatpush1.bf16.msra.mxu0 0
    %4626 = vmatprep.subr.bf16.mxu0 0
    %4627 = vmatpush1.bf16.msra.mxu0 0
    %4628 = vmatprep.subr.bf16.mxu0 0
    %4629 = vmatpush1.bf16.msra.mxu0 0
    %4630 = vmatprep.subr.bf16.mxu0 0
    %4631 = vmatpush1.bf16.msra.mxu0 0
    %4632 = vmatprep.subr.bf16.mxu0 0
    %4633 = vmatpush1.bf16.msra.mxu0 0
    %4634 = vmatprep.subr.bf16.mxu0 0
    %4635 = vmatpush1.bf16.msra.mxu0 0
    %4636 = vmatprep.mubr.bf16.mxu0 0
    %4637 = vmatmul.mubr.bf16.gmra.mrb[0].mxu0 %v4557
    %v4638 = vpop.f32.mrb[0].mxu0
    %v4639 = vadd.f32 0.0, %v4638
    %v4640 = vpop.f32.mrb[0].mxu0
    %v4641 = vpop.f32.mrb[0].mxu0
    %v4642 = vadd.f32 0.0, %v4641
    %v4643 = vpop.f32.mrb[0].mxu0
    %4644 = vmatprep.mubr.bf16.mxu0 0
    %4645 = vmatmul.mubr.bf16.gmra.mrb[0].mxu0 %v4560
    %v4646 = vpop.f32.mrb[0].mxu0
    %v4647 = vadd.f32 0.0, %v4646
    %v4648 = vpop.f32.mrb[0].mxu0
    %v4649 = vpop.f32.mrb[0].mxu0
    %v4650 = vadd.f32 0.0, %v4649
    %v4651 = vpop.f32.mrb[0].mxu0
    %4652 = vmatprep.mubr.bf16.mxu0 0
    %4653 = vmatmul.mubr.bf16.gmra.mrb[0].mxu0 %v4563
    %v4654 = vpop.f32.mrb[0].mxu0
    %v4655 = vadd.f32 0.0, %v4654
    %v4656 = vpop.f32.mrb[0].mxu0
    %v4657 = vpop.f32.mrb[0].mxu0
    %v4658 = vadd.f32 0.0, %v4657
    %v4659 = vpop.f32.mrb[0].mxu0
    %4660 = vmatprep.mubr.bf16.mxu0 0
    %4661 = vmatmul.mubr.bf16.gmra.mrb[0].mxu0 %v4566
    %v4662 = vpop.f32.mrb[0].mxu0
    %v4663 = vadd.f32 0.0, %v4662
    %v4664 = vpop.f32.mrb[0].mxu0
    %v4665 = vpop.f32.mrb[0].mxu0
    %v4666 = vadd.f32 0.0, %v4665
    %v4667 = vpop.f32.mrb[0].mxu0
    %4668 = vmatprep.mubr.bf16.mxu0 0
    %4669 = vmatmul.mubr.bf16.gmra.mrb[0].mxu0 %v4569
    %v4670 = vpop.f32.mrb[0].mxu0
    %v4671 = vadd.f32 0.0, %v4670
    %v4672 = vpop.f32.mrb[0].mxu0
    %v4673 = vpop.f32.mrb[0].mxu0
    %v4674 = vadd.f32 0.0, %v4673
    %v4675 = vpop.f32.mrb[0].mxu0
    %4676 = vmatprep.mubr.bf16.mxu0 0
    %4677 = vmatmul.mubr.bf16.gmra.mrb[0].mxu0 %v4572
    %v4678 = vpop.f32.mrb[0].mxu0
    %v4679 = vadd.f32 0.0, %v4678
    %v4680 = vpop.f32.mrb[0].mxu0
    %v4681 = vpop.f32.mrb[0].mxu0
    %v4682 = vadd.f32 0.0, %v4681
    %v4683 = vpop.f32.mrb[0].mxu0
    %4684 = vmatprep.mubr.bf16.mxu0 0
    %4685 = vmatmul.mubr.bf16.gmra.mrb[0].mxu0 %v4575
    %v4686 = vpop.f32.mrb[0].mxu0
    %v4687 = vadd.f32 0.0, %v4686
    %v4688 = vpop.f32.mrb[0].mxu0
    %v4689 = vpop.f32.mrb[0].mxu0
    %v4690 = vadd.f32 0.0, %v4689
    %v4691 = vpop.f32.mrb[0].mxu0
    %4692 = vmatprep.mubr.bf16.mxu0 0
    %4693 = vmatmul.mubr.bf16.gmra.mrb[0].mxu0 %v4578
    %v4694 = vpop.f32.mrb[0].mxu0
    %v4695 = vadd.f32 0.0, %v4694
    %v4696 = vpop.f32.mrb[0].mxu0
    %v4697 = vpop.f32.mrb[0].mxu0
    %v4698 = vadd.f32 0.0, %v4697
    %v4699 = vpop.f32.mrb[0].mxu0
    %4700 = vmatprep.mubr.bf16.mxu0 0
    %4701 = vmatmul.mubr.bf16.gmra.mrb[0].mxu0 %v4581
    %v4702 = vpop.f32.mrb[0].mxu0
    %v4703 = vadd.f32 0.0, %v4702
    %v4704 = vpop.f32.mrb[0].mxu0
    %v4705 = vpop.f32.mrb[0].mxu0
    %v4706 = vadd.f32 0.0, %v4705
    %v4707 = vpop.f32.mrb[0].mxu0
    %4708 = vmatprep.mubr.bf16.mxu0 0
    %4709 = vmatmul.mubr.bf16.gmra.mrb[0].mxu0 %v4584
    %v4710 = vpop.f32.mrb[0].mxu0
    %v4711 = vadd.f32 0.0, %v4710
    %v4712 = vpop.f32.mrb[0].mxu0
    %v4713 = vpop.f32.mrb[0].mxu0
    %v4714 = vadd.f32 0.0, %v4713
    %v4715 = vpop.f32.mrb[0].mxu0
    %4716 = vmatprep.mubr.bf16.mxu0 0
    %4717 = vmatmul.mubr.bf16.gmra.mrb[0].mxu0 %v4587
    %v4718 = vpop.f32.mrb[0].mxu0
    %v4719 = vadd.f32 0.0, %v4718
    %v4720 = vpop.f32.mrb[0].mxu0
    %v4721 = vpop.f32.mrb[0].mxu0
    %v4722 = vadd.f32 0.0, %v4721
    %v4723 = vpop.f32.mrb[0].mxu0
    %4724 = vmatprep.mubr.bf16.mxu0 0
    %4725 = vmatmul.mubr.bf16.gmra.mrb[0].mxu0 %v4590
    %v4726 = vpop.f32.mrb[0].mxu0
    %v4727 = vadd.f32 0.0, %v4726
    %v4728 = vpop.f32.mrb[0].mxu0
    %v4729 = vpop.f32.mrb[0].mxu0
    %v4730 = vadd.f32 0.0, %v4729
    %v4731 = vpop.f32.mrb[0].mxu0
    %4732 = vmatprep.mubr.bf16.mxu0 0
    %4733 = vmatmul.mubr.bf16.gmra.mrb[0].mxu0 %v4593
    %v4734 = vpop.f32.mrb[0].mxu0
    %v4735 = vadd.f32 0.0, %v4734
    %v4736 = vpop.f32.mrb[0].mxu0
    %v4737 = vpop.f32.mrb[0].mxu0
    %v4738 = vadd.f32 0.0, %v4737
    %v4739 = vpop.f32.mrb[0].mxu0
    %4740 = vmatprep.mubr.bf16.mxu0 0
    %4741 = vmatmul.mubr.bf16.gmra.mrb[0].mxu0 %v4596
    %v4742 = vpop.f32.mrb[0].mxu0
    %v4743 = vadd.f32 0.0, %v4742
    %v4744 = vpop.f32.mrb[0].mxu0
    %v4745 = vpop.f32.mrb[0].mxu0
    %v4746 = vadd.f32 0.0, %v4745
    %v4747 = vpop.f32.mrb[0].mxu0
    %4748 = vmatprep.mubr.bf16.mxu0 0
    %4749 = vmatmul.mubr.bf16.gmra.mrb[0].mxu0 %v4599
    %v4750 = vpop.f32.mrb[0].mxu0
    %v4751 = vadd.f32 0.0, %v4750
    %v4752 = vpop.f32.mrb[0].mxu0
    %v4753 = vpop.f32.mrb[0].mxu0
    %v4754 = vadd.f32 0.0, %v4753
    %v4755 = vpop.f32.mrb[0].mxu0
    %4756 = vmatprep.mubr.bf16.mxu0 0
    %4757 = vmatmul.mubr.bf16.gmra.mrb[0].mxu0 %v4602
    %v4758 = vpop.f32.mrb[0].mxu0
    %v4759 = vadd.f32 0.0, %v4758
    %v4760 = vpop.f32.mrb[0].mxu0
    %v4761 = vpop.f32.mrb[0].mxu0
    %v4762 = vadd.f32 0.0, %v4761
    %v4763 = vpop.f32.mrb[0].mxu0
    %4764 = vdwg.mxu0
    %v4765 = vpack.c.bf16 %v4642, %v4639
    %v4766 = vpack.c.bf16 %v4650, %v4647
    %v4767 = vpack.c.bf16 %v4658, %v4655
    %v4768 = vpack.c.bf16 %v4666, %v4663
    %v4769 = vpack.c.bf16 %v4674, %v4671
    %v4770 = vpack.c.bf16 %v4682, %v4679
    %v4771 = vpack.c.bf16 %v4690, %v4687
    %v4772 = vpack.c.bf16 %v4698, %v4695
    %v4773 = vpack.c.bf16 %v4706, %v4703
    %v4774 = vpack.c.bf16 %v4714, %v4711
    %v4775 = vpack.c.bf16 %v4722, %v4719
    %v4776 = vpack.c.bf16 %v4730, %v4727
    %v4777 = vpack.c.bf16 %v4738, %v4735
    %v4778 = vpack.c.bf16 %v4746, %v4743
    %v4779 = vpack.c.bf16 %v4754, %v4751
    %v4780 = vpack.c.bf16 %v4762, %v4759
    %4781 = vxpose.xlu0.c.b16.start [1/8] %v4440, 128
    %4782 = vxpose.xlu0.c.b16.cont [2/8] %v4441, 128
    %4783 = vxpose.xlu0.c.b16.cont [3/8] %v4442, 128
    %4784 = vxpose.xlu0.c.b16.cont [4/8] %v4443, 128
    %4785 = vxpose.xlu0.c.b16.cont [5/8] 0, 128
    %4786 = vxpose.xlu0.c.b16.cont [6/8] 0, 128
    %4787 = vxpose.xlu0.c.b16.cont [7/8] 0, 128
    %4788 = vxpose.xlu0.c.b16.end [8/8] 0, 128
    %v4789 = vpop.trf.xlu0
    %v4790 = vpop.trf.xlu0
    %v4791 = vpop.trf.xlu0
    %v4792 = vpop.trf.xlu0
    %v4793 = vpop.trf.xlu0
    %v4794 = vpop.trf.xlu0
    %v4795 = vpop.trf.xlu0
    %v4796 = vpop.trf.xlu0
    %v4798 = vsel %vm619, %v4789, 0
    %4800 = vmatprep.subr.bf16.mxu0 %v4007
    %4801 = vmatpush1.bf16.msra.mxu0 %v4006
    %4802 = vmatprep.subr.bf16.mxu0 %v4009
    %4803 = vmatpush1.bf16.msra.mxu0 %v4008
    %4804 = vmatprep.subr.bf16.mxu0 %v4011
    %4805 = vmatpush1.bf16.msra.mxu0 %v4010
    %4806 = vmatprep.subr.bf16.mxu0 %v4013
    %4807 = vmatpush1.bf16.msra.mxu0 %v4012
    %4808 = vmatprep.subr.bf16.mxu0 0
    %4809 = vmatpush1.bf16.msra.mxu0 0
    %4810 = vmatprep.subr.bf16.mxu0 0
    %4811 = vmatpush1.bf16.msra.mxu0 0
    %4812 = vmatprep.subr.bf16.mxu0 0
    %4813 = vmatpush1.bf16.msra.mxu0 0
    %4814 = vmatprep.subr.bf16.mxu0 0
    %4815 = vmatpush1.bf16.msra.mxu0 0
    %4816 = vmatprep.subr.bf16.mxu0 0
    %4817 = vmatpush1.bf16.msra.mxu0 0
    %4818 = vmatprep.subr.bf16.mxu0 0
    %4819 = vmatpush1.bf16.msra.mxu0 0
    %4820 = vmatprep.subr.bf16.mxu0 0
    %4821 = vmatpush1.bf16.msra.mxu0 0
    %4822 = vmatprep.subr.bf16.mxu0 0
    %4823 = vmatpush1.bf16.msra.mxu0 0
    %4824 = vmatprep.subr.bf16.mxu0 0
    %4825 = vmatpush1.bf16.msra.mxu0 0
    %4826 = vmatprep.subr.bf16.mxu0 0
    %4827 = vmatpush1.bf16.msra.mxu0 0
    %4828 = vmatprep.subr.bf16.mxu0 0
    %4829 = vmatpush1.bf16.msra.mxu0 0
    %4830 = vmatprep.subr.bf16.mxu0 0
    %4831 = vmatpush1.bf16.msra.mxu0 0
    %4832 = vmatprep.mubr.bf16.mxu0 0
    %4833 = vmatmul.mubr.bf16.gmra.mrb[0].mxu0 %v4798
    %v4834 = vpop.f32.mrb[0].mxu0
    %v4835 = vadd.f32 0.0, %v4834
    %v4836 = vpop.f32.mrb[0].mxu0
    %v4837 = vadd.f32 0.0, %v4836
    %v4838 = vpop.f32.mrb[0].mxu0
    %v4839 = vpop.f32.mrb[0].mxu0
    %4840 = vdwg.mxu0
    %v4841 = vrot.slane %v4835, 4
    %v4842 = vmax.f32 %v4835, %v4841
    %v4843 = vrot.slane %v4842, 2
    %v4844 = vmax.f32 %v4842, %v4843
    %v4845 = vrot.slane %v4844, 1
    %v4846 = vmax.f32 %v4844, %v4845
    %v4847 = vrot.slane %v4837, 4
    %v4848 = vmax.f32 %v4837, %v4847
    %v4849 = vrot.slane %v4848, 2
    %v4850 = vmax.f32 %v4848, %v4849
    %v4851 = vrot.slane %v4850, 1
    %v4852 = vmax.f32 %v4850, %v4851
    %v4853 = vsub.f32 %v4835, %v4846
    %v4854 = vsub.f32 %v4837, %v4852
    %v4855 = vmul.f32 %v4853, 1.442695
    %v4856 = vpow.pop %v4855
    %v4857 = vmul.f32 %v4854, 1.442695
    %v4858 = vpow.pop %v4857
    %v4859 = vmul.f32 %v4856, %v1697
    %v4860 = vmul.f32 %v4858, %v1697
    %v4861 = vrot.slane %v4859, 4
    %v4862 = vadd.f32 %v4859, %v4861
    %v4863 = vrot.slane %v4862, 2
    %v4864 = vadd.f32 %v4862, %v4863
    %v4865 = vrot.slane %v4864, 1
    %v4866 = vadd.f32 %v4864, %v4865
    %v4867 = vrot.slane %v4860, 4
    %v4868 = vadd.f32 %v4860, %v4867
    %v4869 = vrot.slane %v4868, 2
    %v4870 = vadd.f32 %v4868, %v4869
    %v4871 = vrot.slane %v4870, 1
    %v4872 = vadd.f32 %v4870, %v4871
    %v4873 = vrcp.pop %v4866
    %v4874 = vrcp.pop %v4872
    %v4875 = vmul.f32 %v4859, %v4873
    %v4876 = vmul.f32 %v4860, %v4874
    %v4877 = vpack.c.bf16 %v4875, %v4875
    %v4878 = vpack.c.bf16 %v4876, %v4876
    %v4880 = vsel %vm1879, %v4765, 0
    %v4883 = vsel %vm1879, %v4766, 0
    %v4886 = vsel %vm1879, %v4767, 0
    %v4889 = vsel %vm1879, %v4768, 0
    %v4892 = vsel %vm1879, %v4769, 0
    %v4895 = vsel %vm1879, %v4770, 0
    %v4898 = vsel %vm1879, %v4771, 0
    %v4901 = vsel %vm1879, %v4772, 0
    %v4904 = vsel %vm1879, %v4773, 0
    %v4907 = vsel %vm1879, %v4774, 0
    %v4910 = vsel %vm1879, %v4775, 0
    %v4913 = vsel %vm1879, %v4776, 0
    %v4916 = vsel %vm1879, %v4777, 0
    %v4919 = vsel %vm1879, %v4778, 0
    %v4922 = vsel %vm1879, %v4779, 0
    %v4925 = vsel %vm1879, %v4780, 0
    %v4928 = vsel %vm1928, %v4877, 0
    %v4931 = vsel %vm1928, %v4878, 0
    %4933 = vmatprep.subr.bf16.mxu0 %v4931
    %4934 = vmatpush1.bf16.msra.mxu0 %v4928
    %4935 = vmatprep.subr.bf16.mxu0 0
    %4936 = vmatpush1.bf16.msra.mxu0 0
    %4937 = vmatprep.subr.bf16.mxu0 0
    %4938 = vmatpush1.bf16.msra.mxu0 0
    %4939 = vmatprep.subr.bf16.mxu0 0
    %4940 = vmatpush1.bf16.msra.mxu0 0
    %4941 = vmatprep.subr.bf16.mxu0 0
    %4942 = vmatpush1.bf16.msra.mxu0 0
    %4943 = vmatprep.subr.bf16.mxu0 0
    %4944 = vmatpush1.bf16.msra.mxu0 0
    %4945 = vmatprep.subr.bf16.mxu0 0
    %4946 = vmatpush1.bf16.msra.mxu0 0
    %4947 = vmatprep.subr.bf16.mxu0 0
    %4948 = vmatpush1.bf16.msra.mxu0 0
    %4949 = vmatprep.subr.bf16.mxu0 0
    %4950 = vmatpush1.bf16.msra.mxu0 0
    %4951 = vmatprep.subr.bf16.mxu0 0
    %4952 = vmatpush1.bf16.msra.mxu0 0
    %4953 = vmatprep.subr.bf16.mxu0 0
    %4954 = vmatpush1.bf16.msra.mxu0 0
    %4955 = vmatprep.subr.bf16.mxu0 0
    %4956 = vmatpush1.bf16.msra.mxu0 0
    %4957 = vmatprep.subr.bf16.mxu0 0
    %4958 = vmatpush1.bf16.msra.mxu0 0
    %4959 = vmatprep.subr.bf16.mxu0 0
    %4960 = vmatpush1.bf16.msra.mxu0 0
    %4961 = vmatprep.subr.bf16.mxu0 0
    %4962 = vmatpush1.bf16.msra.mxu0 0
    %4963 = vmatprep.subr.bf16.mxu0 0
    %4964 = vmatpush1.bf16.msra.mxu0 0
    %4965 = vmatprep.mubr.bf16.mxu0 0
    %4966 = vmatmul.mubr.bf16.gmra.mrb[0].mxu0 %v4880
    %v4967 = vpop.f32.mrb[0].mxu0
    %v4968 = vadd.f32 %v1722, %v4967
    %v4969 = vpop.f32.mrb[0].mxu0
    %v4970 = vadd.f32 %v1722, %v4969
    %v4971 = vpop.f32.mrb[0].mxu0
    %v4972 = vadd.f32 %v1727, %v4971
    %v4973 = vpop.f32.mrb[0].mxu0
    %v4974 = vadd.f32 %v1727, %v4973
    %4975 = vmatprep.mubr.bf16.mxu0 0
    %4976 = vmatmul.mubr.bf16.gmra.mrb[0].mxu0 %v4883
    %v4977 = vpop.f32.mrb[0].mxu0
    %v4978 = vadd.f32 %v1732, %v4977
    %v4979 = vpop.f32.mrb[0].mxu0
    %v4980 = vadd.f32 %v1732, %v4979
    %v4981 = vpop.f32.mrb[0].mxu0
    %v4982 = vadd.f32 %v1737, %v4981
    %v4983 = vpop.f32.mrb[0].mxu0
    %v4984 = vadd.f32 %v1737, %v4983
    %4985 = vmatprep.mubr.bf16.mxu0 0
    %4986 = vmatmul.mubr.bf16.gmra.mrb[0].mxu0 %v4886
    %v4987 = vpop.f32.mrb[0].mxu0
    %v4988 = vadd.f32 %v1742, %v4987
    %v4989 = vpop.f32.mrb[0].mxu0
    %v4990 = vadd.f32 %v1742, %v4989
    %v4991 = vpop.f32.mrb[0].mxu0
    %v4992 = vadd.f32 %v1747, %v4991
    %v4993 = vpop.f32.mrb[0].mxu0
    %v4994 = vadd.f32 %v1747, %v4993
    %4995 = vmatprep.mubr.bf16.mxu0 0
    %4996 = vmatmul.mubr.bf16.gmra.mrb[0].mxu0 %v4889
    %v4997 = vpop.f32.mrb[0].mxu0
    %v4998 = vadd.f32 %v1752, %v4997
    %v4999 = vpop.f32.mrb[0].mxu0
    %v5000 = vadd.f32 %v1752, %v4999
    %v5001 = vpop.f32.mrb[0].mxu0
    %v5002 = vadd.f32 %v1757, %v5001
    %v5003 = vpop.f32.mrb[0].mxu0
    %v5004 = vadd.f32 %v1757, %v5003
    %5005 = vmatprep.mubr.bf16.mxu0 0
    %5006 = vmatmul.mubr.bf16.gmra.mrb[0].mxu0 %v4892
    %v5007 = vpop.f32.mrb[0].mxu0
    %v5008 = vadd.f32 %v1762, %v5007
    %v5009 = vpop.f32.mrb[0].mxu0
    %v5010 = vadd.f32 %v1762, %v5009
    %v5011 = vpop.f32.mrb[0].mxu0
    %v5012 = vadd.f32 %v1767, %v5011
    %v5013 = vpop.f32.mrb[0].mxu0
    %v5014 = vadd.f32 %v1767, %v5013
    %5015 = vmatprep.mubr.bf16.mxu0 0
    %5016 = vmatmul.mubr.bf16.gmra.mrb[0].mxu0 %v4895
    %v5017 = vpop.f32.mrb[0].mxu0
    %v5018 = vadd.f32 %v1772, %v5017
    %v5019 = vpop.f32.mrb[0].mxu0
    %v5020 = vadd.f32 %v1772, %v5019
    %v5021 = vpop.f32.mrb[0].mxu0
    %v5022 = vadd.f32 %v1777, %v5021
    %v5023 = vpop.f32.mrb[0].mxu0
    %v5024 = vadd.f32 %v1777, %v5023
    %5025 = vmatprep.mubr.bf16.mxu0 0
    %5026 = vmatmul.mubr.bf16.gmra.mrb[0].mxu0 %v4898
    %v5027 = vpop.f32.mrb[0].mxu0
    %v5028 = vadd.f32 %v1782, %v5027
    %v5029 = vpop.f32.mrb[0].mxu0
    %v5030 = vadd.f32 %v1782, %v5029
    %v5031 = vpop.f32.mrb[0].mxu0
    %v5032 = vadd.f32 %v1787, %v5031
    %v5033 = vpop.f32.mrb[0].mxu0
    %v5034 = vadd.f32 %v1787, %v5033
    %5035 = vmatprep.mubr.bf16.mxu0 0
    %5036 = vmatmul.mubr.bf16.gmra.mrb[0].mxu0 %v4901
    %v5037 = vpop.f32.mrb[0].mxu0
    %v5038 = vadd.f32 %v1792, %v5037
    %v5039 = vpop.f32.mrb[0].mxu0
    %v5040 = vadd.f32 %v1792, %v5039
    %v5041 = vpop.f32.mrb[0].mxu0
    %v5042 = vadd.f32 %v1797, %v5041
    %v5043 = vpop.f32.mrb[0].mxu0
    %v5044 = vadd.f32 %v1797, %v5043
    %5045 = vmatprep.mubr.bf16.mxu0 0
    %5046 = vmatmul.mubr.bf16.gmra.mrb[0].mxu0 %v4904
    %v5047 = vpop.f32.mrb[0].mxu0
    %v5048 = vadd.f32 %v1802, %v5047
    %v5049 = vpop.f32.mrb[0].mxu0
    %v5050 = vadd.f32 %v1802, %v5049
    %v5051 = vpop.f32.mrb[0].mxu0
    %v5052 = vadd.f32 %v1807, %v5051
    %v5053 = vpop.f32.mrb[0].mxu0
    %v5054 = vadd.f32 %v1807, %v5053
    %5055 = vmatprep.mubr.bf16.mxu0 0
    %5056 = vmatmul.mubr.bf16.gmra.mrb[0].mxu0 %v4907
    %v5057 = vpop.f32.mrb[0].mxu0
    %v5058 = vadd.f32 %v1812, %v5057
    %v5059 = vpop.f32.mrb[0].mxu0
    %v5060 = vadd.f32 %v1812, %v5059
    %v5061 = vpop.f32.mrb[0].mxu0
    %v5062 = vadd.f32 %v1817, %v5061
    %v5063 = vpop.f32.mrb[0].mxu0
    %v5064 = vadd.f32 %v1817, %v5063
    %5065 = vmatprep.mubr.bf16.mxu0 0
    %5066 = vmatmul.mubr.bf16.gmra.mrb[0].mxu0 %v4910
    %v5067 = vpop.f32.mrb[0].mxu0
    %v5068 = vadd.f32 %v1822, %v5067
    %v5069 = vpop.f32.mrb[0].mxu0
    %v5070 = vadd.f32 %v1822, %v5069
    %v5071 = vpop.f32.mrb[0].mxu0
    %v5072 = vadd.f32 %v1827, %v5071
    %v5073 = vpop.f32.mrb[0].mxu0
    %v5074 = vadd.f32 %v1827, %v5073
    %5075 = vmatprep.mubr.bf16.mxu0 0
    %5076 = vmatmul.mubr.bf16.gmra.mrb[0].mxu0 %v4913
    %v5077 = vpop.f32.mrb[0].mxu0
    %v5078 = vadd.f32 %v1832, %v5077
    %v5079 = vpop.f32.mrb[0].mxu0
    %v5080 = vadd.f32 %v1832, %v5079
    %v5081 = vpop.f32.mrb[0].mxu0
    %v5082 = vadd.f32 %v1837, %v5081
    %v5083 = vpop.f32.mrb[0].mxu0
    %v5084 = vadd.f32 %v1837, %v5083
    %5085 = vmatprep.mubr.bf16.mxu0 0
    %5086 = vmatmul.mubr.bf16.gmra.mrb[0].mxu0 %v4916
    %v5087 = vpop.f32.mrb[0].mxu0
    %v5088 = vadd.f32 %v1842, %v5087
    %v5089 = vpop.f32.mrb[0].mxu0
    %v5090 = vadd.f32 %v1842, %v5089
    %v5091 = vpop.f32.mrb[0].mxu0
    %v5092 = vadd.f32 %v1847, %v5091
    %v5093 = vpop.f32.mrb[0].mxu0
    %v5094 = vadd.f32 %v1847, %v5093
    %5095 = vmatprep.mubr.bf16.mxu0 0
    %5096 = vmatmul.mubr.bf16.gmra.mrb[0].mxu0 %v4919
    %v5097 = vpop.f32.mrb[0].mxu0
    %v5098 = vadd.f32 %v1852, %v5097
    %v5099 = vpop.f32.mrb[0].mxu0
    %v5100 = vadd.f32 %v1852, %v5099
    %v5101 = vpop.f32.mrb[0].mxu0
    %v5102 = vadd.f32 %v1857, %v5101
    %v5103 = vpop.f32.mrb[0].mxu0
    %v5104 = vadd.f32 %v1857, %v5103
    %5105 = vmatprep.mubr.bf16.mxu0 0
    %5106 = vmatmul.mubr.bf16.gmra.mrb[0].mxu0 %v4922
    %v5107 = vpop.f32.mrb[0].mxu0
    %v5108 = vadd.f32 %v1862, %v5107
    %v5109 = vpop.f32.mrb[0].mxu0
    %v5110 = vadd.f32 %v1862, %v5109
    %v5111 = vpop.f32.mrb[0].mxu0
    %v5112 = vadd.f32 %v1867, %v5111
    %v5113 = vpop.f32.mrb[0].mxu0
    %v5114 = vadd.f32 %v1867, %v5113
    %5115 = vmatprep.mubr.bf16.mxu0 0
    %5116 = vmatmul.mubr.bf16.gmra.mrb[0].mxu0 %v4925
    %v5117 = vpop.f32.mrb[0].mxu0
    %v5118 = vadd.f32 %v1872, %v5117
    %v5119 = vpop.f32.mrb[0].mxu0
    %v5120 = vadd.f32 %v1872, %v5119
    %v5121 = vpop.f32.mrb[0].mxu0
    %v5122 = vadd.f32 %v1877, %v5121
    %v5123 = vpop.f32.mrb[0].mxu0
    %v5124 = vadd.f32 %v1877, %v5123
    %5125 = vdwg.mxu0
    %v5126 = vmax.f32 %v4968, 0.0
    %v5127 = vmax.f32 %v4970, 0.0
    %v5128 = vmax.f32 %v4972, 0.0
    %v5129 = vmax.f32 %v4974, 0.0
    %v5130 = vmax.f32 %v4978, 0.0
    %v5131 = vmax.f32 %v4980, 0.0
    %v5132 = vmax.f32 %v4982, 0.0
    %v5133 = vmax.f32 %v4984, 0.0
    %v5134 = vmax.f32 %v4988, 0.0
    %v5135 = vmax.f32 %v4990, 0.0
    %v5136 = vmax.f32 %v4992, 0.0
    %v5137 = vmax.f32 %v4994, 0.0
    %v5138 = vmax.f32 %v4998, 0.0
    %v5139 = vmax.f32 %v5000, 0.0
    %v5140 = vmax.f32 %v5002, 0.0
    %v5141 = vmax.f32 %v5004, 0.0
    %v5142 = vmax.f32 %v5008, 0.0
    %v5143 = vmax.f32 %v5010, 0.0
    %v5144 = vmax.f32 %v5012, 0.0
    %v5145 = vmax.f32 %v5014, 0.0
    %v5146 = vmax.f32 %v5018, 0.0
    %v5147 = vmax.f32 %v5020, 0.0
    %v5148 = vmax.f32 %v5022, 0.0
    %v5149 = vmax.f32 %v5024, 0.0
    %v5150 = vmax.f32 %v5028, 0.0
    %v5151 = vmax.f32 %v5030, 0.0
    %v5152 = vmax.f32 %v5032, 0.0
    %v5153 = vmax.f32 %v5034, 0.0
    %v5154 = vmax.f32 %v5038, 0.0
    %v5155 = vmax.f32 %v5040, 0.0
    %v5156 = vmax.f32 %v5042, 0.0
    %v5157 = vmax.f32 %v5044, 0.0
    %v5158 = vmax.f32 %v5048, 0.0
    %v5159 = vmax.f32 %v5050, 0.0
    %v5160 = vmax.f32 %v5052, 0.0
    %v5161 = vmax.f32 %v5054, 0.0
    %v5162 = vmax.f32 %v5058, 0.0
    %v5163 = vmax.f32 %v5060, 0.0
    %v5164 = vmax.f32 %v5062, 0.0
    %v5165 = vmax.f32 %v5064, 0.0
    %v5166 = vmax.f32 %v5068, 0.0
    %v5167 = vmax.f32 %v5070, 0.0
    %v5168 = vmax.f32 %v5072, 0.0
    %v5169 = vmax.f32 %v5074, 0.0
    %v5170 = vmax.f32 %v5078, 0.0
    %v5171 = vmax.f32 %v5080, 0.0
    %v5172 = vmax.f32 %v5082, 0.0
    %v5173 = vmax.f32 %v5084, 0.0
    %v5174 = vmax.f32 %v5088, 0.0
    %v5175 = vmax.f32 %v5090, 0.0
    %v5176 = vmax.f32 %v5092, 0.0
    %v5177 = vmax.f32 %v5094, 0.0
    %v5178 = vmax.f32 %v5098, 0.0
    %v5179 = vmax.f32 %v5100, 0.0
    %v5180 = vmax.f32 %v5102, 0.0
    %v5181 = vmax.f32 %v5104, 0.0
    %v5182 = vmax.f32 %v5108, 0.0
    %v5183 = vmax.f32 %v5110, 0.0
    %v5184 = vmax.f32 %v5112, 0.0
    %v5185 = vmax.f32 %v5114, 0.0
    %v5186 = vmax.f32 %v5118, 0.0
    %v5187 = vmax.f32 %v5120, 0.0
    %v5188 = vmax.f32 %v5122, 0.0
    %v5189 = vmax.f32 %v5124, 0.0
    %v5190 = vpack.c.bf16 %v5128, %v5126
    %v5191 = vpack.c.bf16 %v5129, %v5127
    %v5192 = vpack.c.bf16 %v5132, %v5130
    %v5193 = vpack.c.bf16 %v5133, %v5131
    %v5194 = vpack.c.bf16 %v5136, %v5134
    %v5195 = vpack.c.bf16 %v5137, %v5135
    %v5196 = vpack.c.bf16 %v5140, %v5138
    %v5197 = vpack.c.bf16 %v5141, %v5139
    %v5198 = vpack.c.bf16 %v5144, %v5142
    %v5199 = vpack.c.bf16 %v5145, %v5143
    %v5200 = vpack.c.bf16 %v5148, %v5146
    %v5201 = vpack.c.bf16 %v5149, %v5147
    %v5202 = vpack.c.bf16 %v5152, %v5150
    %v5203 = vpack.c.bf16 %v5153, %v5151
    %v5204 = vpack.c.bf16 %v5156, %v5154
    %v5205 = vpack.c.bf16 %v5157, %v5155
    %v5206 = vpack.c.bf16 %v5160, %v5158
    %v5207 = vpack.c.bf16 %v5161, %v5159
    %v5208 = vpack.c.bf16 %v5164, %v5162
    %v5209 = vpack.c.bf16 %v5165, %v5163
    %v5210 = vpack.c.bf16 %v5168, %v5166
    %v5211 = vpack.c.bf16 %v5169, %v5167
    %v5212 = vpack.c.bf16 %v5172, %v5170
    %v5213 = vpack.c.bf16 %v5173, %v5171
    %v5214 = vpack.c.bf16 %v5176, %v5174
    %v5215 = vpack.c.bf16 %v5177, %v5175
    %v5216 = vpack.c.bf16 %v5180, %v5178
    %v5217 = vpack.c.bf16 %v5181, %v5179
    %v5218 = vpack.c.bf16 %v5184, %v5182
    %v5219 = vpack.c.bf16 %v5185, %v5183
    %v5220 = vpack.c.bf16 %v5188, %v5186
    %v5221 = vpack.c.bf16 %v5189, %v5187
    %v5222 = vld [vmem:[%s7] sm:$0xff]
    %v5223 = vld [vmem:[%s7 + $0x8] sm:$0xff]
    %v5224 = vld [vmem:[%s7 + $0x10] sm:$0xff]
    %v5225 = vld [vmem:[%s7 + $0x18] sm:$0xff]
    %v5226 = vld [vmem:[%s7 + $0x20] sm:$0xff]
    %v5227 = vld [vmem:[%s7 + $0x28] sm:$0xff]
    %v5228 = vld [vmem:[%s7 + $0x30] sm:$0xff]
    %v5229 = vld [vmem:[%s7 + $0x38] sm:$0xff]
    %v5230 = vld [vmem:[%s7 + $0x40] sm:$0xff]
    %v5231 = vld [vmem:[%s7 + $0x48] sm:$0xff]
    %v5232 = vld [vmem:[%s7 + $0x50] sm:$0xff]
    %v5233 = vld [vmem:[%s7 + $0x58] sm:$0xff]
    %v5234 = vld [vmem:[%s7 + $0x60] sm:$0xff]
    %v5235 = vld [vmem:[%s7 + $0x68] sm:$0xff]
    %v5236 = vld [vmem:[%s7 + $0x70] sm:$0xff]
    %v5237 = vld [vmem:[%s7 + $0x78] sm:$0xff]
    %v5238 = vld [vmem:[%s7 + $0x80] sm:$0xff]
    %v5239 = vld [vmem:[%s7 + $0x88] sm:$0xff]
    %v5240 = vld [vmem:[%s7 + $0x90] sm:$0xff]
    %v5241 = vld [vmem:[%s7 + $0x98] sm:$0xff]
    %v5242 = vld [vmem:[%s7 + $0xa0] sm:$0xff]
    %v5243 = vld [vmem:[%s7 + $0xa8] sm:$0xff]
    %v5244 = vld [vmem:[%s7 + $0xb0] sm:$0xff]
    %v5245 = vld [vmem:[%s7 + $0xb8] sm:$0xff]
    %v5246 = vld [vmem:[%s7 + $0xc0] sm:$0xff]
    %v5247 = vld [vmem:[%s7 + $0xc8] sm:$0xff]
    %v5248 = vld [vmem:[%s7 + $0xd0] sm:$0xff]
    %v5249 = vld [vmem:[%s7 + $0xd8] sm:$0xff]
    %v5250 = vld [vmem:[%s7 + $0xe0] sm:$0xff]
    %v5251 = vld [vmem:[%s7 + $0xe8] sm:$0xff]
    %v5252 = vld [vmem:[%s7 + $0xf0] sm:$0xff]
    %v5253 = vld [vmem:[%s7 + $0xf8] sm:$0xff]
    %v5254 = vld [vmem:[%s8] sm:$0xff]
    %v5255 = vld [vmem:[%s8 + $0x8] sm:$0xff]
    %v5256 = vld [vmem:[%s8 + $0x10] sm:$0xff]
    %v5257 = vld [vmem:[%s8 + $0x18] sm:$0xff]
    %v5258 = vld [vmem:[%s8 + $0x20] sm:$0xff]
    %v5259 = vld [vmem:[%s8 + $0x28] sm:$0xff]
    %v5260 = vld [vmem:[%s8 + $0x30] sm:$0xff]
    %v5261 = vld [vmem:[%s8 + $0x38] sm:$0xff]
    %v5262 = vld [vmem:[%s8 + $0x40] sm:$0xff]
    %v5263 = vld [vmem:[%s8 + $0x48] sm:$0xff]
    %v5264 = vld [vmem:[%s8 + $0x50] sm:$0xff]
    %v5265 = vld [vmem:[%s8 + $0x58] sm:$0xff]
    %v5266 = vld [vmem:[%s8 + $0x60] sm:$0xff]
    %v5267 = vld [vmem:[%s8 + $0x68] sm:$0xff]
    %v5268 = vld [vmem:[%s8 + $0x70] sm:$0xff]
    %v5269 = vld [vmem:[%s8 + $0x78] sm:$0xff]
    %v5270 = vld [vmem:[%s8 + $0x80] sm:$0xff]
    %v5271 = vld [vmem:[%s8 + $0x88] sm:$0xff]
    %v5272 = vld [vmem:[%s8 + $0x90] sm:$0xff]
    %v5273 = vld [vmem:[%s8 + $0x98] sm:$0xff]
    %v5274 = vld [vmem:[%s8 + $0xa0] sm:$0xff]
    %v5275 = vld [vmem:[%s8 + $0xa8] sm:$0xff]
    %v5276 = vld [vmem:[%s8 + $0xb0] sm:$0xff]
    %v5277 = vld [vmem:[%s8 + $0xb8] sm:$0xff]
    %v5278 = vld [vmem:[%s8 + $0xc0] sm:$0xff]
    %v5279 = vld [vmem:[%s8 + $0xc8] sm:$0xff]
    %v5280 = vld [vmem:[%s8 + $0xd0] sm:$0xff]
    %v5281 = vld [vmem:[%s8 + $0xd8] sm:$0xff]
    %v5282 = vld [vmem:[%s8 + $0xe0] sm:$0xff]
    %v5283 = vld [vmem:[%s8 + $0xe8] sm:$0xff]
    %v5284 = vld [vmem:[%s8 + $0xf0] sm:$0xff]
    %v5285 = vld [vmem:[%s8 + $0xf8] sm:$0xff]
    %v5318 = vunpack.c.l.b16 %v5254
    %v5319 = vunpack.c.h.b16 %v5254
    %v5320 = vunpack.c.l.b16 %v5255
    %v5321 = vunpack.c.h.b16 %v5255
    %v5322 = vunpack.c.l.b16 %v5256
    %v5323 = vunpack.c.h.b16 %v5256
    %v5324 = vunpack.c.l.b16 %v5257
    %v5325 = vunpack.c.h.b16 %v5257
    %v5326 = vunpack.c.l.b16 %v5258
    %v5327 = vunpack.c.h.b16 %v5258
    %v5328 = vunpack.c.l.b16 %v5259
    %v5329 = vunpack.c.h.b16 %v5259
    %v5330 = vunpack.c.l.b16 %v5260
    %v5331 = vunpack.c.h.b16 %v5260
    %v5332 = vunpack.c.l.b16 %v5261
    %v5333 = vunpack.c.h.b16 %v5261
    %v5334 = vunpack.c.l.b16 %v5262
    %v5335 = vunpack.c.h.b16 %v5262
    %v5336 = vunpack.c.l.b16 %v5263
    %v5337 = vunpack.c.h.b16 %v5263
    %v5338 = vunpack.c.l.b16 %v5264
    %v5339 = vunpack.c.h.b16 %v5264
    %v5340 = vunpack.c.l.b16 %v5265
    %v5341 = vunpack.c.h.b16 %v5265
    %v5342 = vunpack.c.l.b16 %v5266
    %v5343 = vunpack.c.h.b16 %v5266
    %v5344 = vunpack.c.l.b16 %v5267
    %v5345 = vunpack.c.h.b16 %v5267
    %v5346 = vunpack.c.l.b16 %v5268
    %v5347 = vunpack.c.h.b16 %v5268
    %v5348 = vunpack.c.l.b16 %v5269
    %v5349 = vunpack.c.h.b16 %v5269
    %v5350 = vunpack.c.l.b16 %v5270
    %v5351 = vunpack.c.h.b16 %v5270
    %v5352 = vunpack.c.l.b16 %v5271
    %v5353 = vunpack.c.h.b16 %v5271
    %v5354 = vunpack.c.l.b16 %v5272
    %v5355 = vunpack.c.h.b16 %v5272
    %v5356 = vunpack.c.l.b16 %v5273
    %v5357 = vunpack.c.h.b16 %v5273
    %v5358 = vunpack.c.l.b16 %v5274
    %v5359 = vunpack.c.h.b16 %v5274
    %v5360 = vunpack.c.l.b16 %v5275
    %v5361 = vunpack.c.h.b16 %v5275
    %v5362 = vunpack.c.l.b16 %v5276
    %v5363 = vunpack.c.h.b16 %v5276
    %v5364 = vunpack.c.l.b16 %v5277
    %v5365 = vunpack.c.h.b16 %v5277
    %v5366 = vunpack.c.l.b16 %v5278
    %v5367 = vunpack.c.h.b16 %v5278
    %v5368 = vunpack.c.l.b16 %v5279
    %v5369 = vunpack.c.h.b16 %v5279
    %v5370 = vunpack.c.l.b16 %v5280
    %v5371 = vunpack.c.h.b16 %v5280
    %v5372 = vunpack.c.l.b16 %v5281
    %v5373 = vunpack.c.h.b16 %v5281
    %v5374 = vunpack.c.l.b16 %v5282
    %v5375 = vunpack.c.h.b16 %v5282
    %v5376 = vunpack.c.l.b16 %v5283
    %v5377 = vunpack.c.h.b16 %v5283
    %v5378 = vunpack.c.l.b16 %v5284
    %v5379 = vunpack.c.h.b16 %v5284
    %v5380 = vunpack.c.l.b16 %v5285
    %v5381 = vunpack.c.h.b16 %v5285
    %v5382 = vpack.c.b16 %v5320, %v5318
    %v5383 = vpack.c.b16 %v5321, %v5319
    %v5384 = vpack.c.b16 %v5324, %v5322
    %v5385 = vpack.c.b16 %v5325, %v5323
    %v5386 = vpack.c.b16 %v5328, %v5326
    %v5387 = vpack.c.b16 %v5329, %v5327
    %v5388 = vpack.c.b16 %v5332, %v5330
    %v5389 = vpack.c.b16 %v5333, %v5331
    %v5390 = vpack.c.b16 %v5336, %v5334
    %v5391 = vpack.c.b16 %v5337, %v5335
    %v5392 = vpack.c.b16 %v5340, %v5338
    %v5393 = vpack.c.b16 %v5341, %v5339
    %v5394 = vpack.c.b16 %v5344, %v5342
    %v5395 = vpack.c.b16 %v5345, %v5343
    %v5396 = vpack.c.b16 %v5348, %v5346
    %v5397 = vpack.c.b16 %v5349, %v5347
    %v5398 = vpack.c.b16 %v5352, %v5350
    %v5399 = vpack.c.b16 %v5353, %v5351
    %v5400 = vpack.c.b16 %v5356, %v5354
    %v5401 = vpack.c.b16 %v5357, %v5355
    %v5402 = vpack.c.b16 %v5360, %v5358
    %v5403 = vpack.c.b16 %v5361, %v5359
    %v5404 = vpack.c.b16 %v5364, %v5362
    %v5405 = vpack.c.b16 %v5365, %v5363
    %v5406 = vpack.c.b16 %v5368, %v5366
    %v5407 = vpack.c.b16 %v5369, %v5367
    %v5408 = vpack.c.b16 %v5372, %v5370
    %v5409 = vpack.c.b16 %v5373, %v5371
    %v5410 = vpack.c.b16 %v5376, %v5374
    %v5411 = vpack.c.b16 %v5377, %v5375
    %v5412 = vpack.c.b16 %v5380, %v5378
    %v5413 = vpack.c.b16 %v5381, %v5379
    %5446 = vmatprep.subr.bf16.mxu0 %v3717
    %5447 = vmatpush1.bf16.msra.mxu0 %v3716
    %5448 = vmatprep.subr.bf16.mxu0 %v3719
    %5449 = vmatpush1.bf16.msra.mxu0 %v3718
    %5450 = vmatprep.subr.bf16.mxu0 %v3721
    %5451 = vmatpush1.bf16.msra.mxu0 %v3720
    %5452 = vmatprep.subr.bf16.mxu0 %v3723
    %5453 = vmatpush1.bf16.msra.mxu0 %v3722
    %5454 = vmatprep.subr.bf16.mxu0 %v3725
    %5455 = vmatpush1.bf16.msra.mxu0 %v3724
    %5456 = vmatprep.subr.bf16.mxu0 %v3727
    %5457 = vmatpush1.bf16.msra.mxu0 %v3726
    %5458 = vmatprep.subr.bf16.mxu0 %v3729
    %5459 = vmatpush1.bf16.msra.mxu0 %v3728
    %5460 = vmatprep.subr.bf16.mxu0 %v3731
    %5461 = vmatpush1.bf16.msra.mxu0 %v3730
    %5462 = vmatprep.subr.bf16.mxu0 %v3733
    %5463 = vmatpush1.bf16.msra.mxu0 %v3732
    %5464 = vmatprep.subr.bf16.mxu0 %v3735
    %5465 = vmatpush1.bf16.msra.mxu0 %v3734
    %5466 = vmatprep.subr.bf16.mxu0 %v3737
    %5467 = vmatpush1.bf16.msra.mxu0 %v3736
    %5468 = vmatprep.subr.bf16.mxu0 %v3739
    %5469 = vmatpush1.bf16.msra.mxu0 %v3738
    %5470 = vmatprep.subr.bf16.mxu0 %v3741
    %5471 = vmatpush1.bf16.msra.mxu0 %v3740
    %5472 = vmatprep.subr.bf16.mxu0 %v3743
    %5473 = vmatpush1.bf16.msra.mxu0 %v3742
    %5474 = vmatprep.subr.bf16.mxu0 %v3745
    %5475 = vmatpush1.bf16.msra.mxu0 %v3744
    %5476 = vmatprep.subr.bf16.mxu0 %v3747
    %5477 = vmatpush1.bf16.msra.mxu0 %v3746
    %5478 = vmatprep.mubr.bf16.mxu0 %v5383
    %5479 = vmatmul.mubr.bf16.gmra.mrb[0].mxu0 %v5382
    %v5480 = vpop.f32.mrb[0].mxu0
    %v5481 = vadd.f32 0.0, %v5480
    %v5482 = vpop.f32.mrb[0].mxu0
    %v5483 = vadd.f32 0.0, %v5482
    %v5484 = vpop.f32.mrb[0].mxu0
    %v5485 = vadd.f32 0.0, %v5484
    %v5486 = vpop.f32.mrb[0].mxu0
    %v5487 = vadd.f32 0.0, %v5486
    %5488 = vmatprep.mubr.bf16.mxu0 %v5385
    %5489 = vmatmul.mubr.bf16.gmra.mrb[0].mxu0 %v5384
    %v5490 = vpop.f32.mrb[0].mxu0
    %v5491 = vadd.f32 0.0, %v5490
    %v5492 = vpop.f32.mrb[0].mxu0
    %v5493 = vadd.f32 0.0, %v5492
    %v5494 = vpop.f32.mrb[0].mxu0
    %v5495 = vadd.f32 0.0, %v5494
    %v5496 = vpop.f32.mrb[0].mxu0
    %v5497 = vadd.f32 0.0, %v5496
    %5498 = vmatprep.mubr.bf16.mxu0 %v5387
    %5499 = vmatmul.mubr.bf16.gmra.mrb[0].mxu0 %v5386
    %v5500 = vpop.f32.mrb[0].mxu0
    %v5501 = vadd.f32 0.0, %v5500
    %v5502 = vpop.f32.mrb[0].mxu0
    %v5503 = vadd.f32 0.0, %v5502
    %v5504 = vpop.f32.mrb[0].mxu0
    %v5505 = vadd.f32 0.0, %v5504
    %v5506 = vpop.f32.mrb[0].mxu0
    %v5507 = vadd.f32 0.0, %v5506
    %5508 = vmatprep.mubr.bf16.mxu0 %v5389
    %5509 = vmatmul.mubr.bf16.gmra.mrb[0].mxu0 %v5388
    %v5510 = vpop.f32.mrb[0].mxu0
    %v5511 = vadd.f32 0.0, %v5510
    %v5512 = vpop.f32.mrb[0].mxu0
    %v5513 = vadd.f32 0.0, %v5512
    %v5514 = vpop.f32.mrb[0].mxu0
    %v5515 = vadd.f32 0.0, %v5514
    %v5516 = vpop.f32.mrb[0].mxu0
    %v5517 = vadd.f32 0.0, %v5516
    %5518 = vmatprep.mubr.bf16.mxu0 %v5391
    %5519 = vmatmul.mubr.bf16.gmra.mrb[0].mxu0 %v5390
    %v5520 = vpop.f32.mrb[0].mxu0
    %v5521 = vadd.f32 0.0, %v5520
    %v5522 = vpop.f32.mrb[0].mxu0
    %v5523 = vadd.f32 0.0, %v5522
    %v5524 = vpop.f32.mrb[0].mxu0
    %v5525 = vadd.f32 0.0, %v5524
    %v5526 = vpop.f32.mrb[0].mxu0
    %v5527 = vadd.f32 0.0, %v5526
    %5528 = vmatprep.mubr.bf16.mxu0 %v5393
    %5529 = vmatmul.mubr.bf16.gmra.mrb[0].mxu0 %v5392
    %v5530 = vpop.f32.mrb[0].mxu0
    %v5531 = vadd.f32 0.0, %v5530
    %v5532 = vpop.f32.mrb[0].mxu0
    %v5533 = vadd.f32 0.0, %v5532
    %v5534 = vpop.f32.mrb[0].mxu0
    %v5535 = vadd.f32 0.0, %v5534
    %v5536 = vpop.f32.mrb[0].mxu0
    %v5537 = vadd.f32 0.0, %v5536
    %5538 = vmatprep.mubr.bf16.mxu0 %v5395
    %5539 = vmatmul.mubr.bf16.gmra.mrb[0].mxu0 %v5394
    %v5540 = vpop.f32.mrb[0].mxu0
    %v5541 = vadd.f32 0.0, %v5540
    %v5542 = vpop.f32.mrb[0].mxu0
    %v5543 = vadd.f32 0.0, %v5542
    %v5544 = vpop.f32.mrb[0].mxu0
    %v5545 = vadd.f32 0.0, %v5544
    %v5546 = vpop.f32.mrb[0].mxu0
    %v5547 = vadd.f32 0.0, %v5546
    %5548 = vmatprep.mubr.bf16.mxu0 %v5397
    %5549 = vmatmul.mubr.bf16.gmra.mrb[0].mxu0 %v5396
    %v5550 = vpop.f32.mrb[0].mxu0
    %v5551 = vadd.f32 0.0, %v5550
    %v5552 = vpop.f32.mrb[0].mxu0
    %v5553 = vadd.f32 0.0, %v5552
    %v5554 = vpop.f32.mrb[0].mxu0
    %v5555 = vadd.f32 0.0, %v5554
    %v5556 = vpop.f32.mrb[0].mxu0
    %v5557 = vadd.f32 0.0, %v5556
    %5558 = vmatprep.mubr.bf16.mxu0 %v5399
    %5559 = vmatmul.mubr.bf16.gmra.mrb[0].mxu0 %v5398
    %v5560 = vpop.f32.mrb[0].mxu0
    %v5561 = vadd.f32 0.0, %v5560
    %v5562 = vpop.f32.mrb[0].mxu0
    %v5563 = vadd.f32 0.0, %v5562
    %v5564 = vpop.f32.mrb[0].mxu0
    %v5565 = vadd.f32 0.0, %v5564
    %v5566 = vpop.f32.mrb[0].mxu0
    %v5567 = vadd.f32 0.0, %v5566
    %5568 = vmatprep.mubr.bf16.mxu0 %v5401
    %5569 = vmatmul.mubr.bf16.gmra.mrb[0].mxu0 %v5400
    %v5570 = vpop.f32.mrb[0].mxu0
    %v5571 = vadd.f32 0.0, %v5570
    %v5572 = vpop.f32.mrb[0].mxu0
    %v5573 = vadd.f32 0.0, %v5572
    %v5574 = vpop.f32.mrb[0].mxu0
    %v5575 = vadd.f32 0.0, %v5574
    %v5576 = vpop.f32.mrb[0].mxu0
    %v5577 = vadd.f32 0.0, %v5576
    %5578 = vmatprep.mubr.bf16.mxu0 %v5403
    %5579 = vmatmul.mubr.bf16.gmra.mrb[0].mxu0 %v5402
    %v5580 = vpop.f32.mrb[0].mxu0
    %v5581 = vadd.f32 0.0, %v5580
    %v5582 = vpop.f32.mrb[0].mxu0
    %v5583 = vadd.f32 0.0, %v5582
    %v5584 = vpop.f32.mrb[0].mxu0
    %v5585 = vadd.f32 0.0, %v5584
    %v5586 = vpop.f32.mrb[0].mxu0
    %v5587 = vadd.f32 0.0, %v5586
    %5588 = vmatprep.mubr.bf16.mxu0 %v5405
    %5589 = vmatmul.mubr.bf16.gmra.mrb[0].mxu0 %v5404
    %v5590 = vpop.f32.mrb[0].mxu0
    %v5591 = vadd.f32 0.0, %v5590
    %v5592 = vpop.f32.mrb[0].mxu0
    %v5593 = vadd.f32 0.0, %v5592
    %v5594 = vpop.f32.mrb[0].mxu0
    %v5595 = vadd.f32 0.0, %v5594
    %v5596 = vpop.f32.mrb[0].mxu0
    %v5597 = vadd.f32 0.0, %v5596
    %5598 = vmatprep.mubr.bf16.mxu0 %v5407
    %5599 = vmatmul.mubr.bf16.gmra.mrb[0].mxu0 %v5406
    %v5600 = vpop.f32.mrb[0].mxu0
    %v5601 = vadd.f32 0.0, %v5600
    %v5602 = vpop.f32.mrb[0].mxu0
    %v5603 = vadd.f32 0.0, %v5602
    %v5604 = vpop.f32.mrb[0].mxu0
    %v5605 = vadd.f32 0.0, %v5604
    %v5606 = vpop.f32.mrb[0].mxu0
    %v5607 = vadd.f32 0.0, %v5606
    %5608 = vmatprep.mubr.bf16.mxu0 %v5409
    %5609 = vmatmul.mubr.bf16.gmra.mrb[0].mxu0 %v5408
    %v5610 = vpop.f32.mrb[0].mxu0
    %v5611 = vadd.f32 0.0, %v5610
    %v5612 = vpop.f32.mrb[0].mxu0
    %v5613 = vadd.f32 0.0, %v5612
    %v5614 = vpop.f32.mrb[0].mxu0
    %v5615 = vadd.f32 0.0, %v5614
    %v5616 = vpop.f32.mrb[0].mxu0
    %v5617 = vadd.f32 0.0, %v5616
    %5618 = vmatprep.mubr.bf16.mxu0 %v5411
    %5619 = vmatmul.mubr.bf16.gmra.mrb[0].mxu0 %v5410
    %v5620 = vpop.f32.mrb[0].mxu0
    %v5621 = vadd.f32 0.0, %v5620
    %v5622 = vpop.f32.mrb[0].mxu0
    %v5623 = vadd.f32 0.0, %v5622
    %v5624 = vpop.f32.mrb[0].mxu0
    %v5625 = vadd.f32 0.0, %v5624
    %v5626 = vpop.f32.mrb[0].mxu0
    %v5627 = vadd.f32 0.0, %v5626
    %5628 = vmatprep.mubr.bf16.mxu0 %v5413
    %5629 = vmatmul.mubr.bf16.gmra.mrb[0].mxu0 %v5412
    %v5630 = vpop.f32.mrb[0].mxu0
    %v5631 = vadd.f32 0.0, %v5630
    %v5632 = vpop.f32.mrb[0].mxu0
    %v5633 = vadd.f32 0.0, %v5632
    %v5634 = vpop.f32.mrb[0].mxu0
    %v5635 = vadd.f32 0.0, %v5634
    %v5636 = vpop.f32.mrb[0].mxu0
    %v5637 = vadd.f32 0.0, %v5636
    %5638 = vdwg.mxu0
    %v5671 = vunpack.c.l.b16 %v5222
    %v5672 = vunpack.c.h.b16 %v5222
    %v5673 = vunpack.c.l.b16 %v5223
    %v5674 = vunpack.c.h.b16 %v5223
    %v5675 = vunpack.c.l.b16 %v5224
    %v5676 = vunpack.c.h.b16 %v5224
    %v5677 = vunpack.c.l.b16 %v5225
    %v5678 = vunpack.c.h.b16 %v5225
    %v5679 = vunpack.c.l.b16 %v5226
    %v5680 = vunpack.c.h.b16 %v5226
    %v5681 = vunpack.c.l.b16 %v5227
    %v5682 = vunpack.c.h.b16 %v5227
    %v5683 = vunpack.c.l.b16 %v5228
    %v5684 = vunpack.c.h.b16 %v5228
    %v5685 = vunpack.c.l.b16 %v5229
    %v5686 = vunpack.c.h.b16 %v5229
    %v5687 = vunpack.c.l.b16 %v5230
    %v5688 = vunpack.c.h.b16 %v5230
    %v5689 = vunpack.c.l.b16 %v5231
    %v5690 = vunpack.c.h.b16 %v5231
    %v5691 = vunpack.c.l.b16 %v5232
    %v5692 = vunpack.c.h.b16 %v5232
    %v5693 = vunpack.c.l.b16 %v5233
    %v5694 = vunpack.c.h.b16 %v5233
    %v5695 = vunpack.c.l.b16 %v5234
    %v5696 = vunpack.c.h.b16 %v5234
    %v5697 = vunpack.c.l.b16 %v5235
    %v5698 = vunpack.c.h.b16 %v5235
    %v5699 = vunpack.c.l.b16 %v5236
    %v5700 = vunpack.c.h.b16 %v5236
    %v5701 = vunpack.c.l.b16 %v5237
    %v5702 = vunpack.c.h.b16 %v5237
    %v5703 = vunpack.c.l.b16 %v5238
    %v5704 = vunpack.c.h.b16 %v5238
    %v5705 = vunpack.c.l.b16 %v5239
    %v5706 = vunpack.c.h.b16 %v5239
    %v5707 = vunpack.c.l.b16 %v5240
    %v5708 = vunpack.c.h.b16 %v5240
    %v5709 = vunpack.c.l.b16 %v5241
    %v5710 = vunpack.c.h.b16 %v5241
    %v5711 = vunpack.c.l.b16 %v5242
    %v5712 = vunpack.c.h.b16 %v5242
    %v5713 = vunpack.c.l.b16 %v5243
    %v5714 = vunpack.c.h.b16 %v5243
    %v5715 = vunpack.c.l.b16 %v5244
    %v5716 = vunpack.c.h.b16 %v5244
    %v5717 = vunpack.c.l.b16 %v5245
    %v5718 = vunpack.c.h.b16 %v5245
    %v5719 = vunpack.c.l.b16 %v5246
    %v5720 = vunpack.c.h.b16 %v5246
    %v5721 = vunpack.c.l.b16 %v5247
    %v5722 = vunpack.c.h.b16 %v5247
    %v5723 = vunpack.c.l.b16 %v5248
    %v5724 = vunpack.c.h.b16 %v5248
    %v5725 = vunpack.c.l.b16 %v5249
    %v5726 = vunpack.c.h.b16 %v5249
    %v5727 = vunpack.c.l.b16 %v5250
    %v5728 = vunpack.c.h.b16 %v5250
    %v5729 = vunpack.c.l.b16 %v5251
    %v5730 = vunpack.c.h.b16 %v5251
    %v5731 = vunpack.c.l.b16 %v5252
    %v5732 = vunpack.c.h.b16 %v5252
    %v5733 = vunpack.c.l.b16 %v5253
    %v5734 = vunpack.c.h.b16 %v5253
    %v5735 = vpack.c.b16 %v5673, %v5671
    %v5736 = vpack.c.b16 %v5674, %v5672
    %v5737 = vpack.c.b16 %v5677, %v5675
    %v5738 = vpack.c.b16 %v5678, %v5676
    %v5739 = vpack.c.b16 %v5681, %v5679
    %v5740 = vpack.c.b16 %v5682, %v5680
    %v5741 = vpack.c.b16 %v5685, %v5683
    %v5742 = vpack.c.b16 %v5686, %v5684
    %v5743 = vpack.c.b16 %v5689, %v5687
    %v5744 = vpack.c.b16 %v5690, %v5688
    %v5745 = vpack.c.b16 %v5693, %v5691
    %v5746 = vpack.c.b16 %v5694, %v5692
    %v5747 = vpack.c.b16 %v5697, %v5695
    %v5748 = vpack.c.b16 %v5698, %v5696
    %v5749 = vpack.c.b16 %v5701, %v5699
    %v5750 = vpack.c.b16 %v5702, %v5700
    %v5751 = vpack.c.b16 %v5705, %v5703
    %v5752 = vpack.c.b16 %v5706, %v5704
    %v5753 = vpack.c.b16 %v5709, %v5707
    %v5754 = vpack.c.b16 %v5710, %v5708
    %v5755 = vpack.c.b16 %v5713, %v5711
    %v5756 = vpack.c.b16 %v5714, %v5712
    %v5757 = vpack.c.b16 %v5717, %v5715
    %v5758 = vpack.c.b16 %v5718, %v5716
    %v5759 = vpack.c.b16 %v5721, %v5719
    %v5760 = vpack.c.b16 %v5722, %v5720
    %v5761 = vpack.c.b16 %v5725, %v5723
    %v5762 = vpack.c.b16 %v5726, %v5724
    %v5763 = vpack.c.b16 %v5729, %v5727
    %v5764 = vpack.c.b16 %v5730, %v5728
    %v5765 = vpack.c.b16 %v5733, %v5731
    %v5766 = vpack.c.b16 %v5734, %v5732
    %5799 = vmatprep.subr.bf16.mxu0 %v5191
    %5800 = vmatpush1.bf16.msra.mxu0 %v5190
    %5801 = vmatprep.subr.bf16.mxu0 %v5193
    %5802 = vmatpush1.bf16.msra.mxu0 %v5192
    %5803 = vmatprep.subr.bf16.mxu0 %v5195
    %5804 = vmatpush1.bf16.msra.mxu0 %v5194
    %5805 = vmatprep.subr.bf16.mxu0 %v5197
    %5806 = vmatpush1.bf16.msra.mxu0 %v5196
    %5807 = vmatprep.subr.bf16.mxu0 %v5199
    %5808 = vmatpush1.bf16.msra.mxu0 %v5198
    %5809 = vmatprep.subr.bf16.mxu0 %v5201
    %5810 = vmatpush1.bf16.msra.mxu0 %v5200
    %5811 = vmatprep.subr.bf16.mxu0 %v5203
    %5812 = vmatpush1.bf16.msra.mxu0 %v5202
    %5813 = vmatprep.subr.bf16.mxu0 %v5205
    %5814 = vmatpush1.bf16.msra.mxu0 %v5204
    %5815 = vmatprep.subr.bf16.mxu0 %v5207
    %5816 = vmatpush1.bf16.msra.mxu0 %v5206
    %5817 = vmatprep.subr.bf16.mxu0 %v5209
    %5818 = vmatpush1.bf16.msra.mxu0 %v5208
    %5819 = vmatprep.subr.bf16.mxu0 %v5211
    %5820 = vmatpush1.bf16.msra.mxu0 %v5210
    %5821 = vmatprep.subr.bf16.mxu0 %v5213
    %5822 = vmatpush1.bf16.msra.mxu0 %v5212
    %5823 = vmatprep.subr.bf16.mxu0 %v5215
    %5824 = vmatpush1.bf16.msra.mxu0 %v5214
    %5825 = vmatprep.subr.bf16.mxu0 %v5217
    %5826 = vmatpush1.bf16.msra.mxu0 %v5216
    %5827 = vmatprep.subr.bf16.mxu0 %v5219
    %5828 = vmatpush1.bf16.msra.mxu0 %v5218
    %5829 = vmatprep.subr.bf16.mxu0 %v5221
    %5830 = vmatpush1.bf16.msra.mxu0 %v5220
    %5831 = vmatprep.mubr.bf16.mxu0 %v5736
    %5832 = vmatmul.mubr.bf16.gmra.mrb[0].mxu0 %v5735
    %v5833 = vpop.f32.mrb[0].mxu0
    %v5834 = vadd.f32 %v5481, %v5833
    %v5835 = vpop.f32.mrb[0].mxu0
    %v5836 = vadd.f32 %v5483, %v5835
    %v5837 = vpop.f32.mrb[0].mxu0
    %v5838 = vadd.f32 %v5485, %v5837
    %v5839 = vpop.f32.mrb[0].mxu0
    %v5840 = vadd.f32 %v5487, %v5839
    %5841 = vmatprep.mubr.bf16.mxu0 %v5738
    %5842 = vmatmul.mubr.bf16.gmra.mrb[0].mxu0 %v5737
    %v5843 = vpop.f32.mrb[0].mxu0
    %v5844 = vadd.f32 %v5491, %v5843
    %v5845 = vpop.f32.mrb[0].mxu0
    %v5846 = vadd.f32 %v5493, %v5845
    %v5847 = vpop.f32.mrb[0].mxu0
    %v5848 = vadd.f32 %v5495, %v5847
    %v5849 = vpop.f32.mrb[0].mxu0
    %v5850 = vadd.f32 %v5497, %v5849
    %5851 = vmatprep.mubr.bf16.mxu0 %v5740
    %5852 = vmatmul.mubr.bf16.gmra.mrb[0].mxu0 %v5739
    %v5853 = vpop.f32.mrb[0].mxu0
    %v5854 = vadd.f32 %v5501, %v5853
    %v5855 = vpop.f32.mrb[0].mxu0
    %v5856 = vadd.f32 %v5503, %v5855
    %v5857 = vpop.f32.mrb[0].mxu0
    %v5858 = vadd.f32 %v5505, %v5857
    %v5859 = vpop.f32.mrb[0].mxu0
    %v5860 = vadd.f32 %v5507, %v5859
    %5861 = vmatprep.mubr.bf16.mxu0 %v5742
    %5862 = vmatmul.mubr.bf16.gmra.mrb[0].mxu0 %v5741
    %v5863 = vpop.f32.mrb[0].mxu0
    %v5864 = vadd.f32 %v5511, %v5863
    %v5865 = vpop.f32.mrb[0].mxu0
    %v5866 = vadd.f32 %v5513, %v5865
    %v5867 = vpop.f32.mrb[0].mxu0
    %v5868 = vadd.f32 %v5515, %v5867
    %v5869 = vpop.f32.mrb[0].mxu0
    %v5870 = vadd.f32 %v5517, %v5869
    %5871 = vmatprep.mubr.bf16.mxu0 %v5744
    %5872 = vmatmul.mubr.bf16.gmra.mrb[0].mxu0 %v5743
    %v5873 = vpop.f32.mrb[0].mxu0
    %v5874 = vadd.f32 %v5521, %v5873
    %v5875 = vpop.f32.mrb[0].mxu0
    %v5876 = vadd.f32 %v5523, %v5875
    %v5877 = vpop.f32.mrb[0].mxu0
    %v5878 = vadd.f32 %v5525, %v5877
    %v5879 = vpop.f32.mrb[0].mxu0
    %v5880 = vadd.f32 %v5527, %v5879
    %5881 = vmatprep.mubr.bf16.mxu0 %v5746
    %5882 = vmatmul.mubr.bf16.gmra.mrb[0].mxu0 %v5745
    %v5883 = vpop.f32.mrb[0].mxu0
    %v5884 = vadd.f32 %v5531, %v5883
    %v5885 = vpop.f32.mrb[0].mxu0
    %v5886 = vadd.f32 %v5533, %v5885
    %v5887 = vpop.f32.mrb[0].mxu0
    %v5888 = vadd.f32 %v5535, %v5887
    %v5889 = vpop.f32.mrb[0].mxu0
    %v5890 = vadd.f32 %v5537, %v5889
    %5891 = vmatprep.mubr.bf16.mxu0 %v5748
    %5892 = vmatmul.mubr.bf16.gmra.mrb[0].mxu0 %v5747
    %v5893 = vpop.f32.mrb[0].mxu0
    %v5894 = vadd.f32 %v5541, %v5893
    %v5895 = vpop.f32.mrb[0].mxu0
    %v5896 = vadd.f32 %v5543, %v5895
    %v5897 = vpop.f32.mrb[0].mxu0
    %v5898 = vadd.f32 %v5545, %v5897
    %v5899 = vpop.f32.mrb[0].mxu0
    %v5900 = vadd.f32 %v5547, %v5899
    %5901 = vmatprep.mubr.bf16.mxu0 %v5750
    %5902 = vmatmul.mubr.bf16.gmra.mrb[0].mxu0 %v5749
    %v5903 = vpop.f32.mrb[0].mxu0
    %v5904 = vadd.f32 %v5551, %v5903
    %v5905 = vpop.f32.mrb[0].mxu0
    %v5906 = vadd.f32 %v5553, %v5905
    %v5907 = vpop.f32.mrb[0].mxu0
    %v5908 = vadd.f32 %v5555, %v5907
    %v5909 = vpop.f32.mrb[0].mxu0
    %v5910 = vadd.f32 %v5557, %v5909
    %5911 = vmatprep.mubr.bf16.mxu0 %v5752
    %5912 = vmatmul.mubr.bf16.gmra.mrb[0].mxu0 %v5751
    %v5913 = vpop.f32.mrb[0].mxu0
    %v5914 = vadd.f32 %v5561, %v5913
    %v5915 = vpop.f32.mrb[0].mxu0
    %v5916 = vadd.f32 %v5563, %v5915
    %v5917 = vpop.f32.mrb[0].mxu0
    %v5918 = vadd.f32 %v5565, %v5917
    %v5919 = vpop.f32.mrb[0].mxu0
    %v5920 = vadd.f32 %v5567, %v5919
    %5921 = vmatprep.mubr.bf16.mxu0 %v5754
    %5922 = vmatmul.mubr.bf16.gmra.mrb[0].mxu0 %v5753
    %v5923 = vpop.f32.mrb[0].mxu0
    %v5924 = vadd.f32 %v5571, %v5923
    %v5925 = vpop.f32.mrb[0].mxu0
    %v5926 = vadd.f32 %v5573, %v5925
    %v5927 = vpop.f32.mrb[0].mxu0
    %v5928 = vadd.f32 %v5575, %v5927
    %v5929 = vpop.f32.mrb[0].mxu0
    %v5930 = vadd.f32 %v5577, %v5929
    %5931 = vmatprep.mubr.bf16.mxu0 %v5756
    %5932 = vmatmul.mubr.bf16.gmra.mrb[0].mxu0 %v5755
    %v5933 = vpop.f32.mrb[0].mxu0
    %v5934 = vadd.f32 %v5581, %v5933
    %v5935 = vpop.f32.mrb[0].mxu0
    %v5936 = vadd.f32 %v5583, %v5935
    %v5937 = vpop.f32.mrb[0].mxu0
    %v5938 = vadd.f32 %v5585, %v5937
    %v5939 = vpop.f32.mrb[0].mxu0
    %v5940 = vadd.f32 %v5587, %v5939
    %5941 = vmatprep.mubr.bf16.mxu0 %v5758
    %5942 = vmatmul.mubr.bf16.gmra.mrb[0].mxu0 %v5757
    %v5943 = vpop.f32.mrb[0].mxu0
    %v5944 = vadd.f32 %v5591, %v5943
    %v5945 = vpop.f32.mrb[0].mxu0
    %v5946 = vadd.f32 %v5593, %v5945
    %v5947 = vpop.f32.mrb[0].mxu0
    %v5948 = vadd.f32 %v5595, %v5947
    %v5949 = vpop.f32.mrb[0].mxu0
    %v5950 = vadd.f32 %v5597, %v5949
    %5951 = vmatprep.mubr.bf16.mxu0 %v5760
    %5952 = vmatmul.mubr.bf16.gmra.mrb[0].mxu0 %v5759
    %v5953 = vpop.f32.mrb[0].mxu0
    %v5954 = vadd.f32 %v5601, %v5953
    %v5955 = vpop.f32.mrb[0].mxu0
    %v5956 = vadd.f32 %v5603, %v5955
    %v5957 = vpop.f32.mrb[0].mxu0
    %v5958 = vadd.f32 %v5605, %v5957
    %v5959 = vpop.f32.mrb[0].mxu0
    %v5960 = vadd.f32 %v5607, %v5959
    %5961 = vmatprep.mubr.bf16.mxu0 %v5762
    %5962 = vmatmul.mubr.bf16.gmra.mrb[0].mxu0 %v5761
    %v5963 = vpop.f32.mrb[0].mxu0
    %v5964 = vadd.f32 %v5611, %v5963
    %v5965 = vpop.f32.mrb[0].mxu0
    %v5966 = vadd.f32 %v5613, %v5965
    %v5967 = vpop.f32.mrb[0].mxu0
    %v5968 = vadd.f32 %v5615, %v5967
    %v5969 = vpop.f32.mrb[0].mxu0
    %v5970 = vadd.f32 %v5617, %v5969
    %5971 = vmatprep.mubr.bf16.mxu0 %v5764
    %5972 = vmatmul.mubr.bf16.gmra.mrb[0].mxu0 %v5763
    %v5973 = vpop.f32.mrb[0].mxu0
    %v5974 = vadd.f32 %v5621, %v5973
    %v5975 = vpop.f32.mrb[0].mxu0
    %v5976 = vadd.f32 %v5623, %v5975
    %v5977 = vpop.f32.mrb[0].mxu0
    %v5978 = vadd.f32 %v5625, %v5977
    %v5979 = vpop.f32.mrb[0].mxu0
    %v5980 = vadd.f32 %v5627, %v5979
    %5981 = vmatprep.mubr.bf16.mxu0 %v5766
    %5982 = vmatmul.mubr.bf16.gmra.mrb[0].mxu0 %v5765
    %v5983 = vpop.f32.mrb[0].mxu0
    %v5984 = vadd.f32 %v5631, %v5983
    %v5985 = vpop.f32.mrb[0].mxu0
    %v5986 = vadd.f32 %v5633, %v5985
    %v5987 = vpop.f32.mrb[0].mxu0
    %v5988 = vadd.f32 %v5635, %v5987
    %v5989 = vpop.f32.mrb[0].mxu0
    %v5990 = vadd.f32 %v5637, %v5989
    %5991 = vdwg.mxu0
    %v5992 = vadd.f32 %v5834, %v2997
    %v5993 = vadd.f32 %v5836, %v2997
    %v5994 = vadd.f32 %v5838, %v3002
    %v5995 = vadd.f32 %v5840, %v3002
    %v5996 = vadd.f32 %v5844, %v3007
    %v5997 = vadd.f32 %v5846, %v3007
    %v5998 = vadd.f32 %v5848, %v3012
    %v5999 = vadd.f32 %v5850, %v3012
    %v6000 = vadd.f32 %v5854, %v3017
    %v6001 = vadd.f32 %v5856, %v3017
    %v6002 = vadd.f32 %v5858, %v3022
    %v6003 = vadd.f32 %v5860, %v3022
    %v6004 = vadd.f32 %v5864, %v3027
    %v6005 = vadd.f32 %v5866, %v3027
    %v6006 = vadd.f32 %v5868, %v3032
    %v6007 = vadd.f32 %v5870, %v3032
    %v6008 = vadd.f32 %v5874, %v3037
    %v6009 = vadd.f32 %v5876, %v3037
    %v6010 = vadd.f32 %v5878, %v3042
    %v6011 = vadd.f32 %v5880, %v3042
    %v6012 = vadd.f32 %v5884, %v3047
    %v6013 = vadd.f32 %v5886, %v3047
    %v6014 = vadd.f32 %v5888, %v3052
    %v6015 = vadd.f32 %v5890, %v3052
    %v6016 = vadd.f32 %v5894, %v3057
    %v6017 = vadd.f32 %v5896, %v3057
    %v6018 = vadd.f32 %v5898, %v3062
    %v6019 = vadd.f32 %v5900, %v3062
    %v6020 = vadd.f32 %v5904, %v3067
    %v6021 = vadd.f32 %v5906, %v3067
    %v6022 = vadd.f32 %v5908, %v3072
    %v6023 = vadd.f32 %v5910, %v3072
    %v6024 = vadd.f32 %v5914, %v3077
    %v6025 = vadd.f32 %v5916, %v3077
    %v6026 = vadd.f32 %v5918, %v3082
    %v6027 = vadd.f32 %v5920, %v3082
    %v6028 = vadd.f32 %v5924, %v3087
    %v6029 = vadd.f32 %v5926, %v3087
    %v6030 = vadd.f32 %v5928, %v3092
    %v6031 = vadd.f32 %v5930, %v3092
    %v6032 = vadd.f32 %v5934, %v3097
    %v6033 = vadd.f32 %v5936, %v3097
    %v6034 = vadd.f32 %v5938, %v3102
    %v6035 = vadd.f32 %v5940, %v3102
    %v6036 = vadd.f32 %v5944, %v3107
    %v6037 = vadd.f32 %v5946, %v3107
    %v6038 = vadd.f32 %v5948, %v3112
    %v6039 = vadd.f32 %v5950, %v3112
    %v6040 = vadd.f32 %v5954, %v3117
    %v6041 = vadd.f32 %v5956, %v3117
    %v6042 = vadd.f32 %v5958, %v3122
    %v6043 = vadd.f32 %v5960, %v3122
    %v6044 = vadd.f32 %v5964, %v3127
    %v6045 = vadd.f32 %v5966, %v3127
    %v6046 = vadd.f32 %v5968, %v3132
    %v6047 = vadd.f32 %v5970, %v3132
    %v6048 = vadd.f32 %v5974, %v3137
    %v6049 = vadd.f32 %v5976, %v3137
    %v6050 = vadd.f32 %v5978, %v3142
    %v6051 = vadd.f32 %v5980, %v3142
    %v6052 = vadd.f32 %v5984, %v3147
    %v6053 = vadd.f32 %v5986, %v3147
    %v6054 = vadd.f32 %v5988, %v3152
    %v6055 = vadd.f32 %v5990, %v3152
    %v6056 = vmax.f32 %v5992, 0.0
    %v6057 = vmax.f32 %v5993, 0.0
    %v6058 = vmax.f32 %v5994, 0.0
    %v6059 = vmax.f32 %v5995, 0.0
    %v6060 = vmax.f32 %v5996, 0.0
    %v6061 = vmax.f32 %v5997, 0.0
    %v6062 = vmax.f32 %v5998, 0.0
    %v6063 = vmax.f32 %v5999, 0.0
    %v6064 = vmax.f32 %v6000, 0.0
    %v6065 = vmax.f32 %v6001, 0.0
    %v6066 = vmax.f32 %v6002, 0.0
    %v6067 = vmax.f32 %v6003, 0.0
    %v6068 = vmax.f32 %v6004, 0.0
    %v6069 = vmax.f32 %v6005, 0.0
    %v6070 = vmax.f32 %v6006, 0.0
    %v6071 = vmax.f32 %v6007, 0.0
    %v6072 = vmax.f32 %v6008, 0.0
    %v6073 = vmax.f32 %v6009, 0.0
    %v6074 = vmax.f32 %v6010, 0.0
    %v6075 = vmax.f32 %v6011, 0.0
    %v6076 = vmax.f32 %v6012, 0.0
    %v6077 = vmax.f32 %v6013, 0.0
    %v6078 = vmax.f32 %v6014, 0.0
    %v6079 = vmax.f32 %v6015, 0.0
    %v6080 = vmax.f32 %v6016, 0.0
    %v6081 = vmax.f32 %v6017, 0.0
    %v6082 = vmax.f32 %v6018, 0.0
    %v6083 = vmax.f32 %v6019, 0.0
    %v6084 = vmax.f32 %v6020, 0.0
    %v6085 = vmax.f32 %v6021, 0.0
    %v6086 = vmax.f32 %v6022, 0.0
    %v6087 = vmax.f32 %v6023, 0.0
    %v6088 = vmax.f32 %v6024, 0.0
    %v6089 = vmax.f32 %v6025, 0.0
    %v6090 = vmax.f32 %v6026, 0.0
    %v6091 = vmax.f32 %v6027, 0.0
    %v6092 = vmax.f32 %v6028, 0.0
    %v6093 = vmax.f32 %v6029, 0.0
    %v6094 = vmax.f32 %v6030, 0.0
    %v6095 = vmax.f32 %v6031, 0.0
    %v6096 = vmax.f32 %v6032, 0.0
    %v6097 = vmax.f32 %v6033, 0.0
    %v6098 = vmax.f32 %v6034, 0.0
    %v6099 = vmax.f32 %v6035, 0.0
    %v6100 = vmax.f32 %v6036, 0.0
    %v6101 = vmax.f32 %v6037, 0.0
    %v6102 = vmax.f32 %v6038, 0.0
    %v6103 = vmax.f32 %v6039, 0.0
    %v6104 = vmax.f32 %v6040, 0.0
    %v6105 = vmax.f32 %v6041, 0.0
    %v6106 = vmax.f32 %v6042, 0.0
    %v6107 = vmax.f32 %v6043, 0.0
    %v6108 = vmax.f32 %v6044, 0.0
    %v6109 = vmax.f32 %v6045, 0.0
    %v6110 = vmax.f32 %v6046, 0.0
    %v6111 = vmax.f32 %v6047, 0.0
    %v6112 = vmax.f32 %v6048, 0.0
    %v6113 = vmax.f32 %v6049, 0.0
    %v6114 = vmax.f32 %v6050, 0.0
    %v6115 = vmax.f32 %v6051, 0.0
    %v6116 = vmax.f32 %v6052, 0.0
    %v6117 = vmax.f32 %v6053, 0.0
    %v6118 = vmax.f32 %v6054, 0.0
    %v6119 = vmax.f32 %v6055, 0.0
    %v6120 = vpack.c.bf16 %v6058, %v6056
    %v6121 = vpack.c.bf16 %v6059, %v6057
    %v6122 = vpack.c.bf16 %v6062, %v6060
    %v6123 = vpack.c.bf16 %v6063, %v6061
    %v6124 = vpack.c.bf16 %v6066, %v6064
    %v6125 = vpack.c.bf16 %v6067, %v6065
    %v6126 = vpack.c.bf16 %v6070, %v6068
    %v6127 = vpack.c.bf16 %v6071, %v6069
    %v6128 = vpack.c.bf16 %v6074, %v6072
    %v6129 = vpack.c.bf16 %v6075, %v6073
    %v6130 = vpack.c.bf16 %v6078, %v6076
    %v6131 = vpack.c.bf16 %v6079, %v6077
    %v6132 = vpack.c.bf16 %v6082, %v6080
    %v6133 = vpack.c.bf16 %v6083, %v6081
    %v6134 = vpack.c.bf16 %v6086, %v6084
    %v6135 = vpack.c.bf16 %v6087, %v6085
    %v6136 = vpack.c.bf16 %v6090, %v6088
    %v6137 = vpack.c.bf16 %v6091, %v6089
    %v6138 = vpack.c.bf16 %v6094, %v6092
    %v6139 = vpack.c.bf16 %v6095, %v6093
    %v6140 = vpack.c.bf16 %v6098, %v6096
    %v6141 = vpack.c.bf16 %v6099, %v6097
    %v6142 = vpack.c.bf16 %v6102, %v6100
    %v6143 = vpack.c.bf16 %v6103, %v6101
    %v6144 = vpack.c.bf16 %v6106, %v6104
    %v6145 = vpack.c.bf16 %v6107, %v6105
    %v6146 = vpack.c.bf16 %v6110, %v6108
    %v6147 = vpack.c.bf16 %v6111, %v6109
    %v6148 = vpack.c.bf16 %v6114, %v6112
    %v6149 = vpack.c.bf16 %v6115, %v6113
    %v6150 = vpack.c.bf16 %v6118, %v6116
    %v6151 = vpack.c.bf16 %v6119, %v6117
    %v6184 = vunpack.c.l.b16 %v6120
    %v6185 = vunpack.c.l.b16 %v6121
    %v6186 = vunpack.c.h.b16 %v6120
    %v6187 = vunpack.c.h.b16 %v6121
    %v6188 = vunpack.c.l.b16 %v6122
    %v6189 = vunpack.c.l.b16 %v6123
    %v6190 = vunpack.c.h.b16 %v6122
    %v6191 = vunpack.c.h.b16 %v6123
    %v6192 = vunpack.c.l.b16 %v6124
    %v6193 = vunpack.c.l.b16 %v6125
    %v6194 = vunpack.c.h.b16 %v6124
    %v6195 = vunpack.c.h.b16 %v6125
    %v6196 = vunpack.c.l.b16 %v6126
    %v6197 = vunpack.c.l.b16 %v6127
    %v6198 = vunpack.c.h.b16 %v6126
    %v6199 = vunpack.c.h.b16 %v6127
    %v6200 = vunpack.c.l.b16 %v6128
    %v6201 = vunpack.c.l.b16 %v6129
    %v6202 = vunpack.c.h.b16 %v6128
    %v6203 = vunpack.c.h.b16 %v6129
    %v6204 = vunpack.c.l.b16 %v6130
    %v6205 = vunpack.c.l.b16 %v6131
    %v6206 = vunpack.c.h.b16 %v6130
    %v6207 = vunpack.c.h.b16 %v6131
    %v6208 = vunpack.c.l.b16 %v6132
    %v6209 = vunpack.c.l.b16 %v6133
    %v6210 = vunpack.c.h.b16 %v6132
    %v6211 = vunpack.c.h.b16 %v6133
    %v6212 = vunpack.c.l.b16 %v6134
    %v6213 = vunpack.c.l.b16 %v6135
    %v6214 = vunpack.c.h.b16 %v6134
    %v6215 = vunpack.c.h.b16 %v6135
    %v6216 = vunpack.c.l.b16 %v6136
    %v6217 = vunpack.c.l.b16 %v6137
    %v6218 = vunpack.c.h.b16 %v6136
    %v6219 = vunpack.c.h.b16 %v6137
    %v6220 = vunpack.c.l.b16 %v6138
    %v6221 = vunpack.c.l.b16 %v6139
    %v6222 = vunpack.c.h.b16 %v6138
    %v6223 = vunpack.c.h.b16 %v6139
    %v6224 = vunpack.c.l.b16 %v6140
    %v6225 = vunpack.c.l.b16 %v6141
    %v6226 = vunpack.c.h.b16 %v6140
    %v6227 = vunpack.c.h.b16 %v6141
    %v6228 = vunpack.c.l.b16 %v6142
    %v6229 = vunpack.c.l.b16 %v6143
    %v6230 = vunpack.c.h.b16 %v6142
    %v6231 = vunpack.c.h.b16 %v6143
    %v6232 = vunpack.c.l.b16 %v6144
    %v6233 = vunpack.c.l.b16 %v6145
    %v6234 = vunpack.c.h.b16 %v6144
    %v6235 = vunpack.c.h.b16 %v6145
    %v6236 = vunpack.c.l.b16 %v6146
    %v6237 = vunpack.c.l.b16 %v6147
    %v6238 = vunpack.c.h.b16 %v6146
    %v6239 = vunpack.c.h.b16 %v6147
    %v6240 = vunpack.c.l.b16 %v6148
    %v6241 = vunpack.c.l.b16 %v6149
    %v6242 = vunpack.c.h.b16 %v6148
    %v6243 = vunpack.c.h.b16 %v6149
    %v6244 = vunpack.c.l.b16 %v6150
    %v6245 = vunpack.c.l.b16 %v6151
    %v6246 = vunpack.c.h.b16 %v6150
    %v6247 = vunpack.c.h.b16 %v6151
    %v6248 = vpack.c.b16 %v6185, %v6184
    %v6249 = vpack.c.b16 %v6187, %v6186
    %v6250 = vpack.c.b16 %v6189, %v6188
    %v6251 = vpack.c.b16 %v6191, %v6190
    %v6252 = vpack.c.b16 %v6193, %v6192
    %v6253 = vpack.c.b16 %v6195, %v6194
    %v6254 = vpack.c.b16 %v6197, %v6196
    %v6255 = vpack.c.b16 %v6199, %v6198
    %v6256 = vpack.c.b16 %v6201, %v6200
    %v6257 = vpack.c.b16 %v6203, %v6202
    %v6258 = vpack.c.b16 %v6205, %v6204
    %v6259 = vpack.c.b16 %v6207, %v6206
    %v6260 = vpack.c.b16 %v6209, %v6208
    %v6261 = vpack.c.b16 %v6211, %v6210
    %v6262 = vpack.c.b16 %v6213, %v6212
    %v6263 = vpack.c.b16 %v6215, %v6214
    %v6264 = vpack.c.b16 %v6217, %v6216
    %v6265 = vpack.c.b16 %v6219, %v6218
    %v6266 = vpack.c.b16 %v6221, %v6220
    %v6267 = vpack.c.b16 %v6223, %v6222
    %v6268 = vpack.c.b16 %v6225, %v6224
    %v6269 = vpack.c.b16 %v6227, %v6226
    %v6270 = vpack.c.b16 %v6229, %v6228
    %v6271 = vpack.c.b16 %v6231, %v6230
    %v6272 = vpack.c.b16 %v6233, %v6232
    %v6273 = vpack.c.b16 %v6235, %v6234
    %v6274 = vpack.c.b16 %v6237, %v6236
    %v6275 = vpack.c.b16 %v6239, %v6238
    %v6276 = vpack.c.b16 %v6241, %v6240
    %v6277 = vpack.c.b16 %v6243, %v6242
    %v6278 = vpack.c.b16 %v6245, %v6244
    %v6279 = vpack.c.b16 %v6247, %v6246
    %s6312 = scalar_lea.vmem [#allocation2], 256
    %6313 = vst [vmem:[%s6312] sm:$0xff] %v6248
    %6314 = vst [vmem:[%s6312 + $0x8] sm:$0xff] %v6249
    %6315 = vst [vmem:[%s6312 + $0x10] sm:$0xff] %v6250
    %6316 = vst [vmem:[%s6312 + $0x18] sm:$0xff] %v6251
    %6317 = vst [vmem:[%s6312 + $0x20] sm:$0xff] %v6252
    %6318 = vst [vmem:[%s6312 + $0x28] sm:$0xff] %v6253
    %6319 = vst [vmem:[%s6312 + $0x30] sm:$0xff] %v6254
    %6320 = vst [vmem:[%s6312 + $0x38] sm:$0xff] %v6255
    %6321 = vst [vmem:[%s6312 + $0x40] sm:$0xff] %v6256
    %6322 = vst [vmem:[%s6312 + $0x48] sm:$0xff] %v6257
    %6323 = vst [vmem:[%s6312 + $0x50] sm:$0xff] %v6258
    %6324 = vst [vmem:[%s6312 + $0x58] sm:$0xff] %v6259
    %6325 = vst [vmem:[%s6312 + $0x60] sm:$0xff] %v6260
    %6326 = vst [vmem:[%s6312 + $0x68] sm:$0xff] %v6261
    %6327 = vst [vmem:[%s6312 + $0x70] sm:$0xff] %v6262
    %6328 = vst [vmem:[%s6312 + $0x78] sm:$0xff] %v6263
    %6329 = vst [vmem:[%s6312 + $0x80] sm:$0xff] %v6264
    %6330 = vst [vmem:[%s6312 + $0x88] sm:$0xff] %v6265
    %6331 = vst [vmem:[%s6312 + $0x90] sm:$0xff] %v6266
    %6332 = vst [vmem:[%s6312 + $0x98] sm:$0xff] %v6267
    %6333 = vst [vmem:[%s6312 + $0xa0] sm:$0xff] %v6268
    %6334 = vst [vmem:[%s6312 + $0xa8] sm:$0xff] %v6269
    %6335 = vst [vmem:[%s6312 + $0xb0] sm:$0xff] %v6270
    %6336 = vst [vmem:[%s6312 + $0xb8] sm:$0xff] %v6271
    %6337 = vst [vmem:[%s6312 + $0xc0] sm:$0xff] %v6272
    %6338 = vst [vmem:[%s6312 + $0xc8] sm:$0xff] %v6273
    %6339 = vst [vmem:[%s6312 + $0xd0] sm:$0xff] %v6274
    %6340 = vst [vmem:[%s6312 + $0xd8] sm:$0xff] %v6275
    %6341 = vst [vmem:[%s6312 + $0xe0] sm:$0xff] %v6276
    %6342 = vst [vmem:[%s6312 + $0xe8] sm:$0xff] %v6277
    %6343 = vst [vmem:[%s6312 + $0xf0] sm:$0xff] %v6278
    %6344 = vst [vmem:[%s6312 + $0xf8] sm:$0xff] %v6279
    // Predicated region
    $region42: #{tpu_custom_call.1} parent=1 // pred_check
      _
    $region43: #{tpu_custom_call.1} parent=1 // pred_check_branch
      %6346 = sbr.rel (0) target = $region45
    $region44: #{tpu_custom_call.1} parent=1 // pred_region
      %s6348 = ssub.s32 8192, 8192
      %6349 = vsyncadd [#allocation3], %s6348
      %s6350 = sshll.u32 [#allocation2], 4
      %s6351 = int_to_ptr.vmem [resolvable:$true] %s6350
      %6356 = dma.vmem_to_hbm [thread:$0]  %s6351, 8192, %s10, [#allocation3], 128, 128, 8
    $region45: #{tpu_custom_call.1} parent=1 // pred_fallthru
      _
    // Predicated region
    $region46: #{tpu_custom_call.1} parent=1 // pred_check
      _
    $region47: #{tpu_custom_call.1} parent=1 // pred_check_branch
      %6358 = sbr.rel (0) target = $region49
    $region48: #{tpu_custom_call.1} parent=1 // pred_region
      %6359 = dma.done [#allocation3], 8192
    $region49: #{tpu_custom_call.1} parent=1 // pred_fallthru
      _
    %6360 = vsyncpa [#allocation3], 1

</llo_original>
